<compile_context>
chip_gen: v6e
topology: v6e:2x2x1
jax: 0.10.0
libtpu: 0.0.40
codegen_flags: <defaults>
</compile_context>

<pallas_src>
import jax
import jax.numpy as jnp
from jax import lax
from jax.experimental import pallas as pl
from jax.experimental.pallas import tpu as pltpu

# ---------------- config ----------------
D_MODEL = 128          # d_model (lane-dense)
NUM_LAYERS = 2         # nn.LSTM(num_layers=2)
OUT_CLASSES = 2        # output_mlp: Linear(d_model, 2)
OUT_PAD = 128          # lane-dense padded head width (sliced back to 2 in the wrapper)
B_BLK = 8              # samples per grid step (sublane-aligned)


# =====================================================================
# Fused Pallas kernel: LSTM stack + masked max-pool + linear head
# =====================================================================

def _lstm_fused_kernel(x_ref, mask_ref, w_ih_ref, w_hh_ref, b_ref,
                       w_out_ref, b_out_ref, o_ref,
                       seq_buf, xproj_ref):
    # x_ref:    (seq_len, B, D)  time-major embedded visits
    # mask_ref: (seq_len, B, 1)  additive mask: 0 for valid step, -inf for padded
    # w_ih_ref: (L, D, 4D)   w_hh_ref: (L, D, 4D)   b_ref: (L, 1, 4D)  (b_ih + b_hh)
    # w_out_ref: (D, OUT_PAD)  b_out_ref: (1, OUT_PAD)
    # o_ref:    (B, OUT_PAD)
    # seq_buf:  (seq_len, B, D) VMEM scratch holding the current layer's input sequence
    # xproj_ref:(seq_len, B, 4D) VMEM scratch for the batched input projection
    seq_len, bblk, d_model = seq_buf.shape
    num_layers = w_ih_ref.shape[0]

    zeros = jnp.zeros((bblk, d_model), jnp.float32)
    pooled = jnp.full((bblk, d_model), -jnp.inf, jnp.float32)

    for layer in range(num_layers):                       # static unroll over layers
        is_last = layer == num_layers - 1
        src = x_ref if layer == 0 else seq_buf            # layer-0 reads input directly

        # Batched input projection for every timestep in one big MXU matmul.
        xin = src[...].reshape(seq_len * bblk, d_model)
        xproj_ref[...] = (
            jnp.dot(xin, w_ih_ref[layer], preferred_element_type=jnp.float32)
            + b_ref[layer]
        ).reshape(seq_len, bblk, 4 * d_model)

        w_hh_l = w_hh_ref[layer]                          # hoisted, loop-invariant

        def step(t, carry, *, _is_last=is_last, _w_hh=w_hh_l):
            h, c, pmax = carry
            gates = xproj_ref[t] + jnp.dot(
                h, _w_hh, preferred_element_type=jnp.float32)     # (B, 4D), order i,f,g,o
            i_g = jax.nn.sigmoid(gates[:, 0:d_model])
            f_g = jax.nn.sigmoid(gates[:, d_model:2 * d_model])
            g_g = jnp.tanh(gates[:, 2 * d_model:3 * d_model])
            o_g = jax.nn.sigmoid(gates[:, 3 * d_model:4 * d_model])
            c_new = f_g * c + i_g * g_g
            h_new = o_g * jnp.tanh(c_new)
            if _is_last:
                # Fused MaxPoolLayer: masked running max, last layer never hits VMEM.
                pmax = jnp.maximum(pmax, h_new + mask_ref[t])
            else:
                seq_buf[t] = h_new                        # layer output -> next layer input
            return (h_new, c_new, pmax)

        _, _, pooled = lax.fori_loop(0, seq_len, step, (zeros, zeros, pooled),
                                     unroll=True)
        # TODO(synk): nn.LSTM inter-layer dropout omitted (inference).

    # Output head (lane-dense padded to 128; wrapper slices [:, :2]).
    o_ref[...] = (jnp.dot(pooled, w_out_ref[...],
                          preferred_element_type=jnp.float32)
                  + b_out_ref[...])


# =====================================================================
# Forward wrapper (matches LSTM_predictor.forward signature)
# =====================================================================

def lstm_predictor_forward(params, input_seqs, masks, lengths, seq_time_step, code_masks):
    del masks, seq_time_step, code_masks                   # unused by the reference forward
    bs, seq_len, _ = input_seqs.shape
    num_layers, d_model, four_d = params["w_ih"].shape
    pad_idx = params["emb"].shape[0] - 1                   # padding_idx=-1 -> last row

    # Embedding(padding_idx=-1) lookup + sum over codes (gather stays in XLA glue).
    idx = jnp.where(input_seqs < 0, pad_idx, input_seqs)
    x = jnp.take(params["emb"], idx, axis=0).sum(axis=2)   # (bs, seq, D)
    # TODO(synk): emb_dropout / dropout are inference no-ops and are omitted.
    x_tm = jnp.transpose(x, (1, 0, 2)).astype(jnp.float32)  # time-major (seq, bs, D)

    # Additive mask replicating MaxPoolLayer: -inf where t >= length.
    t_idx = jnp.arange(seq_len, dtype=jnp.int32)[:, None]
    neg_mask = jnp.where(t_idx < lengths[None, :].astype(jnp.int32),
                         0.0, -jnp.inf).astype(jnp.float32)[:, :, None]  # (seq, bs, 1)

    assert bs % B_BLK == 0, "batch must be a multiple of B_BLK"
    grid = (bs // B_BLK,)

    out_padded = pl.pallas_call(
        _lstm_fused_kernel,
        out_shape=jax.ShapeDtypeStruct((bs, OUT_PAD), jnp.float32),
        grid=grid,
        in_specs=[
            pl.BlockSpec((seq_len, B_BLK, d_model), lambda i: (0, i, 0)),       # x (time-major)
            pl.BlockSpec((seq_len, B_BLK, 1), lambda i: (0, i, 0)),             # additive mask
            pl.BlockSpec((num_layers, d_model, four_d), lambda i: (0, 0, 0)),   # W_ih
            pl.BlockSpec((num_layers, d_model, four_d), lambda i: (0, 0, 0)),   # W_hh
            pl.BlockSpec((num_layers, 1, four_d), lambda i: (0, 0, 0)),         # b_ih + b_hh
            pl.BlockSpec((d_model, OUT_PAD), lambda i: (0, 0)),                 # head W (padded)
            pl.BlockSpec((1, OUT_PAD), lambda i: (0, 0)),                       # head b (padded)
        ],
        out_specs=pl.BlockSpec((B_BLK, OUT_PAD), lambda i: (i, 0)),
        scratch_shapes=[
            pltpu.VMEM((seq_len, B_BLK, d_model), jnp.float32),     # layer-input sequence
            pltpu.VMEM((seq_len, B_BLK, 4 * d_model), jnp.float32), # batched x-projection
        ],
        compiler_params=pltpu.CompilerParams(dimension_semantics=("parallel",)),
    )(x_tm, neg_mask, params["w_ih"], params["w_hh"], params["b"],
      params["w_out_pad"], params["b_out_pad"])

    return out_padded[:, :OUT_CLASSES]                      # (bs, 2)


# =====================================================================
# Deterministic parameter init (torch-like uniform(-1/sqrt(d), 1/sqrt(d)))
# =====================================================================

def init_params(key, vocab_size, d_model=D_MODEL, num_layers=NUM_LAYERS):
    keys = iter(jax.random.split(key, 4 + 4 * num_layers))
    inv = 1.0 / float(jnp.sqrt(d_model))

    emb = jax.random.normal(next(keys), (vocab_size + 1, d_model), jnp.float32)
    emb = emb.at[-1].set(0.0)                               # padding_idx=-1 -> zero row

    w_ih, w_hh, b = [], [], []
    for _ in range(num_layers):
        w_ih.append(jax.random.uniform(next(keys), (d_model, 4 * d_model),
                                       jnp.float32, -inv, inv))
        w_hh.append(jax.random.uniform(next(keys), (d_model, 4 * d_model),
                                       jnp.float32, -inv, inv))
        b_ih = jax.random.uniform(next(keys), (4 * d_model,), jnp.float32, -inv, inv)
        b_hh = jax.random.uniform(next(keys), (4 * d_model,), jnp.float32, -inv, inv)
        b.append((b_ih + b_hh).reshape(1, 4 * d_model))

    w_out = jax.random.uniform(next(keys), (d_model, OUT_CLASSES), jnp.float32, -inv, inv)
    b_out = jax.random.uniform(next(keys), (OUT_CLASSES,), jnp.float32, -inv, inv)
    w_out_pad = jnp.zeros((d_model, OUT_PAD), jnp.float32).at[:, :OUT_CLASSES].set(w_out)
    b_out_pad = jnp.zeros((1, OUT_PAD), jnp.float32).at[:, :OUT_CLASSES].set(b_out)

    return {
        "emb": emb,
        "w_ih": jnp.stack(w_ih),          # (L, D, 4D)
        "w_hh": jnp.stack(w_hh),          # (L, D, 4D)
        "b": jnp.stack(b),                # (L, 1, 4D)
        "w_out_pad": w_out_pad,           # (D, 128)
        "b_out_pad": b_out_pad,           # (1, 128)
    }


# =====================================================================

if __name__ == "__main__":
    key = jax.random.PRNGKey(0)
    k_param, k_seq, k_len = jax.random.split(key, 3)

    bs, seq_len, num_cui_per_visit, vocab_size = 16, 8, 4, 30
    params = init_params(k_param, vocab_size)

    input_seqs = jax.random.randint(k_seq, (bs, seq_len, num_cui_per_visit),
                                    0, vocab_size + 1, dtype=jnp.int32)
    lengths = jax.random.randint(k_len, (bs,), 1, seq_len + 1, dtype=jnp.int32)

    fwd = jax.jit(lstm_predictor_forward)
    out = fwd(params, input_seqs, None, lengths, None, None)
    jax.block_until_ready(out)

    assert out.shape == (bs, OUT_CLASSES)
    assert bool(jnp.all(jnp.isfinite(out)))
    print("KERNEL_OK")
</pallas_src>

<mosaic_0001>
module attributes {stable_mosaic.version = 11 : i64} {
  func.func @_lstm_fused_kernel(%arg0: i32, %arg1: memref<8x8x128xf32, #tpu.memory_space<vmem>>, %arg2: memref<8x8x1xf32, #tpu.memory_space<vmem>>, %arg3: memref<2x128x512xf32, #tpu.memory_space<vmem>>, %arg4: memref<2x128x512xf32, #tpu.memory_space<vmem>>, %arg5: memref<2x1x512xf32, #tpu.memory_space<vmem>>, %arg6: memref<128x128xf32, #tpu.memory_space<vmem>>, %arg7: memref<1x128xf32, #tpu.memory_space<vmem>>, %arg8: memref<8x128xf32, #tpu.memory_space<vmem>>, %arg9: memref<8x8x128xf32, #tpu.memory_space<vmem>>, %arg10: memref<8x8x512xf32, #tpu.memory_space<vmem>>) attributes {dimension_semantics = [#tpu.dimension_semantics<parallel>], iteration_bounds = array<i64: 2>, scalar_prefetch = 0 : i64, scratch_operands = 2 : i64, tpu.core_type = #tpu.core_type<tc>, window_params = [{transform_indices = @transform_0, window_bounds = array<i64: 8, 8, 128>}, {transform_indices = @transform_1, window_bounds = array<i64: 8, 8, 1>}, {pipeline_mode = #tpu.pipeline_mode<synchronous>, transform_indices = @transform_2, window_bounds = array<i64: 2, 128, 512>}, {pipeline_mode = #tpu.pipeline_mode<synchronous>, transform_indices = @transform_3, window_bounds = array<i64: 2, 128, 512>}, {pipeline_mode = #tpu.pipeline_mode<synchronous>, transform_indices = @transform_4, window_bounds = array<i64: 2, 1, 512>}, {pipeline_mode = #tpu.pipeline_mode<synchronous>, transform_indices = @transform_5, window_bounds = array<i64: 128, 128>}, {pipeline_mode = #tpu.pipeline_mode<synchronous>, transform_indices = @transform_6, window_bounds = array<i64: 1, 128>}, {transform_indices = @transform_7, window_bounds = array<i64: 8, 128>}]} {
    %cst = arith.constant 0.000000e+00 : f32
    %0 = vector.broadcast %cst : f32 to vector<8x128xf32>
    %cst_0 = arith.constant 0xFF800000 : f32
    %1 = vector.broadcast %cst_0 : f32 to vector<8x128xf32>
    %c0 = arith.constant 0 : index
    %c0_1 = arith.constant 0 : index
    %c0_2 = arith.constant 0 : index
    %2 = vector.load %arg1[%c0, %c0_1, %c0_2] : memref<8x8x128xf32, #tpu.memory_space<vmem>>, vector<8x8x128xf32>
    %3 = vector.shape_cast %2 : vector<8x8x128xf32> to vector<64x128xf32>
    %c0_3 = arith.constant 0 : index
    %c0_4 = arith.constant 0 : index
    %c0_5 = arith.constant 0 : index
    %4 = vector.load %arg3[%c0_3, %c0_4, %c0_5] : memref<2x128x512xf32, #tpu.memory_space<vmem>>, vector<1x128x512xf32>
    %5 = vector.shape_cast %4 : vector<1x128x512xf32> to vector<128x512xf32>
    %cst_6 = arith.constant dense<0.000000e+00> : vector<64x512xf32>
    %6 = tpu.matmul %3, %5, %cst_6 {dimension_numbers = #tpu.dot_dimension_numbers<[1], [0], [0], [1], [0, 0, 1, 1], [], []>} : vector<64x128xf32>, vector<128x512xf32>, vector<64x512xf32> -> vector<64x512xf32>
    %c0_7 = arith.constant 0 : index
    %c0_8 = arith.constant 0 : index
    %c0_9 = arith.constant 0 : index
    %7 = vector.load %arg5[%c0_7, %c0_8, %c0_9] : memref<2x1x512xf32, #tpu.memory_space<vmem>>, vector<1x1x512xf32>
    %8 = vector.shape_cast %7 : vector<1x1x512xf32> to vector<1x512xf32>
    %9 = vector.broadcast %8 : vector<1x512xf32> to vector<64x512xf32>
    %10 = arith.addf %6, %9 : vector<64x512xf32>
    %11 = vector.shape_cast %10 : vector<64x512xf32> to vector<8x8x512xf32>
    %c0_10 = arith.constant 0 : index
    %c0_11 = arith.constant 0 : index
    %c0_12 = arith.constant 0 : index
    %12 = vector.load %arg10[%c0_10, %c0_11, %c0_12] : memref<8x8x512xf32, #tpu.memory_space<vmem>>, vector<8x8x512xf32>
    tpu.vector_store %arg10[%c0_10, %c0_11, %c0_12], %11 {strides = array<i32>} : memref<8x8x512xf32, #tpu.memory_space<vmem>>, vector<8x8x512xf32>,
    %c0_13 = arith.constant 0 : index
    %c0_14 = arith.constant 0 : index
    %c0_15 = arith.constant 0 : index
    %13 = vector.load %arg4[%c0_13, %c0_14, %c0_15] : memref<2x128x512xf32, #tpu.memory_space<vmem>>, vector<1x128x512xf32>
    %14 = vector.shape_cast %13 : vector<1x128x512xf32> to vector<128x512xf32>
    %c0_i32 = arith.constant 0 : i32
    %15 = arith.index_cast %c0_i32 : i32 to index
    %c0_16 = arith.constant 0 : index
    %c0_17 = arith.constant 0 : index
    %16 = vector.load %arg10[%15, %c0_16, %c0_17] : memref<8x8x512xf32, #tpu.memory_space<vmem>>, vector<1x8x512xf32>
    %17 = vector.shape_cast %16 : vector<1x8x512xf32> to vector<8x512xf32>
    %cst_18 = arith.constant dense<0.000000e+00> : vector<8x512xf32>
    %18 = tpu.matmul %0, %14, %cst_18 {dimension_numbers = #tpu.dot_dimension_numbers<[1], [0], [0], [1], [0, 0, 1, 1], [], []>} : vector<8x128xf32>, vector<128x512xf32>, vector<8x512xf32> -> vector<8x512xf32>
    %19 = arith.addf %17, %18 : vector<8x512xf32>
    %20 = vector.extract_strided_slice %19 {offsets = [0, 0], sizes = [8, 128], strides = [1, 1]} : vector<8x512xf32> to vector<8x128xf32>
    %21 = arith.negf %20 : vector<8x128xf32>
    %22 = math.exp %21 : vector<8x128xf32>
    %cst_19 = arith.constant 1.000000e+00 : f32
    %23 = vector.broadcast %cst_19 : f32 to vector<8x128xf32>
    %24 = arith.addf %23, %22 : vector<8x128xf32>
    %25 = arith.divf %23, %24 : vector<8x128xf32>
    %26 = vector.extract_strided_slice %19 {offsets = [0, 128], sizes = [8, 128], strides = [1, 1]} : vector<8x512xf32> to vector<8x128xf32>
    %27 = arith.negf %26 : vector<8x128xf32>
    %28 = math.exp %27 : vector<8x128xf32>
    %cst_20 = arith.constant 1.000000e+00 : f32
    %29 = vector.broadcast %cst_20 : f32 to vector<8x128xf32>
    %30 = arith.addf %29, %28 : vector<8x128xf32>
    %31 = arith.divf %29, %30 : vector<8x128xf32>
    %32 = vector.extract_strided_slice %19 {offsets = [0, 256], sizes = [8, 128], strides = [1, 1]} : vector<8x512xf32> to vector<8x128xf32>
    %33 = math.tanh %32 : vector<8x128xf32>
    %34 = vector.extract_strided_slice %19 {offsets = [0, 384], sizes = [8, 128], strides = [1, 1]} : vector<8x512xf32> to vector<8x128xf32>
    %35 = arith.negf %34 : vector<8x128xf32>
    %36 = math.exp %35 : vector<8x128xf32>
    %cst_21 = arith.constant 1.000000e+00 : f32
    %37 = vector.broadcast %cst_21 : f32 to vector<8x128xf32>
    %38 = arith.addf %37, %36 : vector<8x128xf32>
    %39 = arith.divf %37, %38 : vector<8x128xf32>
    %40 = arith.mulf %31, %0 : vector<8x128xf32>
    %41 = arith.mulf %25, %33 : vector<8x128xf32>
    %42 = arith.addf %40, %41 : vector<8x128xf32>
    %43 = math.tanh %42 : vector<8x128xf32>
    %44 = arith.mulf %39, %43 : vector<8x128xf32>
    %45 = arith.index_cast %c0_i32 : i32 to index
    %c0_22 = arith.constant 0 : index
    %c0_23 = arith.constant 0 : index
    %46 = vector.load %arg9[%45, %c0_22, %c0_23] : memref<8x8x128xf32, #tpu.memory_space<vmem>>, vector<1x8x128xf32>
    %47 = vector.shape_cast %46 : vector<1x8x128xf32> to vector<8x128xf32>
    %48 = vector.shape_cast %44 : vector<8x128xf32> to vector<1x8x128xf32>
    tpu.vector_store %arg9[%45, %c0_22, %c0_23], %48 {strides = array<i32>} : memref<8x8x128xf32, #tpu.memory_space<vmem>>, vector<1x8x128xf32>,
    %c1_i32 = arith.constant 1 : i32
    %49 = arith.index_cast %c1_i32 : i32 to index
    %c0_24 = arith.constant 0 : index
    %c0_25 = arith.constant 0 : index
    %50 = vector.load %arg10[%49, %c0_24, %c0_25] : memref<8x8x512xf32, #tpu.memory_space<vmem>>, vector<1x8x512xf32>
    %51 = vector.shape_cast %50 : vector<1x8x512xf32> to vector<8x512xf32>
    %cst_26 = arith.constant dense<0.000000e+00> : vector<8x512xf32>
    %52 = tpu.matmul %44, %14, %cst_26 {dimension_numbers = #tpu.dot_dimension_numbers<[1], [0], [0], [1], [0, 0, 1, 1], [], []>} : vector<8x128xf32>, vector<128x512xf32>, vector<8x512xf32> -> vector<8x512xf32>
    %53 = arith.addf %51, %52 : vector<8x512xf32>
    %54 = vector.extract_strided_slice %53 {offsets = [0, 0], sizes = [8, 128], strides = [1, 1]} : vector<8x512xf32> to vector<8x128xf32>
    %55 = arith.negf %54 : vector<8x128xf32>
    %56 = math.exp %55 : vector<8x128xf32>
    %cst_27 = arith.constant 1.000000e+00 : f32
    %57 = vector.broadcast %cst_27 : f32 to vector<8x128xf32>
    %58 = arith.addf %57, %56 : vector<8x128xf32>
    %59 = arith.divf %57, %58 : vector<8x128xf32>
    %60 = vector.extract_strided_slice %53 {offsets = [0, 128], sizes = [8, 128], strides = [1, 1]} : vector<8x512xf32> to vector<8x128xf32>
    %61 = arith.negf %60 : vector<8x128xf32>
    %62 = math.exp %61 : vector<8x128xf32>
    %cst_28 = arith.constant 1.000000e+00 : f32
    %63 = vector.broadcast %cst_28 : f32 to vector<8x128xf32>
    %64 = arith.addf %63, %62 : vector<8x128xf32>
    %65 = arith.divf %63, %64 : vector<8x128xf32>
    %66 = vector.extract_strided_slice %53 {offsets = [0, 256], sizes = [8, 128], strides = [1, 1]} : vector<8x512xf32> to vector<8x128xf32>
    %67 = math.tanh %66 : vector<8x128xf32>
    %68 = vector.extract_strided_slice %53 {offsets = [0, 384], sizes = [8, 128], strides = [1, 1]} : vector<8x512xf32> to vector<8x128xf32>
    %69 = arith.negf %68 : vector<8x128xf32>
    %70 = math.exp %69 : vector<8x128xf32>
    %cst_29 = arith.constant 1.000000e+00 : f32
    %71 = vector.broadcast %cst_29 : f32 to vector<8x128xf32>
    %72 = arith.addf %71, %70 : vector<8x128xf32>
    %73 = arith.divf %71, %72 : vector<8x128xf32>
    %74 = arith.mulf %65, %42 : vector<8x128xf32>
    %75 = arith.mulf %59, %67 : vector<8x128xf32>
    %76 = arith.addf %74, %75 : vector<8x128xf32>
    %77 = math.tanh %76 : vector<8x128xf32>
    %78 = arith.mulf %73, %77 : vector<8x128xf32>
    %79 = arith.index_cast %c1_i32 : i32 to index
    %c0_30 = arith.constant 0 : index
    %c0_31 = arith.constant 0 : index
    %80 = vector.load %arg9[%79, %c0_30, %c0_31] : memref<8x8x128xf32, #tpu.memory_space<vmem>>, vector<1x8x128xf32>
    %81 = vector.shape_cast %80 : vector<1x8x128xf32> to vector<8x128xf32>
    %82 = vector.shape_cast %78 : vector<8x128xf32> to vector<1x8x128xf32>
    tpu.vector_store %arg9[%79, %c0_30, %c0_31], %82 {strides = array<i32>} : memref<8x8x128xf32, #tpu.memory_space<vmem>>, vector<1x8x128xf32>,
    %c2_i32 = arith.constant 2 : i32
    %83 = arith.index_cast %c2_i32 : i32 to index
    %c0_32 = arith.constant 0 : index
    %c0_33 = arith.constant 0 : index
    %84 = vector.load %arg10[%83, %c0_32, %c0_33] : memref<8x8x512xf32, #tpu.memory_space<vmem>>, vector<1x8x512xf32>
    %85 = vector.shape_cast %84 : vector<1x8x512xf32> to vector<8x512xf32>
    %cst_34 = arith.constant dense<0.000000e+00> : vector<8x512xf32>
    %86 = tpu.matmul %78, %14, %cst_34 {dimension_numbers = #tpu.dot_dimension_numbers<[1], [0], [0], [1], [0, 0, 1, 1], [], []>} : vector<8x128xf32>, vector<128x512xf32>, vector<8x512xf32> -> vector<8x512xf32>
    %87 = arith.addf %85, %86 : vector<8x512xf32>
    %88 = vector.extract_strided_slice %87 {offsets = [0, 0], sizes = [8, 128], strides = [1, 1]} : vector<8x512xf32> to vector<8x128xf32>
    %89 = arith.negf %88 : vector<8x128xf32>
    %90 = math.exp %89 : vector<8x128xf32>
    %cst_35 = arith.constant 1.000000e+00 : f32
    %91 = vector.broadcast %cst_35 : f32 to vector<8x128xf32>
    %92 = arith.addf %91, %90 : vector<8x128xf32>
    %93 = arith.divf %91, %92 : vector<8x128xf32>
    %94 = vector.extract_strided_slice %87 {offsets = [0, 128], sizes = [8, 128], strides = [1, 1]} : vector<8x512xf32> to vector<8x128xf32>
    %95 = arith.negf %94 : vector<8x128xf32>
    %96 = math.exp %95 : vector<8x128xf32>
    %cst_36 = arith.constant 1.000000e+00 : f32
    %97 = vector.broadcast %cst_36 : f32 to vector<8x128xf32>
    %98 = arith.addf %97, %96 : vector<8x128xf32>
    %99 = arith.divf %97, %98 : vector<8x128xf32>
    %100 = vector.extract_strided_slice %87 {offsets = [0, 256], sizes = [8, 128], strides = [1, 1]} : vector<8x512xf32> to vector<8x128xf32>
    %101 = math.tanh %100 : vector<8x128xf32>
    %102 = vector.extract_strided_slice %87 {offsets = [0, 384], sizes = [8, 128], strides = [1, 1]} : vector<8x512xf32> to vector<8x128xf32>
    %103 = arith.negf %102 : vector<8x128xf32>
    %104 = math.exp %103 : vector<8x128xf32>
    %cst_37 = arith.constant 1.000000e+00 : f32
    %105 = vector.broadcast %cst_37 : f32 to vector<8x128xf32>
    %106 = arith.addf %105, %104 : vector<8x128xf32>
    %107 = arith.divf %105, %106 : vector<8x128xf32>
    %108 = arith.mulf %99, %76 : vector<8x128xf32>
    %109 = arith.mulf %93, %101 : vector<8x128xf32>
    %110 = arith.addf %108, %109 : vector<8x128xf32>
    %111 = math.tanh %110 : vector<8x128xf32>
    %112 = arith.mulf %107, %111 : vector<8x128xf32>
    %113 = arith.index_cast %c2_i32 : i32 to index
    %c0_38 = arith.constant 0 : index
    %c0_39 = arith.constant 0 : index
    %114 = vector.load %arg9[%113, %c0_38, %c0_39] : memref<8x8x128xf32, #tpu.memory_space<vmem>>, vector<1x8x128xf32>
    %115 = vector.shape_cast %114 : vector<1x8x128xf32> to vector<8x128xf32>
    %116 = vector.shape_cast %112 : vector<8x128xf32> to vector<1x8x128xf32>
    tpu.vector_store %arg9[%113, %c0_38, %c0_39], %116 {strides = array<i32>} : memref<8x8x128xf32, #tpu.memory_space<vmem>>, vector<1x8x128xf32>,
    %c3_i32 = arith.constant 3 : i32
    %117 = arith.index_cast %c3_i32 : i32 to index
    %c0_40 = arith.constant 0 : index
    %c0_41 = arith.constant 0 : index
    %118 = vector.load %arg10[%117, %c0_40, %c0_41] : memref<8x8x512xf32, #tpu.memory_space<vmem>>, vector<1x8x512xf32>
    %119 = vector.shape_cast %118 : vector<1x8x512xf32> to vector<8x512xf32>
    %cst_42 = arith.constant dense<0.000000e+00> : vector<8x512xf32>
    %120 = tpu.matmul %112, %14, %cst_42 {dimension_numbers = #tpu.dot_dimension_numbers<[1], [0], [0], [1], [0, 0, 1, 1], [], []>} : vector<8x128xf32>, vector<128x512xf32>, vector<8x512xf32> -> vector<8x512xf32>
    %121 = arith.addf %119, %120 : vector<8x512xf32>
    %122 = vector.extract_strided_slice %121 {offsets = [0, 0], sizes = [8, 128], strides = [1, 1]} : vector<8x512xf32> to vector<8x128xf32>
    %123 = arith.negf %122 : vector<8x128xf32>
    %124 = math.exp %123 : vector<8x128xf32>
    %cst_43 = arith.constant 1.000000e+00 : f32
    %125 = vector.broadcast %cst_43 : f32 to vector<8x128xf32>
    %126 = arith.addf %125, %124 : vector<8x128xf32>
    %127 = arith.divf %125, %126 : vector<8x128xf32>
    %128 = vector.extract_strided_slice %121 {offsets = [0, 128], sizes = [8, 128], strides = [1, 1]} : vector<8x512xf32> to vector<8x128xf32>
    %129 = arith.negf %128 : vector<8x128xf32>
    %130 = math.exp %129 : vector<8x128xf32>
    %cst_44 = arith.constant 1.000000e+00 : f32
    %131 = vector.broadcast %cst_44 : f32 to vector<8x128xf32>
    %132 = arith.addf %131, %130 : vector<8x128xf32>
    %133 = arith.divf %131, %132 : vector<8x128xf32>
    %134 = vector.extract_strided_slice %121 {offsets = [0, 256], sizes = [8, 128], strides = [1, 1]} : vector<8x512xf32> to vector<8x128xf32>
    %135 = math.tanh %134 : vector<8x128xf32>
    %136 = vector.extract_strided_slice %121 {offsets = [0, 384], sizes = [8, 128], strides = [1, 1]} : vector<8x512xf32> to vector<8x128xf32>
    %137 = arith.negf %136 : vector<8x128xf32>
    %138 = math.exp %137 : vector<8x128xf32>
    %cst_45 = arith.constant 1.000000e+00 : f32
    %139 = vector.broadcast %cst_45 : f32 to vector<8x128xf32>
    %140 = arith.addf %139, %138 : vector<8x128xf32>
    %141 = arith.divf %139, %140 : vector<8x128xf32>
    %142 = arith.mulf %133, %110 : vector<8x128xf32>
    %143 = arith.mulf %127, %135 : vector<8x128xf32>
    %144 = arith.addf %142, %143 : vector<8x128xf32>
    %145 = math.tanh %144 : vector<8x128xf32>
    %146 = arith.mulf %141, %145 : vector<8x128xf32>
    %147 = arith.index_cast %c3_i32 : i32 to index
    %c0_46 = arith.constant 0 : index
    %c0_47 = arith.constant 0 : index
    %148 = vector.load %arg9[%147, %c0_46, %c0_47] : memref<8x8x128xf32, #tpu.memory_space<vmem>>, vector<1x8x128xf32>
    %149 = vector.shape_cast %148 : vector<1x8x128xf32> to vector<8x128xf32>
    %150 = vector.shape_cast %146 : vector<8x128xf32> to vector<1x8x128xf32>
    tpu.vector_store %arg9[%147, %c0_46, %c0_47], %150 {strides = array<i32>} : memref<8x8x128xf32, #tpu.memory_space<vmem>>, vector<1x8x128xf32>,
    %c4_i32 = arith.constant 4 : i32
    %151 = arith.index_cast %c4_i32 : i32 to index
    %c0_48 = arith.constant 0 : index
    %c0_49 = arith.constant 0 : index
    %152 = vector.load %arg10[%151, %c0_48, %c0_49] : memref<8x8x512xf32, #tpu.memory_space<vmem>>, vector<1x8x512xf32>
    %153 = vector.shape_cast %152 : vector<1x8x512xf32> to vector<8x512xf32>
    %cst_50 = arith.constant dense<0.000000e+00> : vector<8x512xf32>
    %154 = tpu.matmul %146, %14, %cst_50 {dimension_numbers = #tpu.dot_dimension_numbers<[1], [0], [0], [1], [0, 0, 1, 1], [], []>} : vector<8x128xf32>, vector<128x512xf32>, vector<8x512xf32> -> vector<8x512xf32>
    %155 = arith.addf %153, %154 : vector<8x512xf32>
    %156 = vector.extract_strided_slice %155 {offsets = [0, 0], sizes = [8, 128], strides = [1, 1]} : vector<8x512xf32> to vector<8x128xf32>
    %157 = arith.negf %156 : vector<8x128xf32>
    %158 = math.exp %157 : vector<8x128xf32>
    %cst_51 = arith.constant 1.000000e+00 : f32
    %159 = vector.broadcast %cst_51 : f32 to vector<8x128xf32>
    %160 = arith.addf %159, %158 : vector<8x128xf32>
    %161 = arith.divf %159, %160 : vector<8x128xf32>
    %162 = vector.extract_strided_slice %155 {offsets = [0, 128], sizes = [8, 128], strides = [1, 1]} : vector<8x512xf32> to vector<8x128xf32>
    %163 = arith.negf %162 : vector<8x128xf32>
    %164 = math.exp %163 : vector<8x128xf32>
    %cst_52 = arith.constant 1.000000e+00 : f32
    %165 = vector.broadcast %cst_52 : f32 to vector<8x128xf32>
    %166 = arith.addf %165, %164 : vector<8x128xf32>
    %167 = arith.divf %165, %166 : vector<8x128xf32>
    %168 = vector.extract_strided_slice %155 {offsets = [0, 256], sizes = [8, 128], strides = [1, 1]} : vector<8x512xf32> to vector<8x128xf32>
    %169 = math.tanh %168 : vector<8x128xf32>
    %170 = vector.extract_strided_slice %155 {offsets = [0, 384], sizes = [8, 128], strides = [1, 1]} : vector<8x512xf32> to vector<8x128xf32>
    %171 = arith.negf %170 : vector<8x128xf32>
    %172 = math.exp %171 : vector<8x128xf32>
    %cst_53 = arith.constant 1.000000e+00 : f32
    %173 = vector.broadcast %cst_53 : f32 to vector<8x128xf32>
    %174 = arith.addf %173, %172 : vector<8x128xf32>
    %175 = arith.divf %173, %174 : vector<8x128xf32>
    %176 = arith.mulf %167, %144 : vector<8x128xf32>
    %177 = arith.mulf %161, %169 : vector<8x128xf32>
    %178 = arith.addf %176, %177 : vector<8x128xf32>
    %179 = math.tanh %178 : vector<8x128xf32>
    %180 = arith.mulf %175, %179 : vector<8x128xf32>
    %181 = arith.index_cast %c4_i32 : i32 to index
    %c0_54 = arith.constant 0 : index
    %c0_55 = arith.constant 0 : index
    %182 = vector.load %arg9[%181, %c0_54, %c0_55] : memref<8x8x128xf32, #tpu.memory_space<vmem>>, vector<1x8x128xf32>
    %183 = vector.shape_cast %182 : vector<1x8x128xf32> to vector<8x128xf32>
    %184 = vector.shape_cast %180 : vector<8x128xf32> to vector<1x8x128xf32>
    tpu.vector_store %arg9[%181, %c0_54, %c0_55], %184 {strides = array<i32>} : memref<8x8x128xf32, #tpu.memory_space<vmem>>, vector<1x8x128xf32>,
    %c5_i32 = arith.constant 5 : i32
    %185 = arith.index_cast %c5_i32 : i32 to index
    %c0_56 = arith.constant 0 : index
    %c0_57 = arith.constant 0 : index
    %186 = vector.load %arg10[%185, %c0_56, %c0_57] : memref<8x8x512xf32, #tpu.memory_space<vmem>>, vector<1x8x512xf32>
    %187 = vector.shape_cast %186 : vector<1x8x512xf32> to vector<8x512xf32>
    %cst_58 = arith.constant dense<0.000000e+00> : vector<8x512xf32>
    %188 = tpu.matmul %180, %14, %cst_58 {dimension_numbers = #tpu.dot_dimension_numbers<[1], [0], [0], [1], [0, 0, 1, 1], [], []>} : vector<8x128xf32>, vector<128x512xf32>, vector<8x512xf32> -> vector<8x512xf32>
    %189 = arith.addf %187, %188 : vector<8x512xf32>
    %190 = vector.extract_strided_slice %189 {offsets = [0, 0], sizes = [8, 128], strides = [1, 1]} : vector<8x512xf32> to vector<8x128xf32>
    %191 = arith.negf %190 : vector<8x128xf32>
    %192 = math.exp %191 : vector<8x128xf32>
    %cst_59 = arith.constant 1.000000e+00 : f32
    %193 = vector.broadcast %cst_59 : f32 to vector<8x128xf32>
    %194 = arith.addf %193, %192 : vector<8x128xf32>
    %195 = arith.divf %193, %194 : vector<8x128xf32>
    %196 = vector.extract_strided_slice %189 {offsets = [0, 128], sizes = [8, 128], strides = [1, 1]} : vector<8x512xf32> to vector<8x128xf32>
    %197 = arith.negf %196 : vector<8x128xf32>
    %198 = math.exp %197 : vector<8x128xf32>
    %cst_60 = arith.constant 1.000000e+00 : f32
    %199 = vector.broadcast %cst_60 : f32 to vector<8x128xf32>
    %200 = arith.addf %199, %198 : vector<8x128xf32>
    %201 = arith.divf %199, %200 : vector<8x128xf32>
    %202 = vector.extract_strided_slice %189 {offsets = [0, 256], sizes = [8, 128], strides = [1, 1]} : vector<8x512xf32> to vector<8x128xf32>
    %203 = math.tanh %202 : vector<8x128xf32>
    %204 = vector.extract_strided_slice %189 {offsets = [0, 384], sizes = [8, 128], strides = [1, 1]} : vector<8x512xf32> to vector<8x128xf32>
    %205 = arith.negf %204 : vector<8x128xf32>
    %206 = math.exp %205 : vector<8x128xf32>
    %cst_61 = arith.constant 1.000000e+00 : f32
    %207 = vector.broadcast %cst_61 : f32 to vector<8x128xf32>
    %208 = arith.addf %207, %206 : vector<8x128xf32>
    %209 = arith.divf %207, %208 : vector<8x128xf32>
    %210 = arith.mulf %201, %178 : vector<8x128xf32>
    %211 = arith.mulf %195, %203 : vector<8x128xf32>
    %212 = arith.addf %210, %211 : vector<8x128xf32>
    %213 = math.tanh %212 : vector<8x128xf32>
    %214 = arith.mulf %209, %213 : vector<8x128xf32>
    %215 = arith.index_cast %c5_i32 : i32 to index
    %c0_62 = arith.constant 0 : index
    %c0_63 = arith.constant 0 : index
    %216 = vector.load %arg9[%215, %c0_62, %c0_63] : memref<8x8x128xf32, #tpu.memory_space<vmem>>, vector<1x8x128xf32>
    %217 = vector.shape_cast %216 : vector<1x8x128xf32> to vector<8x128xf32>
    %218 = vector.shape_cast %214 : vector<8x128xf32> to vector<1x8x128xf32>
    tpu.vector_store %arg9[%215, %c0_62, %c0_63], %218 {strides = array<i32>} : memref<8x8x128xf32, #tpu.memory_space<vmem>>, vector<1x8x128xf32>,
    %c6_i32 = arith.constant 6 : i32
    %219 = arith.index_cast %c6_i32 : i32 to index
    %c0_64 = arith.constant 0 : index
    %c0_65 = arith.constant 0 : index
    %220 = vector.load %arg10[%219, %c0_64, %c0_65] : memref<8x8x512xf32, #tpu.memory_space<vmem>>, vector<1x8x512xf32>
    %221 = vector.shape_cast %220 : vector<1x8x512xf32> to vector<8x512xf32>
    %cst_66 = arith.constant dense<0.000000e+00> : vector<8x512xf32>
    %222 = tpu.matmul %214, %14, %cst_66 {dimension_numbers = #tpu.dot_dimension_numbers<[1], [0], [0], [1], [0, 0, 1, 1], [], []>} : vector<8x128xf32>, vector<128x512xf32>, vector<8x512xf32> -> vector<8x512xf32>
    %223 = arith.addf %221, %222 : vector<8x512xf32>
    %224 = vector.extract_strided_slice %223 {offsets = [0, 0], sizes = [8, 128], strides = [1, 1]} : vector<8x512xf32> to vector<8x128xf32>
    %225 = arith.negf %224 : vector<8x128xf32>
    %226 = math.exp %225 : vector<8x128xf32>
    %cst_67 = arith.constant 1.000000e+00 : f32
    %227 = vector.broadcast %cst_67 : f32 to vector<8x128xf32>
    %228 = arith.addf %227, %226 : vector<8x128xf32>
    %229 = arith.divf %227, %228 : vector<8x128xf32>
    %230 = vector.extract_strided_slice %223 {offsets = [0, 128], sizes = [8, 128], strides = [1, 1]} : vector<8x512xf32> to vector<8x128xf32>
    %231 = arith.negf %230 : vector<8x128xf32>
    %232 = math.exp %231 : vector<8x128xf32>
    %cst_68 = arith.constant 1.000000e+00 : f32
    %233 = vector.broadcast %cst_68 : f32 to vector<8x128xf32>
    %234 = arith.addf %233, %232 : vector<8x128xf32>
    %235 = arith.divf %233, %234 : vector<8x128xf32>
    %236 = vector.extract_strided_slice %223 {offsets = [0, 256], sizes = [8, 128], strides = [1, 1]} : vector<8x512xf32> to vector<8x128xf32>
    %237 = math.tanh %236 : vector<8x128xf32>
    %238 = vector.extract_strided_slice %223 {offsets = [0, 384], sizes = [8, 128], strides = [1, 1]} : vector<8x512xf32> to vector<8x128xf32>
    %239 = arith.negf %238 : vector<8x128xf32>
    %240 = math.exp %239 : vector<8x128xf32>
    %cst_69 = arith.constant 1.000000e+00 : f32
    %241 = vector.broadcast %cst_69 : f32 to vector<8x128xf32>
    %242 = arith.addf %241, %240 : vector<8x128xf32>
    %243 = arith.divf %241, %242 : vector<8x128xf32>
    %244 = arith.mulf %235, %212 : vector<8x128xf32>
    %245 = arith.mulf %229, %237 : vector<8x128xf32>
    %246 = arith.addf %244, %245 : vector<8x128xf32>
    %247 = math.tanh %246 : vector<8x128xf32>
    %248 = arith.mulf %243, %247 : vector<8x128xf32>
    %249 = arith.index_cast %c6_i32 : i32 to index
    %c0_70 = arith.constant 0 : index
    %c0_71 = arith.constant 0 : index
    %250 = vector.load %arg9[%249, %c0_70, %c0_71] : memref<8x8x128xf32, #tpu.memory_space<vmem>>, vector<1x8x128xf32>
    %251 = vector.shape_cast %250 : vector<1x8x128xf32> to vector<8x128xf32>
    %252 = vector.shape_cast %248 : vector<8x128xf32> to vector<1x8x128xf32>
    tpu.vector_store %arg9[%249, %c0_70, %c0_71], %252 {strides = array<i32>} : memref<8x8x128xf32, #tpu.memory_space<vmem>>, vector<1x8x128xf32>,
    %c7_i32 = arith.constant 7 : i32
    %253 = arith.index_cast %c7_i32 : i32 to index
    %c0_72 = arith.constant 0 : index
    %c0_73 = arith.constant 0 : index
    %254 = vector.load %arg10[%253, %c0_72, %c0_73] : memref<8x8x512xf32, #tpu.memory_space<vmem>>, vector<1x8x512xf32>
    %255 = vector.shape_cast %254 : vector<1x8x512xf32> to vector<8x512xf32>
    %cst_74 = arith.constant dense<0.000000e+00> : vector<8x512xf32>
    %256 = tpu.matmul %248, %14, %cst_74 {dimension_numbers = #tpu.dot_dimension_numbers<[1], [0], [0], [1], [0, 0, 1, 1], [], []>} : vector<8x128xf32>, vector<128x512xf32>, vector<8x512xf32> -> vector<8x512xf32>
    %257 = arith.addf %255, %256 : vector<8x512xf32>
    %258 = vector.extract_strided_slice %257 {offsets = [0, 0], sizes = [8, 128], strides = [1, 1]} : vector<8x512xf32> to vector<8x128xf32>
    %259 = arith.negf %258 : vector<8x128xf32>
    %260 = math.exp %259 : vector<8x128xf32>
    %cst_75 = arith.constant 1.000000e+00 : f32
    %261 = vector.broadcast %cst_75 : f32 to vector<8x128xf32>
    %262 = arith.addf %261, %260 : vector<8x128xf32>
    %263 = arith.divf %261, %262 : vector<8x128xf32>
    %264 = vector.extract_strided_slice %257 {offsets = [0, 128], sizes = [8, 128], strides = [1, 1]} : vector<8x512xf32> to vector<8x128xf32>
    %265 = arith.negf %264 : vector<8x128xf32>
    %266 = math.exp %265 : vector<8x128xf32>
    %cst_76 = arith.constant 1.000000e+00 : f32
    %267 = vector.broadcast %cst_76 : f32 to vector<8x128xf32>
    %268 = arith.addf %267, %266 : vector<8x128xf32>
    %269 = arith.divf %267, %268 : vector<8x128xf32>
    %270 = vector.extract_strided_slice %257 {offsets = [0, 256], sizes = [8, 128], strides = [1, 1]} : vector<8x512xf32> to vector<8x128xf32>
    %271 = math.tanh %270 : vector<8x128xf32>
    %272 = vector.extract_strided_slice %257 {offsets = [0, 384], sizes = [8, 128], strides = [1, 1]} : vector<8x512xf32> to vector<8x128xf32>
    %273 = arith.negf %272 : vector<8x128xf32>
    %274 = math.exp %273 : vector<8x128xf32>
    %cst_77 = arith.constant 1.000000e+00 : f32
    %275 = vector.broadcast %cst_77 : f32 to vector<8x128xf32>
    %276 = arith.addf %275, %274 : vector<8x128xf32>
    %277 = arith.divf %275, %276 : vector<8x128xf32>
    %278 = arith.mulf %269, %246 : vector<8x128xf32>
    %279 = arith.mulf %263, %271 : vector<8x128xf32>
    %280 = arith.addf %278, %279 : vector<8x128xf32>
    %281 = math.tanh %280 : vector<8x128xf32>
    %282 = arith.mulf %277, %281 : vector<8x128xf32>
    %283 = arith.index_cast %c7_i32 : i32 to index
    %c0_78 = arith.constant 0 : index
    %c0_79 = arith.constant 0 : index
    %284 = vector.load %arg9[%283, %c0_78, %c0_79] : memref<8x8x128xf32, #tpu.memory_space<vmem>>, vector<1x8x128xf32>
    %285 = vector.shape_cast %284 : vector<1x8x128xf32> to vector<8x128xf32>
    %286 = vector.shape_cast %282 : vector<8x128xf32> to vector<1x8x128xf32>
    tpu.vector_store %arg9[%283, %c0_78, %c0_79], %286 {strides = array<i32>} : memref<8x8x128xf32, #tpu.memory_space<vmem>>, vector<1x8x128xf32>,
    %c8_i32 = arith.constant 8 : i32
    %c0_80 = arith.constant 0 : index
    %c0_81 = arith.constant 0 : index
    %c0_82 = arith.constant 0 : index
    %287 = vector.load %arg9[%c0_80, %c0_81, %c0_82] : memref<8x8x128xf32, #tpu.memory_space<vmem>>, vector<8x8x128xf32>
    %288 = vector.shape_cast %287 : vector<8x8x128xf32> to vector<64x128xf32>
    %c1 = arith.constant 1 : index
    %c0_83 = arith.constant 0 : index
    %c0_84 = arith.constant 0 : index
    %289 = vector.load %arg3[%c1, %c0_83, %c0_84] : memref<2x128x512xf32, #tpu.memory_space<vmem>>, vector<1x128x512xf32>
    %290 = vector.shape_cast %289 : vector<1x128x512xf32> to vector<128x512xf32>
    %cst_85 = arith.constant dense<0.000000e+00> : vector<64x512xf32>
    %291 = tpu.matmul %288, %290, %cst_85 {dimension_numbers = #tpu.dot_dimension_numbers<[1], [0], [0], [1], [0, 0, 1, 1], [], []>} : vector<64x128xf32>, vector<128x512xf32>, vector<64x512xf32> -> vector<64x512xf32>
    %c1_86 = arith.constant 1 : index
    %c0_87 = arith.constant 0 : index
    %c0_88 = arith.constant 0 : index
    %292 = vector.load %arg5[%c1_86, %c0_87, %c0_88] : memref<2x1x512xf32, #tpu.memory_space<vmem>>, vector<1x1x512xf32>
    %293 = vector.shape_cast %292 : vector<1x1x512xf32> to vector<1x512xf32>
    %294 = vector.broadcast %293 : vector<1x512xf32> to vector<64x512xf32>
    %295 = arith.addf %291, %294 : vector<64x512xf32>
    %296 = vector.shape_cast %295 : vector<64x512xf32> to vector<8x8x512xf32>
    %c0_89 = arith.constant 0 : index
    %c0_90 = arith.constant 0 : index
    %c0_91 = arith.constant 0 : index
    %297 = vector.load %arg10[%c0_89, %c0_90, %c0_91] : memref<8x8x512xf32, #tpu.memory_space<vmem>>, vector<8x8x512xf32>
    tpu.vector_store %arg10[%c0_89, %c0_90, %c0_91], %296 {strides = array<i32>} : memref<8x8x512xf32, #tpu.memory_space<vmem>>, vector<8x8x512xf32>,
    %c1_92 = arith.constant 1 : index
    %c0_93 = arith.constant 0 : index
    %c0_94 = arith.constant 0 : index
    %298 = vector.load %arg4[%c1_92, %c0_93, %c0_94] : memref<2x128x512xf32, #tpu.memory_space<vmem>>, vector<1x128x512xf32>
    %299 = vector.shape_cast %298 : vector<1x128x512xf32> to vector<128x512xf32>
    %c0_i32_95 = arith.constant 0 : i32
    %300 = arith.index_cast %c0_i32_95 : i32 to index
    %c0_96 = arith.constant 0 : index
    %c0_97 = arith.constant 0 : index
    %301 = vector.load %arg10[%300, %c0_96, %c0_97] : memref<8x8x512xf32, #tpu.memory_space<vmem>>, vector<1x8x512xf32>
    %302 = vector.shape_cast %301 : vector<1x8x512xf32> to vector<8x512xf32>
    %cst_98 = arith.constant dense<0.000000e+00> : vector<8x512xf32>
    %303 = tpu.matmul %0, %299, %cst_98 {dimension_numbers = #tpu.dot_dimension_numbers<[1], [0], [0], [1], [0, 0, 1, 1], [], []>} : vector<8x128xf32>, vector<128x512xf32>, vector<8x512xf32> -> vector<8x512xf32>
    %304 = arith.addf %302, %303 : vector<8x512xf32>
    %305 = vector.extract_strided_slice %304 {offsets = [0, 0], sizes = [8, 128], strides = [1, 1]} : vector<8x512xf32> to vector<8x128xf32>
    %306 = arith.negf %305 : vector<8x128xf32>
    %307 = math.exp %306 : vector<8x128xf32>
    %cst_99 = arith.constant 1.000000e+00 : f32
    %308 = vector.broadcast %cst_99 : f32 to vector<8x128xf32>
    %309 = arith.addf %308, %307 : vector<8x128xf32>
    %310 = arith.divf %308, %309 : vector<8x128xf32>
    %311 = vector.extract_strided_slice %304 {offsets = [0, 128], sizes = [8, 128], strides = [1, 1]} : vector<8x512xf32> to vector<8x128xf32>
    %312 = arith.negf %311 : vector<8x128xf32>
    %313 = math.exp %312 : vector<8x128xf32>
    %cst_100 = arith.constant 1.000000e+00 : f32
    %314 = vector.broadcast %cst_100 : f32 to vector<8x128xf32>
    %315 = arith.addf %314, %313 : vector<8x128xf32>
    %316 = arith.divf %314, %315 : vector<8x128xf32>
    %317 = vector.extract_strided_slice %304 {offsets = [0, 256], sizes = [8, 128], strides = [1, 1]} : vector<8x512xf32> to vector<8x128xf32>
    %318 = math.tanh %317 : vector<8x128xf32>
    %319 = vector.extract_strided_slice %304 {offsets = [0, 384], sizes = [8, 128], strides = [1, 1]} : vector<8x512xf32> to vector<8x128xf32>
    %320 = arith.negf %319 : vector<8x128xf32>
    %321 = math.exp %320 : vector<8x128xf32>
    %cst_101 = arith.constant 1.000000e+00 : f32
    %322 = vector.broadcast %cst_101 : f32 to vector<8x128xf32>
    %323 = arith.addf %322, %321 : vector<8x128xf32>
    %324 = arith.divf %322, %323 : vector<8x128xf32>
    %325 = arith.mulf %316, %0 : vector<8x128xf32>
    %326 = arith.mulf %310, %318 : vector<8x128xf32>
    %327 = arith.addf %325, %326 : vector<8x128xf32>
    %328 = math.tanh %327 : vector<8x128xf32>
    %329 = arith.mulf %324, %328 : vector<8x128xf32>
    %330 = arith.index_cast %c0_i32_95 : i32 to index
    %c0_102 = arith.constant 0 : index
    %c0_103 = arith.constant 0 : index
    %331 = vector.load %arg2[%330, %c0_102, %c0_103] : memref<8x8x1xf32, #tpu.memory_space<vmem>>, vector<1x8x1xf32>
    %332 = vector.shape_cast %331 : vector<1x8x1xf32> to vector<8x1xf32>
    %333 = vector.broadcast %332 : vector<8x1xf32> to vector<8x128xf32>
    %334 = arith.addf %329, %333 : vector<8x128xf32>
    %335 = arith.maximumf %1, %334 : vector<8x128xf32>
    %c1_i32_104 = arith.constant 1 : i32
    %336 = arith.index_cast %c1_i32_104 : i32 to index
    %c0_105 = arith.constant 0 : index
    %c0_106 = arith.constant 0 : index
    %337 = vector.load %arg10[%336, %c0_105, %c0_106] : memref<8x8x512xf32, #tpu.memory_space<vmem>>, vector<1x8x512xf32>
    %338 = vector.shape_cast %337 : vector<1x8x512xf32> to vector<8x512xf32>
    %cst_107 = arith.constant dense<0.000000e+00> : vector<8x512xf32>
    %339 = tpu.matmul %329, %299, %cst_107 {dimension_numbers = #tpu.dot_dimension_numbers<[1], [0], [0], [1], [0, 0, 1, 1], [], []>} : vector<8x128xf32>, vector<128x512xf32>, vector<8x512xf32> -> vector<8x512xf32>
    %340 = arith.addf %338, %339 : vector<8x512xf32>
    %341 = vector.extract_strided_slice %340 {offsets = [0, 0], sizes = [8, 128], strides = [1, 1]} : vector<8x512xf32> to vector<8x128xf32>
    %342 = arith.negf %341 : vector<8x128xf32>
    %343 = math.exp %342 : vector<8x128xf32>
    %cst_108 = arith.constant 1.000000e+00 : f32
    %344 = vector.broadcast %cst_108 : f32 to vector<8x128xf32>
    %345 = arith.addf %344, %343 : vector<8x128xf32>
    %346 = arith.divf %344, %345 : vector<8x128xf32>
    %347 = vector.extract_strided_slice %340 {offsets = [0, 128], sizes = [8, 128], strides = [1, 1]} : vector<8x512xf32> to vector<8x128xf32>
    %348 = arith.negf %347 : vector<8x128xf32>
    %349 = math.exp %348 : vector<8x128xf32>
    %cst_109 = arith.constant 1.000000e+00 : f32
    %350 = vector.broadcast %cst_109 : f32 to vector<8x128xf32>
    %351 = arith.addf %350, %349 : vector<8x128xf32>
    %352 = arith.divf %350, %351 : vector<8x128xf32>
    %353 = vector.extract_strided_slice %340 {offsets = [0, 256], sizes = [8, 128], strides = [1, 1]} : vector<8x512xf32> to vector<8x128xf32>
    %354 = math.tanh %353 : vector<8x128xf32>
    %355 = vector.extract_strided_slice %340 {offsets = [0, 384], sizes = [8, 128], strides = [1, 1]} : vector<8x512xf32> to vector<8x128xf32>
    %356 = arith.negf %355 : vector<8x128xf32>
    %357 = math.exp %356 : vector<8x128xf32>
    %cst_110 = arith.constant 1.000000e+00 : f32
    %358 = vector.broadcast %cst_110 : f32 to vector<8x128xf32>
    %359 = arith.addf %358, %357 : vector<8x128xf32>
    %360 = arith.divf %358, %359 : vector<8x128xf32>
    %361 = arith.mulf %352, %327 : vector<8x128xf32>
    %362 = arith.mulf %346, %354 : vector<8x128xf32>
    %363 = arith.addf %361, %362 : vector<8x128xf32>
    %364 = math.tanh %363 : vector<8x128xf32>
    %365 = arith.mulf %360, %364 : vector<8x128xf32>
    %366 = arith.index_cast %c1_i32_104 : i32 to index
    %c0_111 = arith.constant 0 : index
    %c0_112 = arith.constant 0 : index
    %367 = vector.load %arg2[%366, %c0_111, %c0_112] : memref<8x8x1xf32, #tpu.memory_space<vmem>>, vector<1x8x1xf32>
    %368 = vector.shape_cast %367 : vector<1x8x1xf32> to vector<8x1xf32>
    %369 = vector.broadcast %368 : vector<8x1xf32> to vector<8x128xf32>
    %370 = arith.addf %365, %369 : vector<8x128xf32>
    %371 = arith.maximumf %335, %370 : vector<8x128xf32>
    %c2_i32_113 = arith.constant 2 : i32
    %372 = arith.index_cast %c2_i32_113 : i32 to index
    %c0_114 = arith.constant 0 : index
    %c0_115 = arith.constant 0 : index
    %373 = vector.load %arg10[%372, %c0_114, %c0_115] : memref<8x8x512xf32, #tpu.memory_space<vmem>>, vector<1x8x512xf32>
    %374 = vector.shape_cast %373 : vector<1x8x512xf32> to vector<8x512xf32>
    %cst_116 = arith.constant dense<0.000000e+00> : vector<8x512xf32>
    %375 = tpu.matmul %365, %299, %cst_116 {dimension_numbers = #tpu.dot_dimension_numbers<[1], [0], [0], [1], [0, 0, 1, 1], [], []>} : vector<8x128xf32>, vector<128x512xf32>, vector<8x512xf32> -> vector<8x512xf32>
    %376 = arith.addf %374, %375 : vector<8x512xf32>
    %377 = vector.extract_strided_slice %376 {offsets = [0, 0], sizes = [8, 128], strides = [1, 1]} : vector<8x512xf32> to vector<8x128xf32>
    %378 = arith.negf %377 : vector<8x128xf32>
    %379 = math.exp %378 : vector<8x128xf32>
    %cst_117 = arith.constant 1.000000e+00 : f32
    %380 = vector.broadcast %cst_117 : f32 to vector<8x128xf32>
    %381 = arith.addf %380, %379 : vector<8x128xf32>
    %382 = arith.divf %380, %381 : vector<8x128xf32>
    %383 = vector.extract_strided_slice %376 {offsets = [0, 128], sizes = [8, 128], strides = [1, 1]} : vector<8x512xf32> to vector<8x128xf32>
    %384 = arith.negf %383 : vector<8x128xf32>
    %385 = math.exp %384 : vector<8x128xf32>
    %cst_118 = arith.constant 1.000000e+00 : f32
    %386 = vector.broadcast %cst_118 : f32 to vector<8x128xf32>
    %387 = arith.addf %386, %385 : vector<8x128xf32>
    %388 = arith.divf %386, %387 : vector<8x128xf32>
    %389 = vector.extract_strided_slice %376 {offsets = [0, 256], sizes = [8, 128], strides = [1, 1]} : vector<8x512xf32> to vector<8x128xf32>
    %390 = math.tanh %389 : vector<8x128xf32>
    %391 = vector.extract_strided_slice %376 {offsets = [0, 384], sizes = [8, 128], strides = [1, 1]} : vector<8x512xf32> to vector<8x128xf32>
    %392 = arith.negf %391 : vector<8x128xf32>
    %393 = math.exp %392 : vector<8x128xf32>
    %cst_119 = arith.constant 1.000000e+00 : f32
    %394 = vector.broadcast %cst_119 : f32 to vector<8x128xf32>
    %395 = arith.addf %394, %393 : vector<8x128xf32>
    %396 = arith.divf %394, %395 : vector<8x128xf32>
    %397 = arith.mulf %388, %363 : vector<8x128xf32>
    %398 = arith.mulf %382, %390 : vector<8x128xf32>
    %399 = arith.addf %397, %398 : vector<8x128xf32>
    %400 = math.tanh %399 : vector<8x128xf32>
    %401 = arith.mulf %396, %400 : vector<8x128xf32>
    %402 = arith.index_cast %c2_i32_113 : i32 to index
    %c0_120 = arith.constant 0 : index
    %c0_121 = arith.constant 0 : index
    %403 = vector.load %arg2[%402, %c0_120, %c0_121] : memref<8x8x1xf32, #tpu.memory_space<vmem>>, vector<1x8x1xf32>
    %404 = vector.shape_cast %403 : vector<1x8x1xf32> to vector<8x1xf32>
    %405 = vector.broadcast %404 : vector<8x1xf32> to vector<8x128xf32>
    %406 = arith.addf %401, %405 : vector<8x128xf32>
    %407 = arith.maximumf %371, %406 : vector<8x128xf32>
    %c3_i32_122 = arith.constant 3 : i32
    %408 = arith.index_cast %c3_i32_122 : i32 to index
    %c0_123 = arith.constant 0 : index
    %c0_124 = arith.constant 0 : index
    %409 = vector.load %arg10[%408, %c0_123, %c0_124] : memref<8x8x512xf32, #tpu.memory_space<vmem>>, vector<1x8x512xf32>
    %410 = vector.shape_cast %409 : vector<1x8x512xf32> to vector<8x512xf32>
    %cst_125 = arith.constant dense<0.000000e+00> : vector<8x512xf32>
    %411 = tpu.matmul %401, %299, %cst_125 {dimension_numbers = #tpu.dot_dimension_numbers<[1], [0], [0], [1], [0, 0, 1, 1], [], []>} : vector<8x128xf32>, vector<128x512xf32>, vector<8x512xf32> -> vector<8x512xf32>
    %412 = arith.addf %410, %411 : vector<8x512xf32>
    %413 = vector.extract_strided_slice %412 {offsets = [0, 0], sizes = [8, 128], strides = [1, 1]} : vector<8x512xf32> to vector<8x128xf32>
    %414 = arith.negf %413 : vector<8x128xf32>
    %415 = math.exp %414 : vector<8x128xf32>
    %cst_126 = arith.constant 1.000000e+00 : f32
    %416 = vector.broadcast %cst_126 : f32 to vector<8x128xf32>
    %417 = arith.addf %416, %415 : vector<8x128xf32>
    %418 = arith.divf %416, %417 : vector<8x128xf32>
    %419 = vector.extract_strided_slice %412 {offsets = [0, 128], sizes = [8, 128], strides = [1, 1]} : vector<8x512xf32> to vector<8x128xf32>
    %420 = arith.negf %419 : vector<8x128xf32>
    %421 = math.exp %420 : vector<8x128xf32>
    %cst_127 = arith.constant 1.000000e+00 : f32
    %422 = vector.broadcast %cst_127 : f32 to vector<8x128xf32>
    %423 = arith.addf %422, %421 : vector<8x128xf32>
    %424 = arith.divf %422, %423 : vector<8x128xf32>
    %425 = vector.extract_strided_slice %412 {offsets = [0, 256], sizes = [8, 128], strides = [1, 1]} : vector<8x512xf32> to vector<8x128xf32>
    %426 = math.tanh %425 : vector<8x128xf32>
    %427 = vector.extract_strided_slice %412 {offsets = [0, 384], sizes = [8, 128], strides = [1, 1]} : vector<8x512xf32> to vector<8x128xf32>
    %428 = arith.negf %427 : vector<8x128xf32>
    %429 = math.exp %428 : vector<8x128xf32>
    %cst_128 = arith.constant 1.000000e+00 : f32
    %430 = vector.broadcast %cst_128 : f32 to vector<8x128xf32>
    %431 = arith.addf %430, %429 : vector<8x128xf32>
    %432 = arith.divf %430, %431 : vector<8x128xf32>
    %433 = arith.mulf %424, %399 : vector<8x128xf32>
    %434 = arith.mulf %418, %426 : vector<8x128xf32>
    %435 = arith.addf %433, %434 : vector<8x128xf32>
    %436 = math.tanh %435 : vector<8x128xf32>
    %437 = arith.mulf %432, %436 : vector<8x128xf32>
    %438 = arith.index_cast %c3_i32_122 : i32 to index
    %c0_129 = arith.constant 0 : index
    %c0_130 = arith.constant 0 : index
    %439 = vector.load %arg2[%438, %c0_129, %c0_130] : memref<8x8x1xf32, #tpu.memory_space<vmem>>, vector<1x8x1xf32>
    %440 = vector.shape_cast %439 : vector<1x8x1xf32> to vector<8x1xf32>
    %441 = vector.broadcast %440 : vector<8x1xf32> to vector<8x128xf32>
    %442 = arith.addf %437, %441 : vector<8x128xf32>
    %443 = arith.maximumf %407, %442 : vector<8x128xf32>
    %c4_i32_131 = arith.constant 4 : i32
    %444 = arith.index_cast %c4_i32_131 : i32 to index
    %c0_132 = arith.constant 0 : index
    %c0_133 = arith.constant 0 : index
    %445 = vector.load %arg10[%444, %c0_132, %c0_133] : memref<8x8x512xf32, #tpu.memory_space<vmem>>, vector<1x8x512xf32>
    %446 = vector.shape_cast %445 : vector<1x8x512xf32> to vector<8x512xf32>
    %cst_134 = arith.constant dense<0.000000e+00> : vector<8x512xf32>
    %447 = tpu.matmul %437, %299, %cst_134 {dimension_numbers = #tpu.dot_dimension_numbers<[1], [0], [0], [1], [0, 0, 1, 1], [], []>} : vector<8x128xf32>, vector<128x512xf32>, vector<8x512xf32> -> vector<8x512xf32>
    %448 = arith.addf %446, %447 : vector<8x512xf32>
    %449 = vector.extract_strided_slice %448 {offsets = [0, 0], sizes = [8, 128], strides = [1, 1]} : vector<8x512xf32> to vector<8x128xf32>
    %450 = arith.negf %449 : vector<8x128xf32>
    %451 = math.exp %450 : vector<8x128xf32>
    %cst_135 = arith.constant 1.000000e+00 : f32
    %452 = vector.broadcast %cst_135 : f32 to vector<8x128xf32>
    %453 = arith.addf %452, %451 : vector<8x128xf32>
    %454 = arith.divf %452, %453 : vector<8x128xf32>
    %455 = vector.extract_strided_slice %448 {offsets = [0, 128], sizes = [8, 128], strides = [1, 1]} : vector<8x512xf32> to vector<8x128xf32>
    %456 = arith.negf %455 : vector<8x128xf32>
    %457 = math.exp %456 : vector<8x128xf32>
    %cst_136 = arith.constant 1.000000e+00 : f32
    %458 = vector.broadcast %cst_136 : f32 to vector<8x128xf32>
    %459 = arith.addf %458, %457 : vector<8x128xf32>
    %460 = arith.divf %458, %459 : vector<8x128xf32>
    %461 = vector.extract_strided_slice %448 {offsets = [0, 256], sizes = [8, 128], strides = [1, 1]} : vector<8x512xf32> to vector<8x128xf32>
    %462 = math.tanh %461 : vector<8x128xf32>
    %463 = vector.extract_strided_slice %448 {offsets = [0, 384], sizes = [8, 128], strides = [1, 1]} : vector<8x512xf32> to vector<8x128xf32>
    %464 = arith.negf %463 : vector<8x128xf32>
    %465 = math.exp %464 : vector<8x128xf32>
    %cst_137 = arith.constant 1.000000e+00 : f32
    %466 = vector.broadcast %cst_137 : f32 to vector<8x128xf32>
    %467 = arith.addf %466, %465 : vector<8x128xf32>
    %468 = arith.divf %466, %467 : vector<8x128xf32>
    %469 = arith.mulf %460, %435 : vector<8x128xf32>
    %470 = arith.mulf %454, %462 : vector<8x128xf32>
    %471 = arith.addf %469, %470 : vector<8x128xf32>
    %472 = math.tanh %471 : vector<8x128xf32>
    %473 = arith.mulf %468, %472 : vector<8x128xf32>
    %474 = arith.index_cast %c4_i32_131 : i32 to index
    %c0_138 = arith.constant 0 : index
    %c0_139 = arith.constant 0 : index
    %475 = vector.load %arg2[%474, %c0_138, %c0_139] : memref<8x8x1xf32, #tpu.memory_space<vmem>>, vector<1x8x1xf32>
    %476 = vector.shape_cast %475 : vector<1x8x1xf32> to vector<8x1xf32>
    %477 = vector.broadcast %476 : vector<8x1xf32> to vector<8x128xf32>
    %478 = arith.addf %473, %477 : vector<8x128xf32>
    %479 = arith.maximumf %443, %478 : vector<8x128xf32>
    %c5_i32_140 = arith.constant 5 : i32
    %480 = arith.index_cast %c5_i32_140 : i32 to index
    %c0_141 = arith.constant 0 : index
    %c0_142 = arith.constant 0 : index
    %481 = vector.load %arg10[%480, %c0_141, %c0_142] : memref<8x8x512xf32, #tpu.memory_space<vmem>>, vector<1x8x512xf32>
    %482 = vector.shape_cast %481 : vector<1x8x512xf32> to vector<8x512xf32>
    %cst_143 = arith.constant dense<0.000000e+00> : vector<8x512xf32>
    %483 = tpu.matmul %473, %299, %cst_143 {dimension_numbers = #tpu.dot_dimension_numbers<[1], [0], [0], [1], [0, 0, 1, 1], [], []>} : vector<8x128xf32>, vector<128x512xf32>, vector<8x512xf32> -> vector<8x512xf32>
    %484 = arith.addf %482, %483 : vector<8x512xf32>
    %485 = vector.extract_strided_slice %484 {offsets = [0, 0], sizes = [8, 128], strides = [1, 1]} : vector<8x512xf32> to vector<8x128xf32>
    %486 = arith.negf %485 : vector<8x128xf32>
    %487 = math.exp %486 : vector<8x128xf32>
    %cst_144 = arith.constant 1.000000e+00 : f32
    %488 = vector.broadcast %cst_144 : f32 to vector<8x128xf32>
    %489 = arith.addf %488, %487 : vector<8x128xf32>
    %490 = arith.divf %488, %489 : vector<8x128xf32>
    %491 = vector.extract_strided_slice %484 {offsets = [0, 128], sizes = [8, 128], strides = [1, 1]} : vector<8x512xf32> to vector<8x128xf32>
    %492 = arith.negf %491 : vector<8x128xf32>
    %493 = math.exp %492 : vector<8x128xf32>
    %cst_145 = arith.constant 1.000000e+00 : f32
    %494 = vector.broadcast %cst_145 : f32 to vector<8x128xf32>
    %495 = arith.addf %494, %493 : vector<8x128xf32>
    %496 = arith.divf %494, %495 : vector<8x128xf32>
    %497 = vector.extract_strided_slice %484 {offsets = [0, 256], sizes = [8, 128], strides = [1, 1]} : vector<8x512xf32> to vector<8x128xf32>
    %498 = math.tanh %497 : vector<8x128xf32>
    %499 = vector.extract_strided_slice %484 {offsets = [0, 384], sizes = [8, 128], strides = [1, 1]} : vector<8x512xf32> to vector<8x128xf32>
    %500 = arith.negf %499 : vector<8x128xf32>
    %501 = math.exp %500 : vector<8x128xf32>
    %cst_146 = arith.constant 1.000000e+00 : f32
    %502 = vector.broadcast %cst_146 : f32 to vector<8x128xf32>
    %503 = arith.addf %502, %501 : vector<8x128xf32>
    %504 = arith.divf %502, %503 : vector<8x128xf32>
    %505 = arith.mulf %496, %471 : vector<8x128xf32>
    %506 = arith.mulf %490, %498 : vector<8x128xf32>
    %507 = arith.addf %505, %506 : vector<8x128xf32>
    %508 = math.tanh %507 : vector<8x128xf32>
    %509 = arith.mulf %504, %508 : vector<8x128xf32>
    %510 = arith.index_cast %c5_i32_140 : i32 to index
    %c0_147 = arith.constant 0 : index
    %c0_148 = arith.constant 0 : index
    %511 = vector.load %arg2[%510, %c0_147, %c0_148] : memref<8x8x1xf32, #tpu.memory_space<vmem>>, vector<1x8x1xf32>
    %512 = vector.shape_cast %511 : vector<1x8x1xf32> to vector<8x1xf32>
    %513 = vector.broadcast %512 : vector<8x1xf32> to vector<8x128xf32>
    %514 = arith.addf %509, %513 : vector<8x128xf32>
    %515 = arith.maximumf %479, %514 : vector<8x128xf32>
    %c6_i32_149 = arith.constant 6 : i32
    %516 = arith.index_cast %c6_i32_149 : i32 to index
    %c0_150 = arith.constant 0 : index
    %c0_151 = arith.constant 0 : index
    %517 = vector.load %arg10[%516, %c0_150, %c0_151] : memref<8x8x512xf32, #tpu.memory_space<vmem>>, vector<1x8x512xf32>
    %518 = vector.shape_cast %517 : vector<1x8x512xf32> to vector<8x512xf32>
    %cst_152 = arith.constant dense<0.000000e+00> : vector<8x512xf32>
    %519 = tpu.matmul %509, %299, %cst_152 {dimension_numbers = #tpu.dot_dimension_numbers<[1], [0], [0], [1], [0, 0, 1, 1], [], []>} : vector<8x128xf32>, vector<128x512xf32>, vector<8x512xf32> -> vector<8x512xf32>
    %520 = arith.addf %518, %519 : vector<8x512xf32>
    %521 = vector.extract_strided_slice %520 {offsets = [0, 0], sizes = [8, 128], strides = [1, 1]} : vector<8x512xf32> to vector<8x128xf32>
    %522 = arith.negf %521 : vector<8x128xf32>
    %523 = math.exp %522 : vector<8x128xf32>
    %cst_153 = arith.constant 1.000000e+00 : f32
    %524 = vector.broadcast %cst_153 : f32 to vector<8x128xf32>
    %525 = arith.addf %524, %523 : vector<8x128xf32>
    %526 = arith.divf %524, %525 : vector<8x128xf32>
    %527 = vector.extract_strided_slice %520 {offsets = [0, 128], sizes = [8, 128], strides = [1, 1]} : vector<8x512xf32> to vector<8x128xf32>
    %528 = arith.negf %527 : vector<8x128xf32>
    %529 = math.exp %528 : vector<8x128xf32>
    %cst_154 = arith.constant 1.000000e+00 : f32
    %530 = vector.broadcast %cst_154 : f32 to vector<8x128xf32>
    %531 = arith.addf %530, %529 : vector<8x128xf32>
    %532 = arith.divf %530, %531 : vector<8x128xf32>
    %533 = vector.extract_strided_slice %520 {offsets = [0, 256], sizes = [8, 128], strides = [1, 1]} : vector<8x512xf32> to vector<8x128xf32>
    %534 = math.tanh %533 : vector<8x128xf32>
    %535 = vector.extract_strided_slice %520 {offsets = [0, 384], sizes = [8, 128], strides = [1, 1]} : vector<8x512xf32> to vector<8x128xf32>
    %536 = arith.negf %535 : vector<8x128xf32>
    %537 = math.exp %536 : vector<8x128xf32>
    %cst_155 = arith.constant 1.000000e+00 : f32
    %538 = vector.broadcast %cst_155 : f32 to vector<8x128xf32>
    %539 = arith.addf %538, %537 : vector<8x128xf32>
    %540 = arith.divf %538, %539 : vector<8x128xf32>
    %541 = arith.mulf %532, %507 : vector<8x128xf32>
    %542 = arith.mulf %526, %534 : vector<8x128xf32>
    %543 = arith.addf %541, %542 : vector<8x128xf32>
    %544 = math.tanh %543 : vector<8x128xf32>
    %545 = arith.mulf %540, %544 : vector<8x128xf32>
    %546 = arith.index_cast %c6_i32_149 : i32 to index
    %c0_156 = arith.constant 0 : index
    %c0_157 = arith.constant 0 : index
    %547 = vector.load %arg2[%546, %c0_156, %c0_157] : memref<8x8x1xf32, #tpu.memory_space<vmem>>, vector<1x8x1xf32>
    %548 = vector.shape_cast %547 : vector<1x8x1xf32> to vector<8x1xf32>
    %549 = vector.broadcast %548 : vector<8x1xf32> to vector<8x128xf32>
    %550 = arith.addf %545, %549 : vector<8x128xf32>
    %551 = arith.maximumf %515, %550 : vector<8x128xf32>
    %c7_i32_158 = arith.constant 7 : i32
    %552 = arith.index_cast %c7_i32_158 : i32 to index
    %c0_159 = arith.constant 0 : index
    %c0_160 = arith.constant 0 : index
    %553 = vector.load %arg10[%552, %c0_159, %c0_160] : memref<8x8x512xf32, #tpu.memory_space<vmem>>, vector<1x8x512xf32>
    %554 = vector.shape_cast %553 : vector<1x8x512xf32> to vector<8x512xf32>
    %cst_161 = arith.constant dense<0.000000e+00> : vector<8x512xf32>
    %555 = tpu.matmul %545, %299, %cst_161 {dimension_numbers = #tpu.dot_dimension_numbers<[1], [0], [0], [1], [0, 0, 1, 1], [], []>} : vector<8x128xf32>, vector<128x512xf32>, vector<8x512xf32> -> vector<8x512xf32>
    %556 = arith.addf %554, %555 : vector<8x512xf32>
    %557 = vector.extract_strided_slice %556 {offsets = [0, 0], sizes = [8, 128], strides = [1, 1]} : vector<8x512xf32> to vector<8x128xf32>
    %558 = arith.negf %557 : vector<8x128xf32>
    %559 = math.exp %558 : vector<8x128xf32>
    %cst_162 = arith.constant 1.000000e+00 : f32
    %560 = vector.broadcast %cst_162 : f32 to vector<8x128xf32>
    %561 = arith.addf %560, %559 : vector<8x128xf32>
    %562 = arith.divf %560, %561 : vector<8x128xf32>
    %563 = vector.extract_strided_slice %556 {offsets = [0, 128], sizes = [8, 128], strides = [1, 1]} : vector<8x512xf32> to vector<8x128xf32>
    %564 = arith.negf %563 : vector<8x128xf32>
    %565 = math.exp %564 : vector<8x128xf32>
    %cst_163 = arith.constant 1.000000e+00 : f32
    %566 = vector.broadcast %cst_163 : f32 to vector<8x128xf32>
    %567 = arith.addf %566, %565 : vector<8x128xf32>
    %568 = arith.divf %566, %567 : vector<8x128xf32>
    %569 = vector.extract_strided_slice %556 {offsets = [0, 256], sizes = [8, 128], strides = [1, 1]} : vector<8x512xf32> to vector<8x128xf32>
    %570 = math.tanh %569 : vector<8x128xf32>
    %571 = vector.extract_strided_slice %556 {offsets = [0, 384], sizes = [8, 128], strides = [1, 1]} : vector<8x512xf32> to vector<8x128xf32>
    %572 = arith.negf %571 : vector<8x128xf32>
    %573 = math.exp %572 : vector<8x128xf32>
    %cst_164 = arith.constant 1.000000e+00 : f32
    %574 = vector.broadcast %cst_164 : f32 to vector<8x128xf32>
    %575 = arith.addf %574, %573 : vector<8x128xf32>
    %576 = arith.divf %574, %575 : vector<8x128xf32>
    %577 = arith.mulf %568, %543 : vector<8x128xf32>
    %578 = arith.mulf %562, %570 : vector<8x128xf32>
    %579 = arith.addf %577, %578 : vector<8x128xf32>
    %580 = math.tanh %579 : vector<8x128xf32>
    %581 = arith.mulf %576, %580 : vector<8x128xf32>
    %582 = arith.index_cast %c7_i32_158 : i32 to index
    %c0_165 = arith.constant 0 : index
    %c0_166 = arith.constant 0 : index
    %583 = vector.load %arg2[%582, %c0_165, %c0_166] : memref<8x8x1xf32, #tpu.memory_space<vmem>>, vector<1x8x1xf32>
    %584 = vector.shape_cast %583 : vector<1x8x1xf32> to vector<8x1xf32>
    %585 = vector.broadcast %584 : vector<8x1xf32> to vector<8x128xf32>
    %586 = arith.addf %581, %585 : vector<8x128xf32>
    %587 = arith.maximumf %551, %586 : vector<8x128xf32>
    %c8_i32_167 = arith.constant 8 : i32
    %c0_168 = arith.constant 0 : index
    %c0_169 = arith.constant 0 : index
    %588 = vector.load %arg6[%c0_168, %c0_169] : memref<128x128xf32, #tpu.memory_space<vmem>>, vector<128x128xf32>
    %cst_170 = arith.constant dense<0.000000e+00> : vector<8x128xf32>
    %589 = tpu.matmul %587, %588, %cst_170 {dimension_numbers = #tpu.dot_dimension_numbers<[1], [0], [0], [1], [0, 0, 1, 1], [], []>} : vector<8x128xf32>, vector<128x128xf32>, vector<8x128xf32> -> vector<8x128xf32>
    %c0_171 = arith.constant 0 : index
    %c0_172 = arith.constant 0 : index
    %590 = vector.load %arg7[%c0_171, %c0_172] : memref<1x128xf32, #tpu.memory_space<vmem>>, vector<1x128xf32>
    %591 = vector.broadcast %590 : vector<1x128xf32> to vector<8x128xf32>
    %592 = arith.addf %589, %591 : vector<8x128xf32>
    %c0_173 = arith.constant 0 : index
    %c0_174 = arith.constant 0 : index
    %593 = vector.load %arg8[%c0_173, %c0_174] : memref<8x128xf32, #tpu.memory_space<vmem>>, vector<8x128xf32>
    tpu.vector_store %arg8[%c0_173, %c0_174], %592 {strides = array<i32>} : memref<8x128xf32, #tpu.memory_space<vmem>>, vector<8x128xf32>,
    return
  }
  func.func @transform_0(%arg0: i32) -> (i32, i32, i32) {
    %c0_i32 = arith.constant 0 : i32
    %c0_i32_0 = arith.constant 0 : i32
    %c0_i32_1 = arith.constant 0 : i32
    return %c0_i32, %arg0, %c0_i32_0 : i32, i32, i32
  }
  func.func @transform_1(%arg0: i32) -> (i32, i32, i32) {
    %c0_i32 = arith.constant 0 : i32
    %c0_i32_0 = arith.constant 0 : i32
    %c0_i32_1 = arith.constant 0 : i32
    return %c0_i32, %arg0, %c0_i32_0 : i32, i32, i32
  }
  func.func @transform_2(%arg0: i32) -> (i32, i32, i32) {
    %c0_i32 = arith.constant 0 : i32
    %c0_i32_0 = arith.constant 0 : i32
    %c0_i32_1 = arith.constant 0 : i32
    %c0_i32_2 = arith.constant 0 : i32
    return %c0_i32, %c0_i32_0, %c0_i32_1 : i32, i32, i32
  }
  func.func @transform_3(%arg0: i32) -> (i32, i32, i32) {
    %c0_i32 = arith.constant 0 : i32
    %c0_i32_0 = arith.constant 0 : i32
    %c0_i32_1 = arith.constant 0 : i32
    %c0_i32_2 = arith.constant 0 : i32
    return %c0_i32, %c0_i32_0, %c0_i32_1 : i32, i32, i32
  }
  func.func @transform_4(%arg0: i32) -> (i32, i32, i32) {
    %c0_i32 = arith.constant 0 : i32
    %c0_i32_0 = arith.constant 0 : i32
    %c0_i32_1 = arith.constant 0 : i32
    %c0_i32_2 = arith.constant 0 : i32
    return %c0_i32, %c0_i32_0, %c0_i32_1 : i32, i32, i32
  }
  func.func @transform_5(%arg0: i32) -> (i32, i32) {
    %c0_i32 = arith.constant 0 : i32
    %c0_i32_0 = arith.constant 0 : i32
    %c0_i32_1 = arith.constant 0 : i32
    return %c0_i32, %c0_i32_0 : i32, i32
  }
  func.func @transform_6(%arg0: i32) -> (i32, i32) {
    %c0_i32 = arith.constant 0 : i32
    %c0_i32_0 = arith.constant 0 : i32
    %c0_i32_1 = arith.constant 0 : i32
    return %c0_i32, %c0_i32_0 : i32, i32
  }
  func.func @transform_7(%arg0: i32) -> (i32, i32) {
    %c0_i32 = arith.constant 0 : i32
    %c0_i32_0 = arith.constant 0 : i32
    return %arg0, %c0_i32 : i32, i32
  }
}

</mosaic_0001>

<llo_original>
// kernel: lstm_predictor_forward.1
$region0: #{lstm_predictor_forward.1}
  #allocation0 [shape = 'u32[]', space=smem, size = 0x4, offset = 0x4, fixed_abs, tag = 'smem constant byte address 0x4 - core index']
  #allocation1 [shape = 'u32[144,128]{1,0:T(1,128)}', space=vmem, size = 0x12000, scoped, tag = 'internal scratch']
  #allocation2 [shape = 'f32[8,8,128]{2,1,0:T(8,128)}', space=vmem, size = 0x8000, scoped, tag = 'scratch operand']
  #allocation3 [shape = 'f32[8,8,512]{2,1,0:T(8,128)}', space=vmem, size = 0x20000, scoped, tag = 'scratch operand']
  %s0 = inlined_call_operand.vmem [shape: f32[8,16,128], index: 0, kind: input, shape index: {}]
  %s1 = inlined_call_operand.vmem [shape: f32[8,16,1], index: 1, kind: input, shape index: {}]
  %s2 = inlined_call_operand.vmem [shape: f32[2,128,512], index: 2, kind: input, shape index: {}]
  %s3 = inlined_call_operand.vmem [shape: f32[2,128,512], index: 3, kind: input, shape index: {}]
  %s4 = inlined_call_operand.vmem [shape: f32[2,1,512], index: 4, kind: input, shape index: {}]
  %s5 = inlined_call_operand.vmem [shape: f32[128,128], index: 5, kind: input, shape index: {}]
  %s6 = inlined_call_operand.vmem [shape: f32[1,128], index: 6, kind: input, shape index: {}]
  %s7 = inlined_call_operand.vmem [shape: f32[16,128], index: 7, kind: output, shape index: {}]
  %s8 = sld [smem:[#allocation0]]
  $region137: #{lstm_predictor_forward.1} parent=0
    _
  %s10 = ssub.s32 1, %s8
  %s11 = scalar_select 0, %s10, %s8
  $region1: #{lstm_predictor_forward.1} parent=0
    #allocation4 [shape = 'u8[65536]{0}', space=vmem, size = 0x10000, scoped, tag = 'input window, operand 0']
    #allocation5 [shape = 'u8[65536]{0}', space=vmem, size = 0x10000, scoped, tag = 'input window, operand 1']
    loop: start=0, step=1, limit=4
    $region2: #{lstm_predictor_forward.1} parent=1 // loop_pre_header
      _
    $region3: #{lstm_predictor_forward.1} parent=1 // loop_header
      %s13 = sphi 0, %s17
      %p14 = scmp.ge.s32.totalorder %s13, 4
      %s23 = sphi 0, %s25
      %s26 = sphi 0, %s23
      %s27 = sphi 0, %s26
      %s43 = sphi 0, %s27
      %s49 = sphi 0, %s51
      %s52 = sphi 0, %s49
      %s53 = sphi 0, %s52
      %s69 = sphi 0, %s53
      %s73 = sphi 0, %s73
      %s75 = sphi 0, %s73
      %s76 = sphi 0, %s75
      %s90 = sphi 0, %s76
      %s94 = sphi 0, %s94
      %s96 = sphi 0, %s94
      %s97 = sphi 0, %s96
      %s111 = sphi 0, %s97
      %s115 = sphi 0, %s115
      %s117 = sphi 0, %s115
      %s118 = sphi 0, %s117
      %s132 = sphi 0, %s118
      %s136 = sphi 0, %s136
      %s138 = sphi 0, %s136
      %s139 = sphi 0, %s138
      %s153 = sphi 0, %s139
      %s157 = sphi 0, %s157
      %s159 = sphi 0, %s157
      %s160 = sphi 0, %s159
      %s174 = sphi 0, %s160
      %s180 = sphi 0, %s182
      %s183 = sphi 0, %s180
      %s184 = sphi 0, %s183
      %s200 = sphi 0, %s184
    $region4: #{lstm_predictor_forward.1} parent=1 // loop_header_branch
      %16 = sbr.rel (%p14) target = $region8
    $region5: #{lstm_predictor_forward.1} parent=1 // loop_body
      %s18 = ssub.s32 %s13, 1
      %s19 = ssub.s32 %s13, 2
      %s20 = sadd.s32 %s13, 1
      %s21 = ssub.s32 %s13, %s20
      %p22 = scmp.eq.s32.totalorder %s21, 0
      %s24 = sadd.s32 %s23, 1
      %s25 = scalar_select %p22, %s23, %s24
      %p28 = pneg %p22
      %p29 = scmp.eq.s32.totalorder %s13, 1
      %p30 = por %p28, %p29
      %p31 = scmp.ne.s32.totalorder %s23, %s26
      %p32 = scmp.eq.s32.totalorder %s13, 0
      %p33 = por %p31, %p32
      %p34 = scmp.ne.s32.totalorder %s23, %s26
      %p35 = scmp.eq.s32.totalorder %s18, 1
      %p36 = por %p34, %p35
      %p37 = scmp.ne.s32.totalorder %s26, %s27
      %p38 = scmp.eq.s32.totalorder %s18, 0
      %p39 = por %p37, %p38
      %p40 = scmp.ne.s32.totalorder %s26, %s27
      %p41 = scmp.eq.s32.totalorder %s19, 1
      %p42 = por %p40, %p41
      %p44 = scmp.ne.s32.totalorder %s27, %s43
      %p45 = scmp.eq.s32.totalorder %s19, 0
      %p46 = por %p44, %p45
      %s47 = ssub.s32 %s13, %s20
      %p48 = scmp.eq.s32.totalorder %s47, 0
      %s50 = sadd.s32 %s49, 1
      %s51 = scalar_select %p48, %s49, %s50
      %p54 = pneg %p48
      %p55 = scmp.eq.s32.totalorder %s13, 1
      %p56 = por %p54, %p55
      %p57 = scmp.ne.s32.totalorder %s49, %s52
      %p58 = scmp.eq.s32.totalorder %s13, 0
      %p59 = por %p57, %p58
      %p60 = scmp.ne.s32.totalorder %s49, %s52
      %p61 = scmp.eq.s32.totalorder %s18, 1
      %p62 = por %p60, %p61
      %p63 = scmp.ne.s32.totalorder %s52, %s53
      %p64 = scmp.eq.s32.totalorder %s18, 0
      %p65 = por %p63, %p64
      %p66 = scmp.ne.s32.totalorder %s52, %s53
      %p67 = scmp.eq.s32.totalorder %s19, 1
      %p68 = por %p66, %p67
      %p70 = scmp.ne.s32.totalorder %s53, %s69
      %p71 = scmp.eq.s32.totalorder %s19, 0
      %p72 = por %p70, %p71
      %s74 = sadd.s32 %s73, 1
      %p77 = scmp.eq.s32.totalorder %s13, 1
      %p78 = scmp.ne.s32.totalorder %s73, %s75
      %p79 = scmp.eq.s32.totalorder %s13, 0
      %p80 = por %p78, %p79
      %p81 = scmp.ne.s32.totalorder %s73, %s75
      %p82 = scmp.eq.s32.totalorder %s18, 1
      %p83 = por %p81, %p82
      %p84 = scmp.ne.s32.totalorder %s75, %s76
      %p85 = scmp.eq.s32.totalorder %s18, 0
      %p86 = por %p84, %p85
      %p87 = scmp.ne.s32.totalorder %s75, %s76
      %p88 = scmp.eq.s32.totalorder %s19, 1
      %p89 = por %p87, %p88
      %p91 = scmp.ne.s32.totalorder %s76, %s90
      %p92 = scmp.eq.s32.totalorder %s19, 0
      %p93 = por %p91, %p92
      %s95 = sadd.s32 %s94, 1
      %p98 = scmp.eq.s32.totalorder %s13, 1
      %p99 = scmp.ne.s32.totalorder %s94, %s96
      %p100 = scmp.eq.s32.totalorder %s13, 0
      %p101 = por %p99, %p100
      %p102 = scmp.ne.s32.totalorder %s94, %s96
      %p103 = scmp.eq.s32.totalorder %s18, 1
      %p104 = por %p102, %p103
      %p105 = scmp.ne.s32.totalorder %s96, %s97
      %p106 = scmp.eq.s32.totalorder %s18, 0
      %p107 = por %p105, %p106
      %p108 = scmp.ne.s32.totalorder %s96, %s97
      %p109 = scmp.eq.s32.totalorder %s19, 1
      %p110 = por %p108, %p109
      %p112 = scmp.ne.s32.totalorder %s97, %s111
      %p113 = scmp.eq.s32.totalorder %s19, 0
      %p114 = por %p112, %p113
      %s116 = sadd.s32 %s115, 1
      %p119 = scmp.eq.s32.totalorder %s13, 1
      %p120 = scmp.ne.s32.totalorder %s115, %s117
      %p121 = scmp.eq.s32.totalorder %s13, 0
      %p122 = por %p120, %p121
      %p123 = scmp.ne.s32.totalorder %s115, %s117
      %p124 = scmp.eq.s32.totalorder %s18, 1
      %p125 = por %p123, %p124
      %p126 = scmp.ne.s32.totalorder %s117, %s118
      %p127 = scmp.eq.s32.totalorder %s18, 0
      %p128 = por %p126, %p127
      %p129 = scmp.ne.s32.totalorder %s117, %s118
      %p130 = scmp.eq.s32.totalorder %s19, 1
      %p131 = por %p129, %p130
      %p133 = scmp.ne.s32.totalorder %s118, %s132
      %p134 = scmp.eq.s32.totalorder %s19, 0
      %p135 = por %p133, %p134
      %s137 = sadd.s32 %s136, 1
      %p140 = scmp.eq.s32.totalorder %s13, 1
      %p141 = scmp.ne.s32.totalorder %s136, %s138
      %p142 = scmp.eq.s32.totalorder %s13, 0
      %p143 = por %p141, %p142
      %p144 = scmp.ne.s32.totalorder %s136, %s138
      %p145 = scmp.eq.s32.totalorder %s18, 1
      %p146 = por %p144, %p145
      %p147 = scmp.ne.s32.totalorder %s138, %s139
      %p148 = scmp.eq.s32.totalorder %s18, 0
      %p149 = por %p147, %p148
      %p150 = scmp.ne.s32.totalorder %s138, %s139
      %p151 = scmp.eq.s32.totalorder %s19, 1
      %p152 = por %p150, %p151
      %p154 = scmp.ne.s32.totalorder %s139, %s153
      %p155 = scmp.eq.s32.totalorder %s19, 0
      %p156 = por %p154, %p155
      %s158 = sadd.s32 %s157, 1
      %p161 = scmp.eq.s32.totalorder %s13, 1
      %p162 = scmp.ne.s32.totalorder %s157, %s159
      %p163 = scmp.eq.s32.totalorder %s13, 0
      %p164 = por %p162, %p163
      %p165 = scmp.ne.s32.totalorder %s157, %s159
      %p166 = scmp.eq.s32.totalorder %s18, 1
      %p167 = por %p165, %p166
      %p168 = scmp.ne.s32.totalorder %s159, %s160
      %p169 = scmp.eq.s32.totalorder %s18, 0
      %p170 = por %p168, %p169
      %p171 = scmp.ne.s32.totalorder %s159, %s160
      %p172 = scmp.eq.s32.totalorder %s19, 1
      %p173 = por %p171, %p172
      %p175 = scmp.ne.s32.totalorder %s160, %s174
      %p176 = scmp.eq.s32.totalorder %s19, 0
      %p177 = por %p175, %p176
      %s178 = ssub.s32 %s13, %s20
      %p179 = scmp.eq.s32.totalorder %s178, 0
      %s181 = sadd.s32 %s180, 1
      %s182 = scalar_select %p179, %s180, %s181
      %p185 = pneg %p179
      %p186 = scmp.eq.s32.totalorder %s13, 1
      %p187 = por %p185, %p186
      %p188 = scmp.ne.s32.totalorder %s180, %s183
      %p189 = scmp.eq.s32.totalorder %s13, 0
      %p190 = por %p188, %p189
      %p191 = scmp.ne.s32.totalorder %s180, %s183
      %p192 = scmp.eq.s32.totalorder %s18, 1
      %p193 = por %p191, %p192
      %p194 = scmp.ne.s32.totalorder %s183, %s184
      %p195 = scmp.eq.s32.totalorder %s18, 0
      %p196 = por %p194, %p195
      %p197 = scmp.ne.s32.totalorder %s183, %s184
      %p198 = scmp.eq.s32.totalorder %s19, 1
      %p199 = por %p197, %p198
      %p201 = scmp.ne.s32.totalorder %s184, %s200
      %p202 = scmp.eq.s32.totalorder %s19, 0
      %p203 = por %p201, %p202
      %p204 = scmp.le.s32.totalorder 1, %s13
      %p205 = scmp.lt.s32.totalorder %s13, 3
      %p206 = pnand %p204, %p205
      %p207 = pneg %p206
      // Predicated region
      $region9: #{lstm_predictor_forward.1} parent=5 // pred_check
        _
      $region10: #{lstm_predictor_forward.1} parent=5 // pred_check_branch
        %209 = sbr.rel (%p206) target = $region12
      $region11: #{lstm_predictor_forward.1} parent=5 // pred_region
        %s210 = ssub.s32 %s13, 1
        // Predicated region
        $region13: #{lstm_predictor_forward.1} parent=11 // pred_check
          %p211 = pneg %p86
        $region14: #{lstm_predictor_forward.1} parent=11 // pred_check_branch
          %213 = sbr.rel (%p211) target = $region16
        $region15: #{lstm_predictor_forward.1} parent=11 // pred_region
          _
        $region16: #{lstm_predictor_forward.1} parent=11 // pred_fallthru
          _
        // Predicated region
        $region17: #{lstm_predictor_forward.1} parent=11 // pred_check
          %p214 = pneg %p107
        $region18: #{lstm_predictor_forward.1} parent=11 // pred_check_branch
          %216 = sbr.rel (%p214) target = $region20
        $region19: #{lstm_predictor_forward.1} parent=11 // pred_region
          _
        $region20: #{lstm_predictor_forward.1} parent=11 // pred_fallthru
          _
        // Predicated region
        $region21: #{lstm_predictor_forward.1} parent=11 // pred_check
          %p217 = pneg %p128
        $region22: #{lstm_predictor_forward.1} parent=11 // pred_check_branch
          %219 = sbr.rel (%p217) target = $region24
        $region23: #{lstm_predictor_forward.1} parent=11 // pred_region
          _
        $region24: #{lstm_predictor_forward.1} parent=11 // pred_fallthru
          _
        // Predicated region
        $region25: #{lstm_predictor_forward.1} parent=11 // pred_check
          %p220 = pneg %p149
        $region26: #{lstm_predictor_forward.1} parent=11 // pred_check_branch
          %222 = sbr.rel (%p220) target = $region28
        $region27: #{lstm_predictor_forward.1} parent=11 // pred_region
          _
        $region28: #{lstm_predictor_forward.1} parent=11 // pred_fallthru
          _
        // Predicated region
        $region29: #{lstm_predictor_forward.1} parent=11 // pred_check
          %p223 = pneg %p170
        $region30: #{lstm_predictor_forward.1} parent=11 // pred_check_branch
          %225 = sbr.rel (%p223) target = $region32
        $region31: #{lstm_predictor_forward.1} parent=11 // pred_region
          _
        $region32: #{lstm_predictor_forward.1} parent=11 // pred_fallthru
          _
      $region12: #{lstm_predictor_forward.1} parent=5 // pred_fallthru
        _
      %p226 = scmp.lt.s32.totalorder %s13, 2
      // Predicated region
      $region33: #{lstm_predictor_forward.1} parent=5 // pred_check
        %p227 = pneg %p226
      $region34: #{lstm_predictor_forward.1} parent=5 // pred_check_branch
        %229 = sbr.rel (%p227) target = $region36
      $region35: #{lstm_predictor_forward.1} parent=5 // pred_region
        // Predicated region
        $region37: #{lstm_predictor_forward.1} parent=35 // pred_check
          %p230 = pneg %p33
        $region38: #{lstm_predictor_forward.1} parent=35 // pred_check_branch
          %232 = sbr.rel (%p230) target = $region40
        $region39: #{lstm_predictor_forward.1} parent=35 // pred_region
          %s233 = sand.u32 %s23, 1
          %s234 = sand.u32 %s23, 1
          %s235 = smul.addr %s234, 64
          %s236 = scalar_lea.vmem [#allocation4], %s235
          %s237 = smul.addr %s13, 8
          %s238 = scalar_lea.vmem %s0, %s237
          // Predicated region
          $region41: #{lstm_predictor_forward.1} parent=39 // pred_check
            _
          $region42: #{lstm_predictor_forward.1} parent=39 // pred_check_branch
            %240 = sbr.rel (0) target = $region44
          $region43: #{lstm_predictor_forward.1} parent=39 // pred_region
            // Predicated region
            $region45: #{lstm_predictor_forward.1} parent=43 // pred_check
              _
            $region46: #{lstm_predictor_forward.1} parent=43 // pred_check_branch
              %242 = sbr.rel (0) target = $region48
            $region47: #{lstm_predictor_forward.1} parent=43 // pred_region
              // Predicated region
              $region60: #{lstm_predictor_forward.1} parent=47 // pred_check
                _
              $region61: #{lstm_predictor_forward.1} parent=47 // pred_check_branch
                %272 = sbr.rel (0) target = $region63
              $region62: #{lstm_predictor_forward.1} parent=47 // pred_region
                loop: start=0, step=1, limit=1
                $region64: #{lstm_predictor_forward.1} parent=62 // loop_pre_header
                  _
                $region65: #{lstm_predictor_forward.1} parent=62 // loop_header
                  %s274 = sphi 0, %s278
                  %p275 = scmp.ge.s32.totalorder %s274, 1
                  %s279 = sphi %s238, %s238
                  %s280 = sphi %s236, %s236
                $region66: #{lstm_predictor_forward.1} parent=62 // loop_header_branch
                  %277 = sbr.rel (%p275) target = $region70
                $region67: #{lstm_predictor_forward.1} parent=62 // loop_body
                  %v281 = vld [vmem:[%s279] sm:$0xff]
                  %282 = vst [vmem:[%s280] sm:$0xff] %v281
                  %v283 = vld [vmem:[%s279 + $0x10] sm:$0xff]
                  %284 = vst [vmem:[%s280 + $0x8] sm:$0xff] %v283
                  %v285 = vld [vmem:[%s279 + $0x20] sm:$0xff]
                  %286 = vst [vmem:[%s280 + $0x10] sm:$0xff] %v285
                  %v287 = vld [vmem:[%s279 + $0x30] sm:$0xff]
                  %288 = vst [vmem:[%s280 + $0x18] sm:$0xff] %v287
                  %v289 = vld [vmem:[%s279 + $0x40] sm:$0xff]
                  %290 = vst [vmem:[%s280 + $0x20] sm:$0xff] %v289
                  %v291 = vld [vmem:[%s279 + $0x50] sm:$0xff]
                  %292 = vst [vmem:[%s280 + $0x28] sm:$0xff] %v291
                  %v293 = vld [vmem:[%s279 + $0x60] sm:$0xff]
                  %294 = vst [vmem:[%s280 + $0x30] sm:$0xff] %v293
                  %v295 = vld [vmem:[%s279 + $0x70] sm:$0xff]
                  %296 = vst [vmem:[%s280 + $0x38] sm:$0xff] %v295
                $region68: #{lstm_predictor_forward.1} parent=62 // loop_footer
                  %s278 = sadd.s32 1, %s274
                $region69: #{lstm_predictor_forward.1} parent=62 // loop_footer_branch
                  %273 = sbr.rel target = $region65
                $region70: #{lstm_predictor_forward.1} parent=62 // loop_exit
                  _
              $region63: #{lstm_predictor_forward.1} parent=47 // pred_fallthru
                _
              // Predicated region
              $region71: #{lstm_predictor_forward.1} parent=47 // pred_check
                _
              $region72: #{lstm_predictor_forward.1} parent=47 // pred_check_branch
                %298 = sbr.rel target = $region74
              $region73: #{lstm_predictor_forward.1} parent=47 // pred_region
                _
              $region74: #{lstm_predictor_forward.1} parent=47 // pred_fallthru
                _
            $region48: #{lstm_predictor_forward.1} parent=43 // pred_fallthru
              _
            // Predicated region
            $region49: #{lstm_predictor_forward.1} parent=43 // pred_check
              _
            $region50: #{lstm_predictor_forward.1} parent=43 // pred_check_branch
              %244 = sbr.rel target = $region52
            $region51: #{lstm_predictor_forward.1} parent=43 // pred_region
              %s246 = ssub.s32 256, 1
              loop: start=0, step=1, limit=1
              $region53: #{lstm_predictor_forward.1} parent=51 // loop_pre_header
                _
              $region54: #{lstm_predictor_forward.1} parent=51 // loop_header
                %s248 = sphi 0, %s252
                %p249 = scmp.ge.s32.totalorder %s248, 1
                %s253 = sphi %s238, %s238
                %s254 = sphi %s236, %s236
              $region55: #{lstm_predictor_forward.1} parent=51 // loop_header_branch
                %251 = sbr.rel (%p249) target = $region59
              $region56: #{lstm_predictor_forward.1} parent=51 // loop_body
                %v255 = vld [vmem:[%s253] sm:%s246]
                %256 = vst [vmem:[%s254] sm:%s246] %v255
                %v257 = vld [vmem:[%s253 + $0x10] sm:%s246]
                %258 = vst [vmem:[%s254 + $0x8] sm:%s246] %v257
                %v259 = vld [vmem:[%s253 + $0x20] sm:%s246]
                %260 = vst [vmem:[%s254 + $0x10] sm:%s246] %v259
                %v261 = vld [vmem:[%s253 + $0x30] sm:%s246]
                %262 = vst [vmem:[%s254 + $0x18] sm:%s246] %v261
                %v263 = vld [vmem:[%s253 + $0x40] sm:%s246]
                %264 = vst [vmem:[%s254 + $0x20] sm:%s246] %v263
                %v265 = vld [vmem:[%s253 + $0x50] sm:%s246]
                %266 = vst [vmem:[%s254 + $0x28] sm:%s246] %v265
                %v267 = vld [vmem:[%s253 + $0x60] sm:%s246]
                %268 = vst [vmem:[%s254 + $0x30] sm:%s246] %v267
                %v269 = vld [vmem:[%s253 + $0x70] sm:%s246]
                %270 = vst [vmem:[%s254 + $0x38] sm:%s246] %v269
              $region57: #{lstm_predictor_forward.1} parent=51 // loop_footer
                %s252 = sadd.s32 1, %s248
              $region58: #{lstm_predictor_forward.1} parent=51 // loop_footer_branch
                %247 = sbr.rel target = $region54
              $region59: #{lstm_predictor_forward.1} parent=51 // loop_exit
                _
            $region52: #{lstm_predictor_forward.1} parent=43 // pred_fallthru
              _
          $region44: #{lstm_predictor_forward.1} parent=39 // pred_fallthru
            _
          %299 = vnop
        $region40: #{lstm_predictor_forward.1} parent=35 // pred_fallthru
          _
        // Predicated region
        $region75: #{lstm_predictor_forward.1} parent=35 // pred_check
          %p300 = pneg %p59
        $region76: #{lstm_predictor_forward.1} parent=35 // pred_check_branch
          %302 = sbr.rel (%p300) target = $region78
        $region77: #{lstm_predictor_forward.1} parent=35 // pred_region
          %s303 = sand.u32 %s49, 1
          %s304 = sand.u32 %s49, 1
          %s305 = smul.addr %s304, 64
          %s306 = scalar_lea.vmem [#allocation5], %s305
          %s307 = smul.addr %s13, 8
          %s308 = scalar_lea.vmem %s1, %s307
          // Predicated region
          $region79: #{lstm_predictor_forward.1} parent=77 // pred_check
            _
          $region80: #{lstm_predictor_forward.1} parent=77 // pred_check_branch
            %310 = sbr.rel (0) target = $region82
          $region81: #{lstm_predictor_forward.1} parent=77 // pred_region
            // Predicated region
            $region83: #{lstm_predictor_forward.1} parent=81 // pred_check
              _
            $region84: #{lstm_predictor_forward.1} parent=81 // pred_check_branch
              %312 = sbr.rel (0) target = $region86
            $region85: #{lstm_predictor_forward.1} parent=81 // pred_region
              // Predicated region
              $region98: #{lstm_predictor_forward.1} parent=85 // pred_check
                _
              $region99: #{lstm_predictor_forward.1} parent=85 // pred_check_branch
                %342 = sbr.rel (0) target = $region101
              $region100: #{lstm_predictor_forward.1} parent=85 // pred_region
                loop: start=0, step=1, limit=1
                $region102: #{lstm_predictor_forward.1} parent=100 // loop_pre_header
                  _
                $region103: #{lstm_predictor_forward.1} parent=100 // loop_header
                  %s344 = sphi 0, %s348
                  %p345 = scmp.ge.s32.totalorder %s344, 1
                  %s349 = sphi %s308, %s308
                  %s350 = sphi %s306, %s306
                $region104: #{lstm_predictor_forward.1} parent=100 // loop_header_branch
                  %347 = sbr.rel (%p345) target = $region108
                $region105: #{lstm_predictor_forward.1} parent=100 // loop_body
                  %v351 = vld [vmem:[%s349] sm:$0xff]
                  %352 = vst [vmem:[%s350] sm:$0xff] %v351
                  %v353 = vld [vmem:[%s349 + $0x10] sm:$0xff]
                  %354 = vst [vmem:[%s350 + $0x8] sm:$0xff] %v353
                  %v355 = vld [vmem:[%s349 + $0x20] sm:$0xff]
                  %356 = vst [vmem:[%s350 + $0x10] sm:$0xff] %v355
                  %v357 = vld [vmem:[%s349 + $0x30] sm:$0xff]
                  %358 = vst [vmem:[%s350 + $0x18] sm:$0xff] %v357
                  %v359 = vld [vmem:[%s349 + $0x40] sm:$0xff]
                  %360 = vst [vmem:[%s350 + $0x20] sm:$0xff] %v359
                  %v361 = vld [vmem:[%s349 + $0x50] sm:$0xff]
                  %362 = vst [vmem:[%s350 + $0x28] sm:$0xff] %v361
                  %v363 = vld [vmem:[%s349 + $0x60] sm:$0xff]
                  %364 = vst [vmem:[%s350 + $0x30] sm:$0xff] %v363
                  %v365 = vld [vmem:[%s349 + $0x70] sm:$0xff]
                  %366 = vst [vmem:[%s350 + $0x38] sm:$0xff] %v365
                $region106: #{lstm_predictor_forward.1} parent=100 // loop_footer
                  %s348 = sadd.s32 1, %s344
                $region107: #{lstm_predictor_forward.1} parent=100 // loop_footer_branch
                  %343 = sbr.rel target = $region103
                $region108: #{lstm_predictor_forward.1} parent=100 // loop_exit
                  _
              $region101: #{lstm_predictor_forward.1} parent=85 // pred_fallthru
                _
              // Predicated region
              $region109: #{lstm_predictor_forward.1} parent=85 // pred_check
                _
              $region110: #{lstm_predictor_forward.1} parent=85 // pred_check_branch
                %368 = sbr.rel target = $region112
              $region111: #{lstm_predictor_forward.1} parent=85 // pred_region
                _
              $region112: #{lstm_predictor_forward.1} parent=85 // pred_fallthru
                _
            $region86: #{lstm_predictor_forward.1} parent=81 // pred_fallthru
              _
            // Predicated region
            $region87: #{lstm_predictor_forward.1} parent=81 // pred_check
              _
            $region88: #{lstm_predictor_forward.1} parent=81 // pred_check_branch
              %314 = sbr.rel target = $region90
            $region89: #{lstm_predictor_forward.1} parent=81 // pred_region
              %s316 = ssub.s32 256, 1
              loop: start=0, step=1, limit=1
              $region91: #{lstm_predictor_forward.1} parent=89 // loop_pre_header
                _
              $region92: #{lstm_predictor_forward.1} parent=89 // loop_header
                %s318 = sphi 0, %s322
                %p319 = scmp.ge.s32.totalorder %s318, 1
                %s323 = sphi %s308, %s308
                %s324 = sphi %s306, %s306
              $region93: #{lstm_predictor_forward.1} parent=89 // loop_header_branch
                %321 = sbr.rel (%p319) target = $region97
              $region94: #{lstm_predictor_forward.1} parent=89 // loop_body
                %v325 = vld [vmem:[%s323] sm:%s316]
                %326 = vst [vmem:[%s324] sm:%s316] %v325
                %v327 = vld [vmem:[%s323 + $0x10] sm:%s316]
                %328 = vst [vmem:[%s324 + $0x8] sm:%s316] %v327
                %v329 = vld [vmem:[%s323 + $0x20] sm:%s316]
                %330 = vst [vmem:[%s324 + $0x10] sm:%s316] %v329
                %v331 = vld [vmem:[%s323 + $0x30] sm:%s316]
                %332 = vst [vmem:[%s324 + $0x18] sm:%s316] %v331
                %v333 = vld [vmem:[%s323 + $0x40] sm:%s316]
                %334 = vst [vmem:[%s324 + $0x20] sm:%s316] %v333
                %v335 = vld [vmem:[%s323 + $0x50] sm:%s316]
                %336 = vst [vmem:[%s324 + $0x28] sm:%s316] %v335
                %v337 = vld [vmem:[%s323 + $0x60] sm:%s316]
                %338 = vst [vmem:[%s324 + $0x30] sm:%s316] %v337
                %v339 = vld [vmem:[%s323 + $0x70] sm:%s316]
                %340 = vst [vmem:[%s324 + $0x38] sm:%s316] %v339
              $region95: #{lstm_predictor_forward.1} parent=89 // loop_footer
                %s322 = sadd.s32 1, %s318
              $region96: #{lstm_predictor_forward.1} parent=89 // loop_footer_branch
                %317 = sbr.rel target = $region92
              $region97: #{lstm_predictor_forward.1} parent=89 // loop_exit
                _
            $region90: #{lstm_predictor_forward.1} parent=81 // pred_fallthru
              _
          $region82: #{lstm_predictor_forward.1} parent=77 // pred_fallthru
            _
          %369 = vnop
        $region78: #{lstm_predictor_forward.1} parent=35 // pred_fallthru
          _
      $region36: #{lstm_predictor_forward.1} parent=5 // pred_fallthru
        _
      %p370 = scmp.le.s32.totalorder 1, %s13
      %p371 = scmp.lt.s32.totalorder %s13, 3
      %p372 = pnand %p370, %p371
      %p373 = pneg %p372
      // Predicated region
      $region113: #{lstm_predictor_forward.1} parent=5 // pred_check
        _
      $region114: #{lstm_predictor_forward.1} parent=5 // pred_check_branch
        %375 = sbr.rel (%p372) target = $region116
      $region115: #{lstm_predictor_forward.1} parent=5 // pred_region
        %s376 = ssub.s32 %s13, 1
        %s377 = sand.u32 %s26, 1
        %s378 = sand.u32 %s26, 1
        %s379 = smul.addr %s378, 64
        %s380 = scalar_lea.vmem [#allocation4], %s379
        // Predicated region
        $region117: #{lstm_predictor_forward.1} parent=115 // pred_check
          %p381 = pneg %p39
        $region118: #{lstm_predictor_forward.1} parent=115 // pred_check_branch
          %383 = sbr.rel (%p381) target = $region120
        $region119: #{lstm_predictor_forward.1} parent=115 // pred_region
          _
        $region120: #{lstm_predictor_forward.1} parent=115 // pred_fallthru
          _
        %s384 = sand.u32 %s52, 1
        %s385 = sand.u32 %s52, 1
        %s386 = smul.addr %s385, 64
        %s387 = scalar_lea.vmem [#allocation5], %s386
        // Predicated region
        $region121: #{lstm_predictor_forward.1} parent=115 // pred_check
          %p388 = pneg %p65
        $region122: #{lstm_predictor_forward.1} parent=115 // pred_check_branch
          %390 = sbr.rel (%p388) target = $region124
        $region123: #{lstm_predictor_forward.1} parent=115 // pred_region
          _
        $region124: #{lstm_predictor_forward.1} parent=115 // pred_fallthru
          _
        %s391 = sand.u32 %s26, 1
        %s392 = sand.u32 %s26, 1
        %s393 = smul.addr %s392, 64
        %s394 = scalar_lea.vmem [#allocation4], %s393
        %p395 = pneg %p39
        %p396 = pneg %p36
        %s397 = sand.u32 %s52, 1
        %s398 = sand.u32 %s52, 1
        %s399 = smul.addr %s398, 64
        %s400 = scalar_lea.vmem [#allocation5], %s399
        %p401 = pneg %p65
        %p402 = pneg %p62
        %p403 = pneg %p86
        %p404 = pneg %p83
        %p405 = pneg %p107
        %p406 = pneg %p104
        %p407 = pneg %p128
        %p408 = pneg %p125
        %p409 = pneg %p149
        %p410 = pneg %p146
        %p411 = pneg %p170
        %p412 = pneg %p167
        %p413 = pneg %p196
        %p414 = pneg %p193
        %p415 = scmp.lt.s32.totalorder %s18, 1
        %s416 = scalar_select %p415, %s18, 1
        %s417 = smul.addr %s416, 8
        %s418 = scalar_lea.vmem %s7, %s417
        %p419 = scmp.lt.s32.totalorder %s18, 1
        %s420 = scalar_select %p419, %s18, 1
        %s421 = smul.addr %s420, 8
        %s422 = scalar_lea.vmem %s7, %s421
        %v423 = vld [vmem:[%s380] sm:$0xff]
        %v424 = vld [vmem:[%s380 + $0x8] sm:$0xff]
        %v425 = vld [vmem:[%s380 + $0x10] sm:$0xff]
        %v426 = vld [vmem:[%s380 + $0x18] sm:$0xff]
        %v427 = vld [vmem:[%s380 + $0x20] sm:$0xff]
        %v428 = vld [vmem:[%s380 + $0x28] sm:$0xff]
        %v429 = vld [vmem:[%s380 + $0x30] sm:$0xff]
        %v430 = vld [vmem:[%s380 + $0x38] sm:$0xff]
        %v431 = vld [vmem:[%s2] sm:$0xff]
        %v432 = vld [vmem:[%s2 + $0x8] sm:$0xff]
        %v433 = vld [vmem:[%s2 + $0x10] sm:$0xff]
        %v434 = vld [vmem:[%s2 + $0x18] sm:$0xff]
        %v435 = vld [vmem:[%s2 + $0x20] sm:$0xff]
        %v436 = vld [vmem:[%s2 + $0x28] sm:$0xff]
        %v437 = vld [vmem:[%s2 + $0x30] sm:$0xff]
        %v438 = vld [vmem:[%s2 + $0x38] sm:$0xff]
        %v439 = vld [vmem:[%s2 + $0x40] sm:$0xff]
        %v440 = vld [vmem:[%s2 + $0x48] sm:$0xff]
        %v441 = vld [vmem:[%s2 + $0x50] sm:$0xff]
        %v442 = vld [vmem:[%s2 + $0x58] sm:$0xff]
        %v443 = vld [vmem:[%s2 + $0x60] sm:$0xff]
        %v444 = vld [vmem:[%s2 + $0x68] sm:$0xff]
        %v445 = vld [vmem:[%s2 + $0x70] sm:$0xff]
        %v446 = vld [vmem:[%s2 + $0x78] sm:$0xff]
        %v447 = vld [vmem:[%s2 + $0x80] sm:$0xff]
        %v448 = vld [vmem:[%s2 + $0x88] sm:$0xff]
        %v449 = vld [vmem:[%s2 + $0x90] sm:$0xff]
        %v450 = vld [vmem:[%s2 + $0x98] sm:$0xff]
        %v451 = vld [vmem:[%s2 + $0xa0] sm:$0xff]
        %v452 = vld [vmem:[%s2 + $0xa8] sm:$0xff]
        %v453 = vld [vmem:[%s2 + $0xb0] sm:$0xff]
        %v454 = vld [vmem:[%s2 + $0xb8] sm:$0xff]
        %v455 = vld [vmem:[%s2 + $0xc0] sm:$0xff]
        %v456 = vld [vmem:[%s2 + $0xc8] sm:$0xff]
        %v457 = vld [vmem:[%s2 + $0xd0] sm:$0xff]
        %v458 = vld [vmem:[%s2 + $0xd8] sm:$0xff]
        %v459 = vld [vmem:[%s2 + $0xe0] sm:$0xff]
        %v460 = vld [vmem:[%s2 + $0xe8] sm:$0xff]
        %v461 = vld [vmem:[%s2 + $0xf0] sm:$0xff]
        %v462 = vld [vmem:[%s2 + $0xf8] sm:$0xff]
        %v463 = vld [vmem:[%s2 + $0x100] sm:$0xff]
        %v464 = vld [vmem:[%s2 + $0x108] sm:$0xff]
        %v465 = vld [vmem:[%s2 + $0x110] sm:$0xff]
        %v466 = vld [vmem:[%s2 + $0x118] sm:$0xff]
        %v467 = vld [vmem:[%s2 + $0x120] sm:$0xff]
        %v468 = vld [vmem:[%s2 + $0x128] sm:$0xff]
        %v469 = vld [vmem:[%s2 + $0x130] sm:$0xff]
        %v470 = vld [vmem:[%s2 + $0x138] sm:$0xff]
        %v471 = vld [vmem:[%s2 + $0x140] sm:$0xff]
        %v472 = vld [vmem:[%s2 + $0x148] sm:$0xff]
        %v473 = vld [vmem:[%s2 + $0x150] sm:$0xff]
        %v474 = vld [vmem:[%s2 + $0x158] sm:$0xff]
        %v475 = vld [vmem:[%s2 + $0x160] sm:$0xff]
        %v476 = vld [vmem:[%s2 + $0x168] sm:$0xff]
        %v477 = vld [vmem:[%s2 + $0x170] sm:$0xff]
        %v478 = vld [vmem:[%s2 + $0x178] sm:$0xff]
        %v479 = vld [vmem:[%s2 + $0x180] sm:$0xff]
        %v480 = vld [vmem:[%s2 + $0x188] sm:$0xff]
        %v481 = vld [vmem:[%s2 + $0x190] sm:$0xff]
        %v482 = vld [vmem:[%s2 + $0x198] sm:$0xff]
        %v483 = vld [vmem:[%s2 + $0x1a0] sm:$0xff]
        %v484 = vld [vmem:[%s2 + $0x1a8] sm:$0xff]
        %v485 = vld [vmem:[%s2 + $0x1b0] sm:$0xff]
        %v486 = vld [vmem:[%s2 + $0x1b8] sm:$0xff]
        %v487 = vld [vmem:[%s2 + $0x1c0] sm:$0xff]
        %v488 = vld [vmem:[%s2 + $0x1c8] sm:$0xff]
        %v489 = vld [vmem:[%s2 + $0x1d0] sm:$0xff]
        %v490 = vld [vmem:[%s2 + $0x1d8] sm:$0xff]
        %v491 = vld [vmem:[%s2 + $0x1e0] sm:$0xff]
        %v492 = vld [vmem:[%s2 + $0x1e8] sm:$0xff]
        %v493 = vld [vmem:[%s2 + $0x1f0] sm:$0xff]
        %v494 = vld [vmem:[%s2 + $0x1f8] sm:$0xff]
        %v495 = vld [vmem:[%s4] sm:$0xf]
        %v497 = vlaneseq
        %v498 = vshrl.u32 %v497, 7
        %v499 = vsub.s32 0, %v498
        %v500 = vrot.slane %v495, %v499
        %v501 = vlaneseq
        %v502 = vshrl.u32 %v501, 7
        %v503 = vsub.s32 1, %v502
        %v504 = vrot.slane %v495, %v503
        %v505 = vlaneseq
        %v506 = vshrl.u32 %v505, 7
        %v507 = vsub.s32 2, %v506
        %v508 = vrot.slane %v495, %v507
        %v509 = vlaneseq
        %v510 = vshrl.u32 %v509, 7
        %v511 = vsub.s32 3, %v510
        %v512 = vrot.slane %v495, %v511
        %517 = vmatprep.subr.mxu0 %v492
        %518 = vmatpush1.msra.mxu0 %v491
        %519 = vmatprep.subr.mxu0 %v488
        %520 = vmatpush1.msra.mxu0 %v487
        %521 = vmatprep.subr.mxu0 %v484
        %522 = vmatpush1.msra.mxu0 %v483
        %523 = vmatprep.subr.mxu0 %v480
        %524 = vmatpush1.msra.mxu0 %v479
        %525 = vmatprep.subr.mxu0 %v476
        %526 = vmatpush1.msra.mxu0 %v475
        %527 = vmatprep.subr.mxu0 %v472
        %528 = vmatpush1.msra.mxu0 %v471
        %529 = vmatprep.subr.mxu0 %v468
        %530 = vmatpush1.msra.mxu0 %v467
        %531 = vmatprep.subr.mxu0 %v464
        %532 = vmatpush1.msra.mxu0 %v463
        %533 = vmatprep.subr.mxu0 %v460
        %534 = vmatpush1.msra.mxu0 %v459
        %535 = vmatprep.subr.mxu0 %v456
        %536 = vmatpush1.msra.mxu0 %v455
        %537 = vmatprep.subr.mxu0 %v452
        %538 = vmatpush1.msra.mxu0 %v451
        %539 = vmatprep.subr.mxu0 %v448
        %540 = vmatpush1.msra.mxu0 %v447
        %541 = vmatprep.subr.mxu0 %v444
        %542 = vmatpush1.msra.mxu0 %v443
        %543 = vmatprep.subr.mxu0 %v440
        %544 = vmatpush1.msra.mxu0 %v439
        %545 = vmatprep.subr.mxu0 %v436
        %546 = vmatpush1.msra.mxu0 %v435
        %547 = vmatprep.subr.mxu0 %v432
        %548 = vmatpush1.msra.mxu0 %v431
        %549 = vmatprep.subr.mxu0 0.0
        %550 = vmatpush2.msra.mxu0 0.0
        %551 = vmatprep.subr.mxu0 0.0
        %552 = vmatpush2.msra.mxu0 0.0
        %553 = vmatprep.subr.mxu0 0.0
        %554 = vmatpush2.msra.mxu0 0.0
        %555 = vmatprep.subr.mxu0 0.0
        %556 = vmatpush2.msra.mxu0 0.0
        %557 = vmatprep.subr.mxu0 0.0
        %558 = vmatpush2.msra.mxu0 0.0
        %559 = vmatprep.subr.mxu0 0.0
        %560 = vmatpush2.msra.mxu0 0.0
        %561 = vmatprep.subr.mxu0 0.0
        %562 = vmatpush2.msra.mxu0 0.0
        %563 = vmatprep.subr.mxu0 0.0
        %564 = vmatpush2.msra.mxu0 0.0
        %565 = vmatprep.subr.mxu0 0.0
        %566 = vmatpush2.msra.mxu0 0.0
        %567 = vmatprep.subr.mxu0 0.0
        %568 = vmatpush2.msra.mxu0 0.0
        %569 = vmatprep.subr.mxu0 0.0
        %570 = vmatpush2.msra.mxu0 0.0
        %571 = vmatprep.subr.mxu0 0.0
        %572 = vmatpush2.msra.mxu0 0.0
        %573 = vmatprep.subr.mxu0 0.0
        %574 = vmatpush2.msra.mxu0 0.0
        %575 = vmatprep.subr.mxu0 0.0
        %576 = vmatpush2.msra.mxu0 0.0
        %577 = vmatprep.subr.mxu0 0.0
        %578 = vmatpush2.msra.mxu0 0.0
        %579 = vmatprep.subr.mxu0 0.0
        %580 = vmatpush2.msra.mxu0 0.0
        %581 = vmatprep.mubr.f32.mxu0 0.0
        %582 = vmatmul.mubr.f32.gmra.mxu0 %v423
        %v583 = vpop.f32.mrf.mxu0
        %v584 = vadd.f32 %v500, %v583
        %v585 = vpop.f32.mrf.mxu0
        %v586 = vadd.f32 %v504, %v585
        %587 = vmatprep.mubr.f32.mxu0 0.0
        %588 = vmatmul.mubr.f32.gmra.mxu0 %v424
        %v589 = vpop.f32.mrf.mxu0
        %v590 = vadd.f32 %v500, %v589
        %v591 = vpop.f32.mrf.mxu0
        %v592 = vadd.f32 %v504, %v591
        %593 = vmatprep.mubr.f32.mxu0 0.0
        %594 = vmatmul.mubr.f32.gmra.mxu0 %v425
        %v595 = vpop.f32.mrf.mxu0
        %v596 = vadd.f32 %v500, %v595
        %v597 = vpop.f32.mrf.mxu0
        %v598 = vadd.f32 %v504, %v597
        %599 = vmatprep.mubr.f32.mxu0 0.0
        %600 = vmatmul.mubr.f32.gmra.mxu0 %v426
        %v601 = vpop.f32.mrf.mxu0
        %v602 = vadd.f32 %v500, %v601
        %v603 = vpop.f32.mrf.mxu0
        %v604 = vadd.f32 %v504, %v603
        %605 = vmatprep.mubr.f32.mxu0 0.0
        %606 = vmatmul.mubr.f32.gmra.mxu0 %v427
        %v607 = vpop.f32.mrf.mxu0
        %v608 = vadd.f32 %v500, %v607
        %v609 = vpop.f32.mrf.mxu0
        %v610 = vadd.f32 %v504, %v609
        %611 = vmatprep.mubr.f32.mxu0 0.0
        %612 = vmatmul.mubr.f32.gmra.mxu0 %v428
        %v613 = vpop.f32.mrf.mxu0
        %v614 = vadd.f32 %v500, %v613
        %v615 = vpop.f32.mrf.mxu0
        %v616 = vadd.f32 %v504, %v615
        %617 = vmatprep.mubr.f32.mxu0 0.0
        %618 = vmatmul.mubr.f32.gmra.mxu0 %v429
        %v619 = vpop.f32.mrf.mxu0
        %v620 = vadd.f32 %v500, %v619
        %v621 = vpop.f32.mrf.mxu0
        %v622 = vadd.f32 %v504, %v621
        %623 = vmatprep.mubr.f32.mxu0 0.0
        %624 = vmatmul.mubr.f32.gmra.mxu0 %v430
        %v625 = vpop.f32.mrf.mxu0
        %v626 = vadd.f32 %v500, %v625
        %v627 = vpop.f32.mrf.mxu0
        %v628 = vadd.f32 %v504, %v627
        %629 = vdwg.mxu0
        %630 = vmatprep.subr.mxu0 %v494
        %631 = vmatpush1.msra.mxu0 %v493
        %632 = vmatprep.subr.mxu0 %v490
        %633 = vmatpush1.msra.mxu0 %v489
        %634 = vmatprep.subr.mxu0 %v486
        %635 = vmatpush1.msra.mxu0 %v485
        %636 = vmatprep.subr.mxu0 %v482
        %637 = vmatpush1.msra.mxu0 %v481
        %638 = vmatprep.subr.mxu0 %v478
        %639 = vmatpush1.msra.mxu0 %v477
        %640 = vmatprep.subr.mxu0 %v474
        %641 = vmatpush1.msra.mxu0 %v473
        %642 = vmatprep.subr.mxu0 %v470
        %643 = vmatpush1.msra.mxu0 %v469
        %644 = vmatprep.subr.mxu0 %v466
        %645 = vmatpush1.msra.mxu0 %v465
        %646 = vmatprep.subr.mxu0 %v462
        %647 = vmatpush1.msra.mxu0 %v461
        %648 = vmatprep.subr.mxu0 %v458
        %649 = vmatpush1.msra.mxu0 %v457
        %650 = vmatprep.subr.mxu0 %v454
        %651 = vmatpush1.msra.mxu0 %v453
        %652 = vmatprep.subr.mxu0 %v450
        %653 = vmatpush1.msra.mxu0 %v449
        %654 = vmatprep.subr.mxu0 %v446
        %655 = vmatpush1.msra.mxu0 %v445
        %656 = vmatprep.subr.mxu0 %v442
        %657 = vmatpush1.msra.mxu0 %v441
        %658 = vmatprep.subr.mxu0 %v438
        %659 = vmatpush1.msra.mxu0 %v437
        %660 = vmatprep.subr.mxu0 %v434
        %661 = vmatpush1.msra.mxu0 %v433
        %662 = vmatprep.subr.mxu0 0.0
        %663 = vmatpush2.msra.mxu0 0.0
        %664 = vmatprep.subr.mxu0 0.0
        %665 = vmatpush2.msra.mxu0 0.0
        %666 = vmatprep.subr.mxu0 0.0
        %667 = vmatpush2.msra.mxu0 0.0
        %668 = vmatprep.subr.mxu0 0.0
        %669 = vmatpush2.msra.mxu0 0.0
        %670 = vmatprep.subr.mxu0 0.0
        %671 = vmatpush2.msra.mxu0 0.0
        %672 = vmatprep.subr.mxu0 0.0
        %673 = vmatpush2.msra.mxu0 0.0
        %674 = vmatprep.subr.mxu0 0.0
        %675 = vmatpush2.msra.mxu0 0.0
        %676 = vmatprep.subr.mxu0 0.0
        %677 = vmatpush2.msra.mxu0 0.0
        %678 = vmatprep.subr.mxu0 0.0
        %679 = vmatpush2.msra.mxu0 0.0
        %680 = vmatprep.subr.mxu0 0.0
        %681 = vmatpush2.msra.mxu0 0.0
        %682 = vmatprep.subr.mxu0 0.0
        %683 = vmatpush2.msra.mxu0 0.0
        %684 = vmatprep.subr.mxu0 0.0
        %685 = vmatpush2.msra.mxu0 0.0
        %686 = vmatprep.subr.mxu0 0.0
        %687 = vmatpush2.msra.mxu0 0.0
        %688 = vmatprep.subr.mxu0 0.0
        %689 = vmatpush2.msra.mxu0 0.0
        %690 = vmatprep.subr.mxu0 0.0
        %691 = vmatpush2.msra.mxu0 0.0
        %692 = vmatprep.subr.mxu0 0.0
        %693 = vmatpush2.msra.mxu0 0.0
        %694 = vmatprep.mubr.f32.mxu0 0.0
        %695 = vmatmul.mubr.f32.gmra.mxu0 %v423
        %v696 = vpop.f32.mrf.mxu0
        %v697 = vadd.f32 %v508, %v696
        %v698 = vpop.f32.mrf.mxu0
        %v699 = vadd.f32 %v512, %v698
        %700 = vmatprep.mubr.f32.mxu0 0.0
        %701 = vmatmul.mubr.f32.gmra.mxu0 %v424
        %v702 = vpop.f32.mrf.mxu0
        %v703 = vadd.f32 %v508, %v702
        %v704 = vpop.f32.mrf.mxu0
        %v705 = vadd.f32 %v512, %v704
        %706 = vmatprep.mubr.f32.mxu0 0.0
        %707 = vmatmul.mubr.f32.gmra.mxu0 %v425
        %v708 = vpop.f32.mrf.mxu0
        %v709 = vadd.f32 %v508, %v708
        %v710 = vpop.f32.mrf.mxu0
        %v711 = vadd.f32 %v512, %v710
        %712 = vmatprep.mubr.f32.mxu0 0.0
        %713 = vmatmul.mubr.f32.gmra.mxu0 %v426
        %v714 = vpop.f32.mrf.mxu0
        %v715 = vadd.f32 %v508, %v714
        %v716 = vpop.f32.mrf.mxu0
        %v717 = vadd.f32 %v512, %v716
        %718 = vmatprep.mubr.f32.mxu0 0.0
        %719 = vmatmul.mubr.f32.gmra.mxu0 %v427
        %v720 = vpop.f32.mrf.mxu0
        %v721 = vadd.f32 %v508, %v720
        %v722 = vpop.f32.mrf.mxu0
        %v723 = vadd.f32 %v512, %v722
        %724 = vmatprep.mubr.f32.mxu0 0.0
        %725 = vmatmul.mubr.f32.gmra.mxu0 %v428
        %v726 = vpop.f32.mrf.mxu0
        %v727 = vadd.f32 %v508, %v726
        %v728 = vpop.f32.mrf.mxu0
        %v729 = vadd.f32 %v512, %v728
        %730 = vmatprep.mubr.f32.mxu0 0.0
        %731 = vmatmul.mubr.f32.gmra.mxu0 %v429
        %v732 = vpop.f32.mrf.mxu0
        %v733 = vadd.f32 %v508, %v732
        %v734 = vpop.f32.mrf.mxu0
        %v735 = vadd.f32 %v512, %v734
        %736 = vmatprep.mubr.f32.mxu0 0.0
        %737 = vmatmul.mubr.f32.gmra.mxu0 %v430
        %v738 = vpop.f32.mrf.mxu0
        %v739 = vadd.f32 %v508, %v738
        %v740 = vpop.f32.mrf.mxu0
        %v741 = vadd.f32 %v512, %v740
        %742 = vdwg.mxu0
        %743 = vst [vmem:[#allocation3] sm:$0xff] %v584
        %744 = vst [vmem:[#allocation3 + $0x8] sm:$0xff] %v586
        %745 = vst [vmem:[#allocation3 + $0x10] sm:$0xff] %v697
        %746 = vst [vmem:[#allocation3 + $0x18] sm:$0xff] %v699
        %747 = vst [vmem:[#allocation3 + $0x20] sm:$0xff] %v590
        %748 = vst [vmem:[#allocation3 + $0x28] sm:$0xff] %v592
        %749 = vst [vmem:[#allocation3 + $0x30] sm:$0xff] %v703
        %750 = vst [vmem:[#allocation3 + $0x38] sm:$0xff] %v705
        %751 = vst [vmem:[#allocation3 + $0x40] sm:$0xff] %v596
        %752 = vst [vmem:[#allocation3 + $0x48] sm:$0xff] %v598
        %753 = vst [vmem:[#allocation3 + $0x50] sm:$0xff] %v709
        %754 = vst [vmem:[#allocation3 + $0x58] sm:$0xff] %v711
        %755 = vst [vmem:[#allocation3 + $0x60] sm:$0xff] %v602
        %756 = vst [vmem:[#allocation3 + $0x68] sm:$0xff] %v604
        %757 = vst [vmem:[#allocation3 + $0x70] sm:$0xff] %v715
        %758 = vst [vmem:[#allocation3 + $0x78] sm:$0xff] %v717
        %759 = vst [vmem:[#allocation3 + $0x80] sm:$0xff] %v608
        %760 = vst [vmem:[#allocation3 + $0x88] sm:$0xff] %v610
        %761 = vst [vmem:[#allocation3 + $0x90] sm:$0xff] %v721
        %762 = vst [vmem:[#allocation3 + $0x98] sm:$0xff] %v723
        %763 = vst [vmem:[#allocation3 + $0xa0] sm:$0xff] %v614
        %764 = vst [vmem:[#allocation3 + $0xa8] sm:$0xff] %v616
        %765 = vst [vmem:[#allocation3 + $0xb0] sm:$0xff] %v727
        %766 = vst [vmem:[#allocation3 + $0xb8] sm:$0xff] %v729
        %767 = vst [vmem:[#allocation3 + $0xc0] sm:$0xff] %v620
        %768 = vst [vmem:[#allocation3 + $0xc8] sm:$0xff] %v622
        %769 = vst [vmem:[#allocation3 + $0xd0] sm:$0xff] %v733
        %770 = vst [vmem:[#allocation3 + $0xd8] sm:$0xff] %v735
        %771 = vst [vmem:[#allocation3 + $0xe0] sm:$0xff] %v626
        %772 = vst [vmem:[#allocation3 + $0xe8] sm:$0xff] %v628
        %773 = vst [vmem:[#allocation3 + $0xf0] sm:$0xff] %v739
        %774 = vst [vmem:[#allocation3 + $0xf8] sm:$0xff] %v741
        %v775 = vld [vmem:[%s3] sm:$0xff]
        %v776 = vld [vmem:[%s3 + $0x8] sm:$0xff]
        %v777 = vld [vmem:[%s3 + $0x10] sm:$0xff]
        %v778 = vld [vmem:[%s3 + $0x18] sm:$0xff]
        %v779 = vld [vmem:[%s3 + $0x20] sm:$0xff]
        %v780 = vld [vmem:[%s3 + $0x28] sm:$0xff]
        %v781 = vld [vmem:[%s3 + $0x30] sm:$0xff]
        %v782 = vld [vmem:[%s3 + $0x38] sm:$0xff]
        %v783 = vld [vmem:[%s3 + $0x40] sm:$0xff]
        %v784 = vld [vmem:[%s3 + $0x48] sm:$0xff]
        %v785 = vld [vmem:[%s3 + $0x50] sm:$0xff]
        %v786 = vld [vmem:[%s3 + $0x58] sm:$0xff]
        %v787 = vld [vmem:[%s3 + $0x60] sm:$0xff]
        %v788 = vld [vmem:[%s3 + $0x68] sm:$0xff]
        %v789 = vld [vmem:[%s3 + $0x70] sm:$0xff]
        %v790 = vld [vmem:[%s3 + $0x78] sm:$0xff]
        %v791 = vld [vmem:[%s3 + $0x80] sm:$0xff]
        %v792 = vld [vmem:[%s3 + $0x88] sm:$0xff]
        %v793 = vld [vmem:[%s3 + $0x90] sm:$0xff]
        %v794 = vld [vmem:[%s3 + $0x98] sm:$0xff]
        %v795 = vld [vmem:[%s3 + $0xa0] sm:$0xff]
        %v796 = vld [vmem:[%s3 + $0xa8] sm:$0xff]
        %v797 = vld [vmem:[%s3 + $0xb0] sm:$0xff]
        %v798 = vld [vmem:[%s3 + $0xb8] sm:$0xff]
        %v799 = vld [vmem:[%s3 + $0xc0] sm:$0xff]
        %v800 = vld [vmem:[%s3 + $0xc8] sm:$0xff]
        %v801 = vld [vmem:[%s3 + $0xd0] sm:$0xff]
        %v802 = vld [vmem:[%s3 + $0xd8] sm:$0xff]
        %v803 = vld [vmem:[%s3 + $0xe0] sm:$0xff]
        %v804 = vld [vmem:[%s3 + $0xe8] sm:$0xff]
        %v805 = vld [vmem:[%s3 + $0xf0] sm:$0xff]
        %v806 = vld [vmem:[%s3 + $0xf8] sm:$0xff]
        %v807 = vld [vmem:[%s3 + $0x100] sm:$0xff]
        %v808 = vld [vmem:[%s3 + $0x108] sm:$0xff]
        %v809 = vld [vmem:[%s3 + $0x110] sm:$0xff]
        %v810 = vld [vmem:[%s3 + $0x118] sm:$0xff]
        %v811 = vld [vmem:[%s3 + $0x120] sm:$0xff]
        %v812 = vld [vmem:[%s3 + $0x128] sm:$0xff]
        %v813 = vld [vmem:[%s3 + $0x130] sm:$0xff]
        %v814 = vld [vmem:[%s3 + $0x138] sm:$0xff]
        %v815 = vld [vmem:[%s3 + $0x140] sm:$0xff]
        %v816 = vld [vmem:[%s3 + $0x148] sm:$0xff]
        %v817 = vld [vmem:[%s3 + $0x150] sm:$0xff]
        %v818 = vld [vmem:[%s3 + $0x158] sm:$0xff]
        %v819 = vld [vmem:[%s3 + $0x160] sm:$0xff]
        %v820 = vld [vmem:[%s3 + $0x168] sm:$0xff]
        %v821 = vld [vmem:[%s3 + $0x170] sm:$0xff]
        %v822 = vld [vmem:[%s3 + $0x178] sm:$0xff]
        %v823 = vld [vmem:[%s3 + $0x180] sm:$0xff]
        %v824 = vld [vmem:[%s3 + $0x188] sm:$0xff]
        %v825 = vld [vmem:[%s3 + $0x190] sm:$0xff]
        %v826 = vld [vmem:[%s3 + $0x198] sm:$0xff]
        %v827 = vld [vmem:[%s3 + $0x1a0] sm:$0xff]
        %v828 = vld [vmem:[%s3 + $0x1a8] sm:$0xff]
        %v829 = vld [vmem:[%s3 + $0x1b0] sm:$0xff]
        %v830 = vld [vmem:[%s3 + $0x1b8] sm:$0xff]
        %v831 = vld [vmem:[%s3 + $0x1c0] sm:$0xff]
        %v832 = vld [vmem:[%s3 + $0x1c8] sm:$0xff]
        %v833 = vld [vmem:[%s3 + $0x1d0] sm:$0xff]
        %v834 = vld [vmem:[%s3 + $0x1d8] sm:$0xff]
        %v835 = vld [vmem:[%s3 + $0x1e0] sm:$0xff]
        %v836 = vld [vmem:[%s3 + $0x1e8] sm:$0xff]
        %v837 = vld [vmem:[%s3 + $0x1f0] sm:$0xff]
        %v838 = vld [vmem:[%s3 + $0x1f8] sm:$0xff]
        %v839 = vld [vmem:[#allocation3] sm:$0xff]
        %v840 = vld [vmem:[#allocation3 + $0x8] sm:$0xff]
        %v841 = vld [vmem:[#allocation3 + $0x10] sm:$0xff]
        %v842 = vld [vmem:[#allocation3 + $0x18] sm:$0xff]
        %843 = vmatprep.subr.mxu0 %v836
        %844 = vmatpush1.msra.mxu0 %v835
        %845 = vmatprep.subr.mxu0 %v832
        %846 = vmatpush1.msra.mxu0 %v831
        %847 = vmatprep.subr.mxu0 %v828
        %848 = vmatpush1.msra.mxu0 %v827
        %849 = vmatprep.subr.mxu0 %v824
        %850 = vmatpush1.msra.mxu0 %v823
        %851 = vmatprep.subr.mxu0 %v820
        %852 = vmatpush1.msra.mxu0 %v819
        %853 = vmatprep.subr.mxu0 %v816
        %854 = vmatpush1.msra.mxu0 %v815
        %855 = vmatprep.subr.mxu0 %v812
        %856 = vmatpush1.msra.mxu0 %v811
        %857 = vmatprep.subr.mxu0 %v808
        %858 = vmatpush1.msra.mxu0 %v807
        %859 = vmatprep.subr.mxu0 %v804
        %860 = vmatpush1.msra.mxu0 %v803
        %861 = vmatprep.subr.mxu0 %v800
        %862 = vmatpush1.msra.mxu0 %v799
        %863 = vmatprep.subr.mxu0 %v796
        %864 = vmatpush1.msra.mxu0 %v795
        %865 = vmatprep.subr.mxu0 %v792
        %866 = vmatpush1.msra.mxu0 %v791
        %867 = vmatprep.subr.mxu0 %v788
        %868 = vmatpush1.msra.mxu0 %v787
        %869 = vmatprep.subr.mxu0 %v784
        %870 = vmatpush1.msra.mxu0 %v783
        %871 = vmatprep.subr.mxu0 %v780
        %872 = vmatpush1.msra.mxu0 %v779
        %873 = vmatprep.subr.mxu0 %v776
        %874 = vmatpush1.msra.mxu0 %v775
        %875 = vmatprep.subr.mxu0 0.0
        %876 = vmatpush2.msra.mxu0 0.0
        %877 = vmatprep.subr.mxu0 0.0
        %878 = vmatpush2.msra.mxu0 0.0
        %879 = vmatprep.subr.mxu0 0.0
        %880 = vmatpush2.msra.mxu0 0.0
        %881 = vmatprep.subr.mxu0 0.0
        %882 = vmatpush2.msra.mxu0 0.0
        %883 = vmatprep.subr.mxu0 0.0
        %884 = vmatpush2.msra.mxu0 0.0
        %885 = vmatprep.subr.mxu0 0.0
        %886 = vmatpush2.msra.mxu0 0.0
        %887 = vmatprep.subr.mxu0 0.0
        %888 = vmatpush2.msra.mxu0 0.0
        %889 = vmatprep.subr.mxu0 0.0
        %890 = vmatpush2.msra.mxu0 0.0
        %891 = vmatprep.subr.mxu0 0.0
        %892 = vmatpush2.msra.mxu0 0.0
        %893 = vmatprep.subr.mxu0 0.0
        %894 = vmatpush2.msra.mxu0 0.0
        %895 = vmatprep.subr.mxu0 0.0
        %896 = vmatpush2.msra.mxu0 0.0
        %897 = vmatprep.subr.mxu0 0.0
        %898 = vmatpush2.msra.mxu0 0.0
        %899 = vmatprep.subr.mxu0 0.0
        %900 = vmatpush2.msra.mxu0 0.0
        %901 = vmatprep.subr.mxu0 0.0
        %902 = vmatpush2.msra.mxu0 0.0
        %903 = vmatprep.subr.mxu0 0.0
        %904 = vmatpush2.msra.mxu0 0.0
        %905 = vmatprep.subr.mxu0 0.0
        %906 = vmatpush2.msra.mxu0 0.0
        %907 = vmatprep.mubr.f32.mxu0 0.0
        %908 = vmatmul.mubr.f32.gmra.mxu0 0.0
        %v909 = vpop.f32.mrf.mxu0
        %v910 = vadd.f32 0.0, %v909
        %v911 = vpop.f32.mrf.mxu0
        %v912 = vadd.f32 0.0, %v911
        %913 = vdwg.mxu0
        %914 = vmatprep.subr.mxu0 %v838
        %915 = vmatpush1.msra.mxu0 %v837
        %916 = vmatprep.subr.mxu0 %v834
        %917 = vmatpush1.msra.mxu0 %v833
        %918 = vmatprep.subr.mxu0 %v830
        %919 = vmatpush1.msra.mxu0 %v829
        %920 = vmatprep.subr.mxu0 %v826
        %921 = vmatpush1.msra.mxu0 %v825
        %922 = vmatprep.subr.mxu0 %v822
        %923 = vmatpush1.msra.mxu0 %v821
        %924 = vmatprep.subr.mxu0 %v818
        %925 = vmatpush1.msra.mxu0 %v817
        %926 = vmatprep.subr.mxu0 %v814
        %927 = vmatpush1.msra.mxu0 %v813
        %928 = vmatprep.subr.mxu0 %v810
        %929 = vmatpush1.msra.mxu0 %v809
        %930 = vmatprep.subr.mxu0 %v806
        %931 = vmatpush1.msra.mxu0 %v805
        %932 = vmatprep.subr.mxu0 %v802
        %933 = vmatpush1.msra.mxu0 %v801
        %934 = vmatprep.subr.mxu0 %v798
        %935 = vmatpush1.msra.mxu0 %v797
        %936 = vmatprep.subr.mxu0 %v794
        %937 = vmatpush1.msra.mxu0 %v793
        %938 = vmatprep.subr.mxu0 %v790
        %939 = vmatpush1.msra.mxu0 %v789
        %940 = vmatprep.subr.mxu0 %v786
        %941 = vmatpush1.msra.mxu0 %v785
        %942 = vmatprep.subr.mxu0 %v782
        %943 = vmatpush1.msra.mxu0 %v781
        %944 = vmatprep.subr.mxu0 %v778
        %945 = vmatpush1.msra.mxu0 %v777
        %946 = vmatprep.subr.mxu0 0.0
        %947 = vmatpush2.msra.mxu0 0.0
        %948 = vmatprep.subr.mxu0 0.0
        %949 = vmatpush2.msra.mxu0 0.0
        %950 = vmatprep.subr.mxu0 0.0
        %951 = vmatpush2.msra.mxu0 0.0
        %952 = vmatprep.subr.mxu0 0.0
        %953 = vmatpush2.msra.mxu0 0.0
        %954 = vmatprep.subr.mxu0 0.0
        %955 = vmatpush2.msra.mxu0 0.0
        %956 = vmatprep.subr.mxu0 0.0
        %957 = vmatpush2.msra.mxu0 0.0
        %958 = vmatprep.subr.mxu0 0.0
        %959 = vmatpush2.msra.mxu0 0.0
        %960 = vmatprep.subr.mxu0 0.0
        %961 = vmatpush2.msra.mxu0 0.0
        %962 = vmatprep.subr.mxu0 0.0
        %963 = vmatpush2.msra.mxu0 0.0
        %964 = vmatprep.subr.mxu0 0.0
        %965 = vmatpush2.msra.mxu0 0.0
        %966 = vmatprep.subr.mxu0 0.0
        %967 = vmatpush2.msra.mxu0 0.0
        %968 = vmatprep.subr.mxu0 0.0
        %969 = vmatpush2.msra.mxu0 0.0
        %970 = vmatprep.subr.mxu0 0.0
        %971 = vmatpush2.msra.mxu0 0.0
        %972 = vmatprep.subr.mxu0 0.0
        %973 = vmatpush2.msra.mxu0 0.0
        %974 = vmatprep.subr.mxu0 0.0
        %975 = vmatpush2.msra.mxu0 0.0
        %976 = vmatprep.subr.mxu0 0.0
        %977 = vmatpush2.msra.mxu0 0.0
        %978 = vmatprep.mubr.f32.mxu0 0.0
        %979 = vmatmul.mubr.f32.gmra.mxu0 0.0
        %v980 = vpop.f32.mrf.mxu0
        %v981 = vadd.f32 0.0, %v980
        %v982 = vpop.f32.mrf.mxu0
        %v983 = vadd.f32 0.0, %v982
        %984 = vdwg.mxu0
        %v985 = vadd.f32 %v839, %v910
        %v986 = vadd.f32 %v840, %v912
        %v987 = vadd.f32 %v841, %v981
        %v988 = vadd.f32 %v842, %v983
        %v989 = vxor.u32 %v985, 2147483648
        %v990 = vmul.f32 %v989, 1.442695
        %v991 = vpow.pop %v990
        %v992 = vadd.f32 %v991, 1.0
        %v993 = vrcp.pop %v992
        %v994 = vmul.f32 1.0, %v993
        %v995 = vxor.u32 %v986, 2147483648
        %v996 = vmul.f32 %v995, 1.442695
        %v997 = vpow.pop %v996
        %v998 = vadd.f32 %v997, 1.0
        %v999 = vrcp.pop %v998
        %v1000 = vmul.f32 1.0, %v999
        %v1001 = vtanh.pop %v987
        %v1002 = vxor.u32 %v988, 2147483648
        %v1003 = vmul.f32 %v1002, 1.442695
        %v1004 = vpow.pop %v1003
        %v1005 = vadd.f32 %v1004, 1.0
        %v1006 = vrcp.pop %v1005
        %v1007 = vmul.f32 1.0, %v1006
        %v1008 = vmul.f32 %v1000, 0.0
        %v1009 = vmul.f32 %v994, %v1001
        %v1010 = vadd.f32 %v1008, %v1009
        %v1011 = vtanh.pop %v1010
        %v1012 = vmul.f32 %v1007, %v1011
        %1013 = vst [vmem:[#allocation2] sm:$0xff] %v1012
        %s1014 = scalar_lea.vmem [#allocation3], 32
        %v1015 = vld [vmem:[%s1014] sm:$0xff]
        %v1016 = vld [vmem:[%s1014 + $0x8] sm:$0xff]
        %v1017 = vld [vmem:[%s1014 + $0x10] sm:$0xff]
        %v1018 = vld [vmem:[%s1014 + $0x18] sm:$0xff]
        %1019 = vmatprep.subr.mxu0 %v836
        %1020 = vmatpush1.msra.mxu0 %v835
        %1021 = vmatprep.subr.mxu0 %v832
        %1022 = vmatpush1.msra.mxu0 %v831
        %1023 = vmatprep.subr.mxu0 %v828
        %1024 = vmatpush1.msra.mxu0 %v827
        %1025 = vmatprep.subr.mxu0 %v824
        %1026 = vmatpush1.msra.mxu0 %v823
        %1027 = vmatprep.subr.mxu0 %v820
        %1028 = vmatpush1.msra.mxu0 %v819
        %1029 = vmatprep.subr.mxu0 %v816
        %1030 = vmatpush1.msra.mxu0 %v815
        %1031 = vmatprep.subr.mxu0 %v812
        %1032 = vmatpush1.msra.mxu0 %v811
        %1033 = vmatprep.subr.mxu0 %v808
        %1034 = vmatpush1.msra.mxu0 %v807
        %1035 = vmatprep.subr.mxu0 %v804
        %1036 = vmatpush1.msra.mxu0 %v803
        %1037 = vmatprep.subr.mxu0 %v800
        %1038 = vmatpush1.msra.mxu0 %v799
        %1039 = vmatprep.subr.mxu0 %v796
        %1040 = vmatpush1.msra.mxu0 %v795
        %1041 = vmatprep.subr.mxu0 %v792
        %1042 = vmatpush1.msra.mxu0 %v791
        %1043 = vmatprep.subr.mxu0 %v788
        %1044 = vmatpush1.msra.mxu0 %v787
        %1045 = vmatprep.subr.mxu0 %v784
        %1046 = vmatpush1.msra.mxu0 %v783
        %1047 = vmatprep.subr.mxu0 %v780
        %1048 = vmatpush1.msra.mxu0 %v779
        %1049 = vmatprep.subr.mxu0 %v776
        %1050 = vmatpush1.msra.mxu0 %v775
        %1051 = vmatprep.subr.mxu0 0.0
        %1052 = vmatpush2.msra.mxu0 0.0
        %1053 = vmatprep.subr.mxu0 0.0
        %1054 = vmatpush2.msra.mxu0 0.0
        %1055 = vmatprep.subr.mxu0 0.0
        %1056 = vmatpush2.msra.mxu0 0.0
        %1057 = vmatprep.subr.mxu0 0.0
        %1058 = vmatpush2.msra.mxu0 0.0
        %1059 = vmatprep.subr.mxu0 0.0
        %1060 = vmatpush2.msra.mxu0 0.0
        %1061 = vmatprep.subr.mxu0 0.0
        %1062 = vmatpush2.msra.mxu0 0.0
        %1063 = vmatprep.subr.mxu0 0.0
        %1064 = vmatpush2.msra.mxu0 0.0
        %1065 = vmatprep.subr.mxu0 0.0
        %1066 = vmatpush2.msra.mxu0 0.0
        %1067 = vmatprep.subr.mxu0 0.0
        %1068 = vmatpush2.msra.mxu0 0.0
        %1069 = vmatprep.subr.mxu0 0.0
        %1070 = vmatpush2.msra.mxu0 0.0
        %1071 = vmatprep.subr.mxu0 0.0
        %1072 = vmatpush2.msra.mxu0 0.0
        %1073 = vmatprep.subr.mxu0 0.0
        %1074 = vmatpush2.msra.mxu0 0.0
        %1075 = vmatprep.subr.mxu0 0.0
        %1076 = vmatpush2.msra.mxu0 0.0
        %1077 = vmatprep.subr.mxu0 0.0
        %1078 = vmatpush2.msra.mxu0 0.0
        %1079 = vmatprep.subr.mxu0 0.0
        %1080 = vmatpush2.msra.mxu0 0.0
        %1081 = vmatprep.subr.mxu0 0.0
        %1082 = vmatpush2.msra.mxu0 0.0
        %1083 = vmatprep.mubr.f32.mxu0 0.0
        %1084 = vmatmul.mubr.f32.gmra.mxu0 %v1012
        %v1085 = vpop.f32.mrf.mxu0
        %v1086 = vadd.f32 0.0, %v1085
        %v1087 = vpop.f32.mrf.mxu0
        %v1088 = vadd.f32 0.0, %v1087
        %1089 = vdwg.mxu0
        %1090 = vmatprep.subr.mxu0 %v838
        %1091 = vmatpush1.msra.mxu0 %v837
        %1092 = vmatprep.subr.mxu0 %v834
        %1093 = vmatpush1.msra.mxu0 %v833
        %1094 = vmatprep.subr.mxu0 %v830
        %1095 = vmatpush1.msra.mxu0 %v829
        %1096 = vmatprep.subr.mxu0 %v826
        %1097 = vmatpush1.msra.mxu0 %v825
        %1098 = vmatprep.subr.mxu0 %v822
        %1099 = vmatpush1.msra.mxu0 %v821
        %1100 = vmatprep.subr.mxu0 %v818
        %1101 = vmatpush1.msra.mxu0 %v817
        %1102 = vmatprep.subr.mxu0 %v814
        %1103 = vmatpush1.msra.mxu0 %v813
        %1104 = vmatprep.subr.mxu0 %v810
        %1105 = vmatpush1.msra.mxu0 %v809
        %1106 = vmatprep.subr.mxu0 %v806
        %1107 = vmatpush1.msra.mxu0 %v805
        %1108 = vmatprep.subr.mxu0 %v802
        %1109 = vmatpush1.msra.mxu0 %v801
        %1110 = vmatprep.subr.mxu0 %v798
        %1111 = vmatpush1.msra.mxu0 %v797
        %1112 = vmatprep.subr.mxu0 %v794
        %1113 = vmatpush1.msra.mxu0 %v793
        %1114 = vmatprep.subr.mxu0 %v790
        %1115 = vmatpush1.msra.mxu0 %v789
        %1116 = vmatprep.subr.mxu0 %v786
        %1117 = vmatpush1.msra.mxu0 %v785
        %1118 = vmatprep.subr.mxu0 %v782
        %1119 = vmatpush1.msra.mxu0 %v781
        %1120 = vmatprep.subr.mxu0 %v778
        %1121 = vmatpush1.msra.mxu0 %v777
        %1122 = vmatprep.subr.mxu0 0.0
        %1123 = vmatpush2.msra.mxu0 0.0
        %1124 = vmatprep.subr.mxu0 0.0
        %1125 = vmatpush2.msra.mxu0 0.0
        %1126 = vmatprep.subr.mxu0 0.0
        %1127 = vmatpush2.msra.mxu0 0.0
        %1128 = vmatprep.subr.mxu0 0.0
        %1129 = vmatpush2.msra.mxu0 0.0
        %1130 = vmatprep.subr.mxu0 0.0
        %1131 = vmatpush2.msra.mxu0 0.0
        %1132 = vmatprep.subr.mxu0 0.0
        %1133 = vmatpush2.msra.mxu0 0.0
        %1134 = vmatprep.subr.mxu0 0.0
        %1135 = vmatpush2.msra.mxu0 0.0
        %1136 = vmatprep.subr.mxu0 0.0
        %1137 = vmatpush2.msra.mxu0 0.0
        %1138 = vmatprep.subr.mxu0 0.0
        %1139 = vmatpush2.msra.mxu0 0.0
        %1140 = vmatprep.subr.mxu0 0.0
        %1141 = vmatpush2.msra.mxu0 0.0
        %1142 = vmatprep.subr.mxu0 0.0
        %1143 = vmatpush2.msra.mxu0 0.0
        %1144 = vmatprep.subr.mxu0 0.0
        %1145 = vmatpush2.msra.mxu0 0.0
        %1146 = vmatprep.subr.mxu0 0.0
        %1147 = vmatpush2.msra.mxu0 0.0
        %1148 = vmatprep.subr.mxu0 0.0
        %1149 = vmatpush2.msra.mxu0 0.0
        %1150 = vmatprep.subr.mxu0 0.0
        %1151 = vmatpush2.msra.mxu0 0.0
        %1152 = vmatprep.subr.mxu0 0.0
        %1153 = vmatpush2.msra.mxu0 0.0
        %1154 = vmatprep.mubr.f32.mxu0 0.0
        %1155 = vmatmul.mubr.f32.gmra.mxu0 %v1012
        %v1156 = vpop.f32.mrf.mxu0
        %v1157 = vadd.f32 0.0, %v1156
        %v1158 = vpop.f32.mrf.mxu0
        %v1159 = vadd.f32 0.0, %v1158
        %1160 = vdwg.mxu0
        %v1161 = vadd.f32 %v1015, %v1086
        %v1162 = vadd.f32 %v1016, %v1088
        %v1163 = vadd.f32 %v1017, %v1157
        %v1164 = vadd.f32 %v1018, %v1159
        %v1165 = vxor.u32 %v1161, 2147483648
        %v1166 = vmul.f32 %v1165, 1.442695
        %v1167 = vpow.pop %v1166
        %v1168 = vadd.f32 %v1167, 1.0
        %v1169 = vrcp.pop %v1168
        %v1170 = vmul.f32 1.0, %v1169
        %v1171 = vxor.u32 %v1162, 2147483648
        %v1172 = vmul.f32 %v1171, 1.442695
        %v1173 = vpow.pop %v1172
        %v1174 = vadd.f32 %v1173, 1.0
        %v1175 = vrcp.pop %v1174
        %v1176 = vmul.f32 1.0, %v1175
        %v1177 = vtanh.pop %v1163
        %v1178 = vxor.u32 %v1164, 2147483648
        %v1179 = vmul.f32 %v1178, 1.442695
        %v1180 = vpow.pop %v1179
        %v1181 = vadd.f32 %v1180, 1.0
        %v1182 = vrcp.pop %v1181
        %v1183 = vmul.f32 1.0, %v1182
        %v1184 = vmul.f32 %v1176, %v1010
        %v1185 = vmul.f32 %v1170, %v1177
        %v1186 = vadd.f32 %v1184, %v1185
        %v1187 = vtanh.pop %v1186
        %v1188 = vmul.f32 %v1183, %v1187
        %s1189 = scalar_lea.vmem [#allocation2], 8
        %1190 = vst [vmem:[%s1189] sm:$0xff] %v1188
        %s1191 = scalar_lea.vmem [#allocation3], 64
        %v1192 = vld [vmem:[%s1191] sm:$0xff]
        %v1193 = vld [vmem:[%s1191 + $0x8] sm:$0xff]
        %v1194 = vld [vmem:[%s1191 + $0x10] sm:$0xff]
        %v1195 = vld [vmem:[%s1191 + $0x18] sm:$0xff]
        %1196 = vmatprep.subr.mxu0 %v836
        %1197 = vmatpush1.msra.mxu0 %v835
        %1198 = vmatprep.subr.mxu0 %v832
        %1199 = vmatpush1.msra.mxu0 %v831
        %1200 = vmatprep.subr.mxu0 %v828
        %1201 = vmatpush1.msra.mxu0 %v827
        %1202 = vmatprep.subr.mxu0 %v824
        %1203 = vmatpush1.msra.mxu0 %v823
        %1204 = vmatprep.subr.mxu0 %v820
        %1205 = vmatpush1.msra.mxu0 %v819
        %1206 = vmatprep.subr.mxu0 %v816
        %1207 = vmatpush1.msra.mxu0 %v815
        %1208 = vmatprep.subr.mxu0 %v812
        %1209 = vmatpush1.msra.mxu0 %v811
        %1210 = vmatprep.subr.mxu0 %v808
        %1211 = vmatpush1.msra.mxu0 %v807
        %1212 = vmatprep.subr.mxu0 %v804
        %1213 = vmatpush1.msra.mxu0 %v803
        %1214 = vmatprep.subr.mxu0 %v800
        %1215 = vmatpush1.msra.mxu0 %v799
        %1216 = vmatprep.subr.mxu0 %v796
        %1217 = vmatpush1.msra.mxu0 %v795
        %1218 = vmatprep.subr.mxu0 %v792
        %1219 = vmatpush1.msra.mxu0 %v791
        %1220 = vmatprep.subr.mxu0 %v788
        %1221 = vmatpush1.msra.mxu0 %v787
        %1222 = vmatprep.subr.mxu0 %v784
        %1223 = vmatpush1.msra.mxu0 %v783
        %1224 = vmatprep.subr.mxu0 %v780
        %1225 = vmatpush1.msra.mxu0 %v779
        %1226 = vmatprep.subr.mxu0 %v776
        %1227 = vmatpush1.msra.mxu0 %v775
        %1228 = vmatprep.subr.mxu0 0.0
        %1229 = vmatpush2.msra.mxu0 0.0
        %1230 = vmatprep.subr.mxu0 0.0
        %1231 = vmatpush2.msra.mxu0 0.0
        %1232 = vmatprep.subr.mxu0 0.0
        %1233 = vmatpush2.msra.mxu0 0.0
        %1234 = vmatprep.subr.mxu0 0.0
        %1235 = vmatpush2.msra.mxu0 0.0
        %1236 = vmatprep.subr.mxu0 0.0
        %1237 = vmatpush2.msra.mxu0 0.0
        %1238 = vmatprep.subr.mxu0 0.0
        %1239 = vmatpush2.msra.mxu0 0.0
        %1240 = vmatprep.subr.mxu0 0.0
        %1241 = vmatpush2.msra.mxu0 0.0
        %1242 = vmatprep.subr.mxu0 0.0
        %1243 = vmatpush2.msra.mxu0 0.0
        %1244 = vmatprep.subr.mxu0 0.0
        %1245 = vmatpush2.msra.mxu0 0.0
        %1246 = vmatprep.subr.mxu0 0.0
        %1247 = vmatpush2.msra.mxu0 0.0
        %1248 = vmatprep.subr.mxu0 0.0
        %1249 = vmatpush2.msra.mxu0 0.0
        %1250 = vmatprep.subr.mxu0 0.0
        %1251 = vmatpush2.msra.mxu0 0.0
        %1252 = vmatprep.subr.mxu0 0.0
        %1253 = vmatpush2.msra.mxu0 0.0
        %1254 = vmatprep.subr.mxu0 0.0
        %1255 = vmatpush2.msra.mxu0 0.0
        %1256 = vmatprep.subr.mxu0 0.0
        %1257 = vmatpush2.msra.mxu0 0.0
        %1258 = vmatprep.subr.mxu0 0.0
        %1259 = vmatpush2.msra.mxu0 0.0
        %1260 = vmatprep.mubr.f32.mxu0 0.0
        %1261 = vmatmul.mubr.f32.gmra.mxu0 %v1188
        %v1262 = vpop.f32.mrf.mxu0
        %v1263 = vadd.f32 0.0, %v1262
        %v1264 = vpop.f32.mrf.mxu0
        %v1265 = vadd.f32 0.0, %v1264
        %1266 = vdwg.mxu0
        %1267 = vmatprep.subr.mxu0 %v838
        %1268 = vmatpush1.msra.mxu0 %v837
        %1269 = vmatprep.subr.mxu0 %v834
        %1270 = vmatpush1.msra.mxu0 %v833
        %1271 = vmatprep.subr.mxu0 %v830
        %1272 = vmatpush1.msra.mxu0 %v829
        %1273 = vmatprep.subr.mxu0 %v826
        %1274 = vmatpush1.msra.mxu0 %v825
        %1275 = vmatprep.subr.mxu0 %v822
        %1276 = vmatpush1.msra.mxu0 %v821
        %1277 = vmatprep.subr.mxu0 %v818
        %1278 = vmatpush1.msra.mxu0 %v817
        %1279 = vmatprep.subr.mxu0 %v814
        %1280 = vmatpush1.msra.mxu0 %v813
        %1281 = vmatprep.subr.mxu0 %v810
        %1282 = vmatpush1.msra.mxu0 %v809
        %1283 = vmatprep.subr.mxu0 %v806
        %1284 = vmatpush1.msra.mxu0 %v805
        %1285 = vmatprep.subr.mxu0 %v802
        %1286 = vmatpush1.msra.mxu0 %v801
        %1287 = vmatprep.subr.mxu0 %v798
        %1288 = vmatpush1.msra.mxu0 %v797
        %1289 = vmatprep.subr.mxu0 %v794
        %1290 = vmatpush1.msra.mxu0 %v793
        %1291 = vmatprep.subr.mxu0 %v790
        %1292 = vmatpush1.msra.mxu0 %v789
        %1293 = vmatprep.subr.mxu0 %v786
        %1294 = vmatpush1.msra.mxu0 %v785
        %1295 = vmatprep.subr.mxu0 %v782
        %1296 = vmatpush1.msra.mxu0 %v781
        %1297 = vmatprep.subr.mxu0 %v778
        %1298 = vmatpush1.msra.mxu0 %v777
        %1299 = vmatprep.subr.mxu0 0.0
        %1300 = vmatpush2.msra.mxu0 0.0
        %1301 = vmatprep.subr.mxu0 0.0
        %1302 = vmatpush2.msra.mxu0 0.0
        %1303 = vmatprep.subr.mxu0 0.0
        %1304 = vmatpush2.msra.mxu0 0.0
        %1305 = vmatprep.subr.mxu0 0.0
        %1306 = vmatpush2.msra.mxu0 0.0
        %1307 = vmatprep.subr.mxu0 0.0
        %1308 = vmatpush2.msra.mxu0 0.0
        %1309 = vmatprep.subr.mxu0 0.0
        %1310 = vmatpush2.msra.mxu0 0.0
        %1311 = vmatprep.subr.mxu0 0.0
        %1312 = vmatpush2.msra.mxu0 0.0
        %1313 = vmatprep.subr.mxu0 0.0
        %1314 = vmatpush2.msra.mxu0 0.0
        %1315 = vmatprep.subr.mxu0 0.0
        %1316 = vmatpush2.msra.mxu0 0.0
        %1317 = vmatprep.subr.mxu0 0.0
        %1318 = vmatpush2.msra.mxu0 0.0
        %1319 = vmatprep.subr.mxu0 0.0
        %1320 = vmatpush2.msra.mxu0 0.0
        %1321 = vmatprep.subr.mxu0 0.0
        %1322 = vmatpush2.msra.mxu0 0.0
        %1323 = vmatprep.subr.mxu0 0.0
        %1324 = vmatpush2.msra.mxu0 0.0
        %1325 = vmatprep.subr.mxu0 0.0
        %1326 = vmatpush2.msra.mxu0 0.0
        %1327 = vmatprep.subr.mxu0 0.0
        %1328 = vmatpush2.msra.mxu0 0.0
        %1329 = vmatprep.subr.mxu0 0.0
        %1330 = vmatpush2.msra.mxu0 0.0
        %1331 = vmatprep.mubr.f32.mxu0 0.0
        %1332 = vmatmul.mubr.f32.gmra.mxu0 %v1188
        %v1333 = vpop.f32.mrf.mxu0
        %v1334 = vadd.f32 0.0, %v1333
        %v1335 = vpop.f32.mrf.mxu0
        %v1336 = vadd.f32 0.0, %v1335
        %1337 = vdwg.mxu0
        %v1338 = vadd.f32 %v1192, %v1263
        %v1339 = vadd.f32 %v1193, %v1265
        %v1340 = vadd.f32 %v1194, %v1334
        %v1341 = vadd.f32 %v1195, %v1336
        %v1342 = vxor.u32 %v1338, 2147483648
        %v1343 = vmul.f32 %v1342, 1.442695
        %v1344 = vpow.pop %v1343
        %v1345 = vadd.f32 %v1344, 1.0
        %v1346 = vrcp.pop %v1345
        %v1347 = vmul.f32 1.0, %v1346
        %v1348 = vxor.u32 %v1339, 2147483648
        %v1349 = vmul.f32 %v1348, 1.442695
        %v1350 = vpow.pop %v1349
        %v1351 = vadd.f32 %v1350, 1.0
        %v1352 = vrcp.pop %v1351
        %v1353 = vmul.f32 1.0, %v1352
        %v1354 = vtanh.pop %v1340
        %v1355 = vxor.u32 %v1341, 2147483648
        %v1356 = vmul.f32 %v1355, 1.442695
        %v1357 = vpow.pop %v1356
        %v1358 = vadd.f32 %v1357, 1.0
        %v1359 = vrcp.pop %v1358
        %v1360 = vmul.f32 1.0, %v1359
        %v1361 = vmul.f32 %v1353, %v1186
        %v1362 = vmul.f32 %v1347, %v1354
        %v1363 = vadd.f32 %v1361, %v1362
        %v1364 = vtanh.pop %v1363
        %v1365 = vmul.f32 %v1360, %v1364
        %s1366 = scalar_lea.vmem [#allocation2], 16
        %1367 = vst [vmem:[%s1366] sm:$0xff] %v1365
        %s1368 = scalar_lea.vmem [#allocation3], 96
        %v1369 = vld [vmem:[%s1368] sm:$0xff]
        %v1370 = vld [vmem:[%s1368 + $0x8] sm:$0xff]
        %v1371 = vld [vmem:[%s1368 + $0x10] sm:$0xff]
        %v1372 = vld [vmem:[%s1368 + $0x18] sm:$0xff]
        %1373 = vmatprep.subr.mxu0 %v836
        %1374 = vmatpush1.msra.mxu0 %v835
        %1375 = vmatprep.subr.mxu0 %v832
        %1376 = vmatpush1.msra.mxu0 %v831
        %1377 = vmatprep.subr.mxu0 %v828
        %1378 = vmatpush1.msra.mxu0 %v827
        %1379 = vmatprep.subr.mxu0 %v824
        %1380 = vmatpush1.msra.mxu0 %v823
        %1381 = vmatprep.subr.mxu0 %v820
        %1382 = vmatpush1.msra.mxu0 %v819
        %1383 = vmatprep.subr.mxu0 %v816
        %1384 = vmatpush1.msra.mxu0 %v815
        %1385 = vmatprep.subr.mxu0 %v812
        %1386 = vmatpush1.msra.mxu0 %v811
        %1387 = vmatprep.subr.mxu0 %v808
        %1388 = vmatpush1.msra.mxu0 %v807
        %1389 = vmatprep.subr.mxu0 %v804
        %1390 = vmatpush1.msra.mxu0 %v803
        %1391 = vmatprep.subr.mxu0 %v800
        %1392 = vmatpush1.msra.mxu0 %v799
        %1393 = vmatprep.subr.mxu0 %v796
        %1394 = vmatpush1.msra.mxu0 %v795
        %1395 = vmatprep.subr.mxu0 %v792
        %1396 = vmatpush1.msra.mxu0 %v791
        %1397 = vmatprep.subr.mxu0 %v788
        %1398 = vmatpush1.msra.mxu0 %v787
        %1399 = vmatprep.subr.mxu0 %v784
        %1400 = vmatpush1.msra.mxu0 %v783
        %1401 = vmatprep.subr.mxu0 %v780
        %1402 = vmatpush1.msra.mxu0 %v779
        %1403 = vmatprep.subr.mxu0 %v776
        %1404 = vmatpush1.msra.mxu0 %v775
        %1405 = vmatprep.subr.mxu0 0.0
        %1406 = vmatpush2.msra.mxu0 0.0
        %1407 = vmatprep.subr.mxu0 0.0
        %1408 = vmatpush2.msra.mxu0 0.0
        %1409 = vmatprep.subr.mxu0 0.0
        %1410 = vmatpush2.msra.mxu0 0.0
        %1411 = vmatprep.subr.mxu0 0.0
        %1412 = vmatpush2.msra.mxu0 0.0
        %1413 = vmatprep.subr.mxu0 0.0
        %1414 = vmatpush2.msra.mxu0 0.0
        %1415 = vmatprep.subr.mxu0 0.0
        %1416 = vmatpush2.msra.mxu0 0.0
        %1417 = vmatprep.subr.mxu0 0.0
        %1418 = vmatpush2.msra.mxu0 0.0
        %1419 = vmatprep.subr.mxu0 0.0
        %1420 = vmatpush2.msra.mxu0 0.0
        %1421 = vmatprep.subr.mxu0 0.0
        %1422 = vmatpush2.msra.mxu0 0.0
        %1423 = vmatprep.subr.mxu0 0.0
        %1424 = vmatpush2.msra.mxu0 0.0
        %1425 = vmatprep.subr.mxu0 0.0
        %1426 = vmatpush2.msra.mxu0 0.0
        %1427 = vmatprep.subr.mxu0 0.0
        %1428 = vmatpush2.msra.mxu0 0.0
        %1429 = vmatprep.subr.mxu0 0.0
        %1430 = vmatpush2.msra.mxu0 0.0
        %1431 = vmatprep.subr.mxu0 0.0
        %1432 = vmatpush2.msra.mxu0 0.0
        %1433 = vmatprep.subr.mxu0 0.0
        %1434 = vmatpush2.msra.mxu0 0.0
        %1435 = vmatprep.subr.mxu0 0.0
        %1436 = vmatpush2.msra.mxu0 0.0
        %1437 = vmatprep.mubr.f32.mxu0 0.0
        %1438 = vmatmul.mubr.f32.gmra.mxu0 %v1365
        %v1439 = vpop.f32.mrf.mxu0
        %v1440 = vadd.f32 0.0, %v1439
        %v1441 = vpop.f32.mrf.mxu0
        %v1442 = vadd.f32 0.0, %v1441
        %1443 = vdwg.mxu0
        %1444 = vmatprep.subr.mxu0 %v838
        %1445 = vmatpush1.msra.mxu0 %v837
        %1446 = vmatprep.subr.mxu0 %v834
        %1447 = vmatpush1.msra.mxu0 %v833
        %1448 = vmatprep.subr.mxu0 %v830
        %1449 = vmatpush1.msra.mxu0 %v829
        %1450 = vmatprep.subr.mxu0 %v826
        %1451 = vmatpush1.msra.mxu0 %v825
        %1452 = vmatprep.subr.mxu0 %v822
        %1453 = vmatpush1.msra.mxu0 %v821
        %1454 = vmatprep.subr.mxu0 %v818
        %1455 = vmatpush1.msra.mxu0 %v817
        %1456 = vmatprep.subr.mxu0 %v814
        %1457 = vmatpush1.msra.mxu0 %v813
        %1458 = vmatprep.subr.mxu0 %v810
        %1459 = vmatpush1.msra.mxu0 %v809
        %1460 = vmatprep.subr.mxu0 %v806
        %1461 = vmatpush1.msra.mxu0 %v805
        %1462 = vmatprep.subr.mxu0 %v802
        %1463 = vmatpush1.msra.mxu0 %v801
        %1464 = vmatprep.subr.mxu0 %v798
        %1465 = vmatpush1.msra.mxu0 %v797
        %1466 = vmatprep.subr.mxu0 %v794
        %1467 = vmatpush1.msra.mxu0 %v793
        %1468 = vmatprep.subr.mxu0 %v790
        %1469 = vmatpush1.msra.mxu0 %v789
        %1470 = vmatprep.subr.mxu0 %v786
        %1471 = vmatpush1.msra.mxu0 %v785
        %1472 = vmatprep.subr.mxu0 %v782
        %1473 = vmatpush1.msra.mxu0 %v781
        %1474 = vmatprep.subr.mxu0 %v778
        %1475 = vmatpush1.msra.mxu0 %v777
        %1476 = vmatprep.subr.mxu0 0.0
        %1477 = vmatpush2.msra.mxu0 0.0
        %1478 = vmatprep.subr.mxu0 0.0
        %1479 = vmatpush2.msra.mxu0 0.0
        %1480 = vmatprep.subr.mxu0 0.0
        %1481 = vmatpush2.msra.mxu0 0.0
        %1482 = vmatprep.subr.mxu0 0.0
        %1483 = vmatpush2.msra.mxu0 0.0
        %1484 = vmatprep.subr.mxu0 0.0
        %1485 = vmatpush2.msra.mxu0 0.0
        %1486 = vmatprep.subr.mxu0 0.0
        %1487 = vmatpush2.msra.mxu0 0.0
        %1488 = vmatprep.subr.mxu0 0.0
        %1489 = vmatpush2.msra.mxu0 0.0
        %1490 = vmatprep.subr.mxu0 0.0
        %1491 = vmatpush2.msra.mxu0 0.0
        %1492 = vmatprep.subr.mxu0 0.0
        %1493 = vmatpush2.msra.mxu0 0.0
        %1494 = vmatprep.subr.mxu0 0.0
        %1495 = vmatpush2.msra.mxu0 0.0
        %1496 = vmatprep.subr.mxu0 0.0
        %1497 = vmatpush2.msra.mxu0 0.0
        %1498 = vmatprep.subr.mxu0 0.0
        %1499 = vmatpush2.msra.mxu0 0.0
        %1500 = vmatprep.subr.mxu0 0.0
        %1501 = vmatpush2.msra.mxu0 0.0
        %1502 = vmatprep.subr.mxu0 0.0
        %1503 = vmatpush2.msra.mxu0 0.0
        %1504 = vmatprep.subr.mxu0 0.0
        %1505 = vmatpush2.msra.mxu0 0.0
        %1506 = vmatprep.subr.mxu0 0.0
        %1507 = vmatpush2.msra.mxu0 0.0
        %1508 = vmatprep.mubr.f32.mxu0 0.0
        %1509 = vmatmul.mubr.f32.gmra.mxu0 %v1365
        %v1510 = vpop.f32.mrf.mxu0
        %v1511 = vadd.f32 0.0, %v1510
        %v1512 = vpop.f32.mrf.mxu0
        %v1513 = vadd.f32 0.0, %v1512
        %1514 = vdwg.mxu0
        %v1515 = vadd.f32 %v1369, %v1440
        %v1516 = vadd.f32 %v1370, %v1442
        %v1517 = vadd.f32 %v1371, %v1511
        %v1518 = vadd.f32 %v1372, %v1513
        %v1519 = vxor.u32 %v1515, 2147483648
        %v1520 = vmul.f32 %v1519, 1.442695
        %v1521 = vpow.pop %v1520
        %v1522 = vadd.f32 %v1521, 1.0
        %v1523 = vrcp.pop %v1522
        %v1524 = vmul.f32 1.0, %v1523
        %v1525 = vxor.u32 %v1516, 2147483648
        %v1526 = vmul.f32 %v1525, 1.442695
        %v1527 = vpow.pop %v1526
        %v1528 = vadd.f32 %v1527, 1.0
        %v1529 = vrcp.pop %v1528
        %v1530 = vmul.f32 1.0, %v1529
        %v1531 = vtanh.pop %v1517
        %v1532 = vxor.u32 %v1518, 2147483648
        %v1533 = vmul.f32 %v1532, 1.442695
        %v1534 = vpow.pop %v1533
        %v1535 = vadd.f32 %v1534, 1.0
        %v1536 = vrcp.pop %v1535
        %v1537 = vmul.f32 1.0, %v1536
        %v1538 = vmul.f32 %v1530, %v1363
        %v1539 = vmul.f32 %v1524, %v1531
        %v1540 = vadd.f32 %v1538, %v1539
        %v1541 = vtanh.pop %v1540
        %v1542 = vmul.f32 %v1537, %v1541
        %s1543 = scalar_lea.vmem [#allocation2], 24
        %1544 = vst [vmem:[%s1543] sm:$0xff] %v1542
        %s1545 = scalar_lea.vmem [#allocation3], 128
        %v1546 = vld [vmem:[%s1545] sm:$0xff]
        %v1547 = vld [vmem:[%s1545 + $0x8] sm:$0xff]
        %v1548 = vld [vmem:[%s1545 + $0x10] sm:$0xff]
        %v1549 = vld [vmem:[%s1545 + $0x18] sm:$0xff]
        %1550 = vmatprep.subr.mxu0 %v836
        %1551 = vmatpush1.msra.mxu0 %v835
        %1552 = vmatprep.subr.mxu0 %v832
        %1553 = vmatpush1.msra.mxu0 %v831
        %1554 = vmatprep.subr.mxu0 %v828
        %1555 = vmatpush1.msra.mxu0 %v827
        %1556 = vmatprep.subr.mxu0 %v824
        %1557 = vmatpush1.msra.mxu0 %v823
        %1558 = vmatprep.subr.mxu0 %v820
        %1559 = vmatpush1.msra.mxu0 %v819
        %1560 = vmatprep.subr.mxu0 %v816
        %1561 = vmatpush1.msra.mxu0 %v815
        %1562 = vmatprep.subr.mxu0 %v812
        %1563 = vmatpush1.msra.mxu0 %v811
        %1564 = vmatprep.subr.mxu0 %v808
        %1565 = vmatpush1.msra.mxu0 %v807
        %1566 = vmatprep.subr.mxu0 %v804
        %1567 = vmatpush1.msra.mxu0 %v803
        %1568 = vmatprep.subr.mxu0 %v800
        %1569 = vmatpush1.msra.mxu0 %v799
        %1570 = vmatprep.subr.mxu0 %v796
        %1571 = vmatpush1.msra.mxu0 %v795
        %1572 = vmatprep.subr.mxu0 %v792
        %1573 = vmatpush1.msra.mxu0 %v791
        %1574 = vmatprep.subr.mxu0 %v788
        %1575 = vmatpush1.msra.mxu0 %v787
        %1576 = vmatprep.subr.mxu0 %v784
        %1577 = vmatpush1.msra.mxu0 %v783
        %1578 = vmatprep.subr.mxu0 %v780
        %1579 = vmatpush1.msra.mxu0 %v779
        %1580 = vmatprep.subr.mxu0 %v776
        %1581 = vmatpush1.msra.mxu0 %v775
        %1582 = vmatprep.subr.mxu0 0.0
        %1583 = vmatpush2.msra.mxu0 0.0
        %1584 = vmatprep.subr.mxu0 0.0
        %1585 = vmatpush2.msra.mxu0 0.0
        %1586 = vmatprep.subr.mxu0 0.0
        %1587 = vmatpush2.msra.mxu0 0.0
        %1588 = vmatprep.subr.mxu0 0.0
        %1589 = vmatpush2.msra.mxu0 0.0
        %1590 = vmatprep.subr.mxu0 0.0
        %1591 = vmatpush2.msra.mxu0 0.0
        %1592 = vmatprep.subr.mxu0 0.0
        %1593 = vmatpush2.msra.mxu0 0.0
        %1594 = vmatprep.subr.mxu0 0.0
        %1595 = vmatpush2.msra.mxu0 0.0
        %1596 = vmatprep.subr.mxu0 0.0
        %1597 = vmatpush2.msra.mxu0 0.0
        %1598 = vmatprep.subr.mxu0 0.0
        %1599 = vmatpush2.msra.mxu0 0.0
        %1600 = vmatprep.subr.mxu0 0.0
        %1601 = vmatpush2.msra.mxu0 0.0
        %1602 = vmatprep.subr.mxu0 0.0
        %1603 = vmatpush2.msra.mxu0 0.0
        %1604 = vmatprep.subr.mxu0 0.0
        %1605 = vmatpush2.msra.mxu0 0.0
        %1606 = vmatprep.subr.mxu0 0.0
        %1607 = vmatpush2.msra.mxu0 0.0
        %1608 = vmatprep.subr.mxu0 0.0
        %1609 = vmatpush2.msra.mxu0 0.0
        %1610 = vmatprep.subr.mxu0 0.0
        %1611 = vmatpush2.msra.mxu0 0.0
        %1612 = vmatprep.subr.mxu0 0.0
        %1613 = vmatpush2.msra.mxu0 0.0
        %1614 = vmatprep.mubr.f32.mxu0 0.0
        %1615 = vmatmul.mubr.f32.gmra.mxu0 %v1542
        %v1616 = vpop.f32.mrf.mxu0
        %v1617 = vadd.f32 0.0, %v1616
        %v1618 = vpop.f32.mrf.mxu0
        %v1619 = vadd.f32 0.0, %v1618
        %1620 = vdwg.mxu0
        %1621 = vmatprep.subr.mxu0 %v838
        %1622 = vmatpush1.msra.mxu0 %v837
        %1623 = vmatprep.subr.mxu0 %v834
        %1624 = vmatpush1.msra.mxu0 %v833
        %1625 = vmatprep.subr.mxu0 %v830
        %1626 = vmatpush1.msra.mxu0 %v829
        %1627 = vmatprep.subr.mxu0 %v826
        %1628 = vmatpush1.msra.mxu0 %v825
        %1629 = vmatprep.subr.mxu0 %v822
        %1630 = vmatpush1.msra.mxu0 %v821
        %1631 = vmatprep.subr.mxu0 %v818
        %1632 = vmatpush1.msra.mxu0 %v817
        %1633 = vmatprep.subr.mxu0 %v814
        %1634 = vmatpush1.msra.mxu0 %v813
        %1635 = vmatprep.subr.mxu0 %v810
        %1636 = vmatpush1.msra.mxu0 %v809
        %1637 = vmatprep.subr.mxu0 %v806
        %1638 = vmatpush1.msra.mxu0 %v805
        %1639 = vmatprep.subr.mxu0 %v802
        %1640 = vmatpush1.msra.mxu0 %v801
        %1641 = vmatprep.subr.mxu0 %v798
        %1642 = vmatpush1.msra.mxu0 %v797
        %1643 = vmatprep.subr.mxu0 %v794
        %1644 = vmatpush1.msra.mxu0 %v793
        %1645 = vmatprep.subr.mxu0 %v790
        %1646 = vmatpush1.msra.mxu0 %v789
        %1647 = vmatprep.subr.mxu0 %v786
        %1648 = vmatpush1.msra.mxu0 %v785
        %1649 = vmatprep.subr.mxu0 %v782
        %1650 = vmatpush1.msra.mxu0 %v781
        %1651 = vmatprep.subr.mxu0 %v778
        %1652 = vmatpush1.msra.mxu0 %v777
        %1653 = vmatprep.subr.mxu0 0.0
        %1654 = vmatpush2.msra.mxu0 0.0
        %1655 = vmatprep.subr.mxu0 0.0
        %1656 = vmatpush2.msra.mxu0 0.0
        %1657 = vmatprep.subr.mxu0 0.0
        %1658 = vmatpush2.msra.mxu0 0.0
        %1659 = vmatprep.subr.mxu0 0.0
        %1660 = vmatpush2.msra.mxu0 0.0
        %1661 = vmatprep.subr.mxu0 0.0
        %1662 = vmatpush2.msra.mxu0 0.0
        %1663 = vmatprep.subr.mxu0 0.0
        %1664 = vmatpush2.msra.mxu0 0.0
        %1665 = vmatprep.subr.mxu0 0.0
        %1666 = vmatpush2.msra.mxu0 0.0
        %1667 = vmatprep.subr.mxu0 0.0
        %1668 = vmatpush2.msra.mxu0 0.0
        %1669 = vmatprep.subr.mxu0 0.0
        %1670 = vmatpush2.msra.mxu0 0.0
        %1671 = vmatprep.subr.mxu0 0.0
        %1672 = vmatpush2.msra.mxu0 0.0
        %1673 = vmatprep.subr.mxu0 0.0
        %1674 = vmatpush2.msra.mxu0 0.0
        %1675 = vmatprep.subr.mxu0 0.0
        %1676 = vmatpush2.msra.mxu0 0.0
        %1677 = vmatprep.subr.mxu0 0.0
        %1678 = vmatpush2.msra.mxu0 0.0
        %1679 = vmatprep.subr.mxu0 0.0
        %1680 = vmatpush2.msra.mxu0 0.0
        %1681 = vmatprep.subr.mxu0 0.0
        %1682 = vmatpush2.msra.mxu0 0.0
        %1683 = vmatprep.subr.mxu0 0.0
        %1684 = vmatpush2.msra.mxu0 0.0
        %1685 = vmatprep.mubr.f32.mxu0 0.0
        %1686 = vmatmul.mubr.f32.gmra.mxu0 %v1542
        %v1687 = vpop.f32.mrf.mxu0
        %v1688 = vadd.f32 0.0, %v1687
        %v1689 = vpop.f32.mrf.mxu0
        %v1690 = vadd.f32 0.0, %v1689
        %1691 = vdwg.mxu0
        %v1692 = vadd.f32 %v1546, %v1617
        %v1693 = vadd.f32 %v1547, %v1619
        %v1694 = vadd.f32 %v1548, %v1688
        %v1695 = vadd.f32 %v1549, %v1690
        %v1696 = vxor.u32 %v1692, 2147483648
        %v1697 = vmul.f32 %v1696, 1.442695
        %v1698 = vpow.pop %v1697
        %v1699 = vadd.f32 %v1698, 1.0
        %v1700 = vrcp.pop %v1699
        %v1701 = vmul.f32 1.0, %v1700
        %v1702 = vxor.u32 %v1693, 2147483648
        %v1703 = vmul.f32 %v1702, 1.442695
        %v1704 = vpow.pop %v1703
        %v1705 = vadd.f32 %v1704, 1.0
        %v1706 = vrcp.pop %v1705
        %v1707 = vmul.f32 1.0, %v1706
        %v1708 = vtanh.pop %v1694
        %v1709 = vxor.u32 %v1695, 2147483648
        %v1710 = vmul.f32 %v1709, 1.442695
        %v1711 = vpow.pop %v1710
        %v1712 = vadd.f32 %v1711, 1.0
        %v1713 = vrcp.pop %v1712
        %v1714 = vmul.f32 1.0, %v1713
        %v1715 = vmul.f32 %v1707, %v1540
        %v1716 = vmul.f32 %v1701, %v1708
        %v1717 = vadd.f32 %v1715, %v1716
        %v1718 = vtanh.pop %v1717
        %v1719 = vmul.f32 %v1714, %v1718
        %s1720 = scalar_lea.vmem [#allocation2], 32
        %1721 = vst [vmem:[%s1720] sm:$0xff] %v1719
        %s1722 = scalar_lea.vmem [#allocation3], 160
        %v1723 = vld [vmem:[%s1722] sm:$0xff]
        %v1724 = vld [vmem:[%s1722 + $0x8] sm:$0xff]
        %v1725 = vld [vmem:[%s1722 + $0x10] sm:$0xff]
        %v1726 = vld [vmem:[%s1722 + $0x18] sm:$0xff]
        %1727 = vmatprep.subr.mxu0 %v836
        %1728 = vmatpush1.msra.mxu0 %v835
        %1729 = vmatprep.subr.mxu0 %v832
        %1730 = vmatpush1.msra.mxu0 %v831
        %1731 = vmatprep.subr.mxu0 %v828
        %1732 = vmatpush1.msra.mxu0 %v827
        %1733 = vmatprep.subr.mxu0 %v824
        %1734 = vmatpush1.msra.mxu0 %v823
        %1735 = vmatprep.subr.mxu0 %v820
        %1736 = vmatpush1.msra.mxu0 %v819
        %1737 = vmatprep.subr.mxu0 %v816
        %1738 = vmatpush1.msra.mxu0 %v815
        %1739 = vmatprep.subr.mxu0 %v812
        %1740 = vmatpush1.msra.mxu0 %v811
        %1741 = vmatprep.subr.mxu0 %v808
        %1742 = vmatpush1.msra.mxu0 %v807
        %1743 = vmatprep.subr.mxu0 %v804
        %1744 = vmatpush1.msra.mxu0 %v803
        %1745 = vmatprep.subr.mxu0 %v800
        %1746 = vmatpush1.msra.mxu0 %v799
        %1747 = vmatprep.subr.mxu0 %v796
        %1748 = vmatpush1.msra.mxu0 %v795
        %1749 = vmatprep.subr.mxu0 %v792
        %1750 = vmatpush1.msra.mxu0 %v791
        %1751 = vmatprep.subr.mxu0 %v788
        %1752 = vmatpush1.msra.mxu0 %v787
        %1753 = vmatprep.subr.mxu0 %v784
        %1754 = vmatpush1.msra.mxu0 %v783
        %1755 = vmatprep.subr.mxu0 %v780
        %1756 = vmatpush1.msra.mxu0 %v779
        %1757 = vmatprep.subr.mxu0 %v776
        %1758 = vmatpush1.msra.mxu0 %v775
        %1759 = vmatprep.subr.mxu0 0.0
        %1760 = vmatpush2.msra.mxu0 0.0
        %1761 = vmatprep.subr.mxu0 0.0
        %1762 = vmatpush2.msra.mxu0 0.0
        %1763 = vmatprep.subr.mxu0 0.0
        %1764 = vmatpush2.msra.mxu0 0.0
        %1765 = vmatprep.subr.mxu0 0.0
        %1766 = vmatpush2.msra.mxu0 0.0
        %1767 = vmatprep.subr.mxu0 0.0
        %1768 = vmatpush2.msra.mxu0 0.0
        %1769 = vmatprep.subr.mxu0 0.0
        %1770 = vmatpush2.msra.mxu0 0.0
        %1771 = vmatprep.subr.mxu0 0.0
        %1772 = vmatpush2.msra.mxu0 0.0
        %1773 = vmatprep.subr.mxu0 0.0
        %1774 = vmatpush2.msra.mxu0 0.0
        %1775 = vmatprep.subr.mxu0 0.0
        %1776 = vmatpush2.msra.mxu0 0.0
        %1777 = vmatprep.subr.mxu0 0.0
        %1778 = vmatpush2.msra.mxu0 0.0
        %1779 = vmatprep.subr.mxu0 0.0
        %1780 = vmatpush2.msra.mxu0 0.0
        %1781 = vmatprep.subr.mxu0 0.0
        %1782 = vmatpush2.msra.mxu0 0.0
        %1783 = vmatprep.subr.mxu0 0.0
        %1784 = vmatpush2.msra.mxu0 0.0
        %1785 = vmatprep.subr.mxu0 0.0
        %1786 = vmatpush2.msra.mxu0 0.0
        %1787 = vmatprep.subr.mxu0 0.0
        %1788 = vmatpush2.msra.mxu0 0.0
        %1789 = vmatprep.subr.mxu0 0.0
        %1790 = vmatpush2.msra.mxu0 0.0
        %1791 = vmatprep.mubr.f32.mxu0 0.0
        %1792 = vmatmul.mubr.f32.gmra.mxu0 %v1719
        %v1793 = vpop.f32.mrf.mxu0
        %v1794 = vadd.f32 0.0, %v1793
        %v1795 = vpop.f32.mrf.mxu0
        %v1796 = vadd.f32 0.0, %v1795
        %1797 = vdwg.mxu0
        %1798 = vmatprep.subr.mxu0 %v838
        %1799 = vmatpush1.msra.mxu0 %v837
        %1800 = vmatprep.subr.mxu0 %v834
        %1801 = vmatpush1.msra.mxu0 %v833
        %1802 = vmatprep.subr.mxu0 %v830
        %1803 = vmatpush1.msra.mxu0 %v829
        %1804 = vmatprep.subr.mxu0 %v826
        %1805 = vmatpush1.msra.mxu0 %v825
        %1806 = vmatprep.subr.mxu0 %v822
        %1807 = vmatpush1.msra.mxu0 %v821
        %1808 = vmatprep.subr.mxu0 %v818
        %1809 = vmatpush1.msra.mxu0 %v817
        %1810 = vmatprep.subr.mxu0 %v814
        %1811 = vmatpush1.msra.mxu0 %v813
        %1812 = vmatprep.subr.mxu0 %v810
        %1813 = vmatpush1.msra.mxu0 %v809
        %1814 = vmatprep.subr.mxu0 %v806
        %1815 = vmatpush1.msra.mxu0 %v805
        %1816 = vmatprep.subr.mxu0 %v802
        %1817 = vmatpush1.msra.mxu0 %v801
        %1818 = vmatprep.subr.mxu0 %v798
        %1819 = vmatpush1.msra.mxu0 %v797
        %1820 = vmatprep.subr.mxu0 %v794
        %1821 = vmatpush1.msra.mxu0 %v793
        %1822 = vmatprep.subr.mxu0 %v790
        %1823 = vmatpush1.msra.mxu0 %v789
        %1824 = vmatprep.subr.mxu0 %v786
        %1825 = vmatpush1.msra.mxu0 %v785
        %1826 = vmatprep.subr.mxu0 %v782
        %1827 = vmatpush1.msra.mxu0 %v781
        %1828 = vmatprep.subr.mxu0 %v778
        %1829 = vmatpush1.msra.mxu0 %v777
        %1830 = vmatprep.subr.mxu0 0.0
        %1831 = vmatpush2.msra.mxu0 0.0
        %1832 = vmatprep.subr.mxu0 0.0
        %1833 = vmatpush2.msra.mxu0 0.0
        %1834 = vmatprep.subr.mxu0 0.0
        %1835 = vmatpush2.msra.mxu0 0.0
        %1836 = vmatprep.subr.mxu0 0.0
        %1837 = vmatpush2.msra.mxu0 0.0
        %1838 = vmatprep.subr.mxu0 0.0
        %1839 = vmatpush2.msra.mxu0 0.0
        %1840 = vmatprep.subr.mxu0 0.0
        %1841 = vmatpush2.msra.mxu0 0.0
        %1842 = vmatprep.subr.mxu0 0.0
        %1843 = vmatpush2.msra.mxu0 0.0
        %1844 = vmatprep.subr.mxu0 0.0
        %1845 = vmatpush2.msra.mxu0 0.0
        %1846 = vmatprep.subr.mxu0 0.0
        %1847 = vmatpush2.msra.mxu0 0.0
        %1848 = vmatprep.subr.mxu0 0.0
        %1849 = vmatpush2.msra.mxu0 0.0
        %1850 = vmatprep.subr.mxu0 0.0
        %1851 = vmatpush2.msra.mxu0 0.0
        %1852 = vmatprep.subr.mxu0 0.0
        %1853 = vmatpush2.msra.mxu0 0.0
        %1854 = vmatprep.subr.mxu0 0.0
        %1855 = vmatpush2.msra.mxu0 0.0
        %1856 = vmatprep.subr.mxu0 0.0
        %1857 = vmatpush2.msra.mxu0 0.0
        %1858 = vmatprep.subr.mxu0 0.0
        %1859 = vmatpush2.msra.mxu0 0.0
        %1860 = vmatprep.subr.mxu0 0.0
        %1861 = vmatpush2.msra.mxu0 0.0
        %1862 = vmatprep.mubr.f32.mxu0 0.0
        %1863 = vmatmul.mubr.f32.gmra.mxu0 %v1719
        %v1864 = vpop.f32.mrf.mxu0
        %v1865 = vadd.f32 0.0, %v1864
        %v1866 = vpop.f32.mrf.mxu0
        %v1867 = vadd.f32 0.0, %v1866
        %1868 = vdwg.mxu0
        %v1869 = vadd.f32 %v1723, %v1794
        %v1870 = vadd.f32 %v1724, %v1796
        %v1871 = vadd.f32 %v1725, %v1865
        %v1872 = vadd.f32 %v1726, %v1867
        %v1873 = vxor.u32 %v1869, 2147483648
        %v1874 = vmul.f32 %v1873, 1.442695
        %v1875 = vpow.pop %v1874
        %v1876 = vadd.f32 %v1875, 1.0
        %v1877 = vrcp.pop %v1876
        %v1878 = vmul.f32 1.0, %v1877
        %v1879 = vxor.u32 %v1870, 2147483648
        %v1880 = vmul.f32 %v1879, 1.442695
        %v1881 = vpow.pop %v1880
        %v1882 = vadd.f32 %v1881, 1.0
        %v1883 = vrcp.pop %v1882
        %v1884 = vmul.f32 1.0, %v1883
        %v1885 = vtanh.pop %v1871
        %v1886 = vxor.u32 %v1872, 2147483648
        %v1887 = vmul.f32 %v1886, 1.442695
        %v1888 = vpow.pop %v1887
        %v1889 = vadd.f32 %v1888, 1.0
        %v1890 = vrcp.pop %v1889
        %v1891 = vmul.f32 1.0, %v1890
        %v1892 = vmul.f32 %v1884, %v1717
        %v1893 = vmul.f32 %v1878, %v1885
        %v1894 = vadd.f32 %v1892, %v1893
        %v1895 = vtanh.pop %v1894
        %v1896 = vmul.f32 %v1891, %v1895
        %s1897 = scalar_lea.vmem [#allocation2], 40
        %1898 = vst [vmem:[%s1897] sm:$0xff] %v1896
        %s1899 = scalar_lea.vmem [#allocation3], 192
        %v1900 = vld [vmem:[%s1899] sm:$0xff]
        %v1901 = vld [vmem:[%s1899 + $0x8] sm:$0xff]
        %v1902 = vld [vmem:[%s1899 + $0x10] sm:$0xff]
        %v1903 = vld [vmem:[%s1899 + $0x18] sm:$0xff]
        %1904 = vmatprep.subr.mxu0 %v836
        %1905 = vmatpush1.msra.mxu0 %v835
        %1906 = vmatprep.subr.mxu0 %v832
        %1907 = vmatpush1.msra.mxu0 %v831
        %1908 = vmatprep.subr.mxu0 %v828
        %1909 = vmatpush1.msra.mxu0 %v827
        %1910 = vmatprep.subr.mxu0 %v824
        %1911 = vmatpush1.msra.mxu0 %v823
        %1912 = vmatprep.subr.mxu0 %v820
        %1913 = vmatpush1.msra.mxu0 %v819
        %1914 = vmatprep.subr.mxu0 %v816
        %1915 = vmatpush1.msra.mxu0 %v815
        %1916 = vmatprep.subr.mxu0 %v812
        %1917 = vmatpush1.msra.mxu0 %v811
        %1918 = vmatprep.subr.mxu0 %v808
        %1919 = vmatpush1.msra.mxu0 %v807
        %1920 = vmatprep.subr.mxu0 %v804
        %1921 = vmatpush1.msra.mxu0 %v803
        %1922 = vmatprep.subr.mxu0 %v800
        %1923 = vmatpush1.msra.mxu0 %v799
        %1924 = vmatprep.subr.mxu0 %v796
        %1925 = vmatpush1.msra.mxu0 %v795
        %1926 = vmatprep.subr.mxu0 %v792
        %1927 = vmatpush1.msra.mxu0 %v791
        %1928 = vmatprep.subr.mxu0 %v788
        %1929 = vmatpush1.msra.mxu0 %v787
        %1930 = vmatprep.subr.mxu0 %v784
        %1931 = vmatpush1.msra.mxu0 %v783
        %1932 = vmatprep.subr.mxu0 %v780
        %1933 = vmatpush1.msra.mxu0 %v779
        %1934 = vmatprep.subr.mxu0 %v776
        %1935 = vmatpush1.msra.mxu0 %v775
        %1936 = vmatprep.subr.mxu0 0.0
        %1937 = vmatpush2.msra.mxu0 0.0
        %1938 = vmatprep.subr.mxu0 0.0
        %1939 = vmatpush2.msra.mxu0 0.0
        %1940 = vmatprep.subr.mxu0 0.0
        %1941 = vmatpush2.msra.mxu0 0.0
        %1942 = vmatprep.subr.mxu0 0.0
        %1943 = vmatpush2.msra.mxu0 0.0
        %1944 = vmatprep.subr.mxu0 0.0
        %1945 = vmatpush2.msra.mxu0 0.0
        %1946 = vmatprep.subr.mxu0 0.0
        %1947 = vmatpush2.msra.mxu0 0.0
        %1948 = vmatprep.subr.mxu0 0.0
        %1949 = vmatpush2.msra.mxu0 0.0
        %1950 = vmatprep.subr.mxu0 0.0
        %1951 = vmatpush2.msra.mxu0 0.0
        %1952 = vmatprep.subr.mxu0 0.0
        %1953 = vmatpush2.msra.mxu0 0.0
        %1954 = vmatprep.subr.mxu0 0.0
        %1955 = vmatpush2.msra.mxu0 0.0
        %1956 = vmatprep.subr.mxu0 0.0
        %1957 = vmatpush2.msra.mxu0 0.0
        %1958 = vmatprep.subr.mxu0 0.0
        %1959 = vmatpush2.msra.mxu0 0.0
        %1960 = vmatprep.subr.mxu0 0.0
        %1961 = vmatpush2.msra.mxu0 0.0
        %1962 = vmatprep.subr.mxu0 0.0
        %1963 = vmatpush2.msra.mxu0 0.0
        %1964 = vmatprep.subr.mxu0 0.0
        %1965 = vmatpush2.msra.mxu0 0.0
        %1966 = vmatprep.subr.mxu0 0.0
        %1967 = vmatpush2.msra.mxu0 0.0
        %1968 = vmatprep.mubr.f32.mxu0 0.0
        %1969 = vmatmul.mubr.f32.gmra.mxu0 %v1896
        %v1970 = vpop.f32.mrf.mxu0
        %v1971 = vadd.f32 0.0, %v1970
        %v1972 = vpop.f32.mrf.mxu0
        %v1973 = vadd.f32 0.0, %v1972
        %1974 = vdwg.mxu0
        %1975 = vmatprep.subr.mxu0 %v838
        %1976 = vmatpush1.msra.mxu0 %v837
        %1977 = vmatprep.subr.mxu0 %v834
        %1978 = vmatpush1.msra.mxu0 %v833
        %1979 = vmatprep.subr.mxu0 %v830
        %1980 = vmatpush1.msra.mxu0 %v829
        %1981 = vmatprep.subr.mxu0 %v826
        %1982 = vmatpush1.msra.mxu0 %v825
        %1983 = vmatprep.subr.mxu0 %v822
        %1984 = vmatpush1.msra.mxu0 %v821
        %1985 = vmatprep.subr.mxu0 %v818
        %1986 = vmatpush1.msra.mxu0 %v817
        %1987 = vmatprep.subr.mxu0 %v814
        %1988 = vmatpush1.msra.mxu0 %v813
        %1989 = vmatprep.subr.mxu0 %v810
        %1990 = vmatpush1.msra.mxu0 %v809
        %1991 = vmatprep.subr.mxu0 %v806
        %1992 = vmatpush1.msra.mxu0 %v805
        %1993 = vmatprep.subr.mxu0 %v802
        %1994 = vmatpush1.msra.mxu0 %v801
        %1995 = vmatprep.subr.mxu0 %v798
        %1996 = vmatpush1.msra.mxu0 %v797
        %1997 = vmatprep.subr.mxu0 %v794
        %1998 = vmatpush1.msra.mxu0 %v793
        %1999 = vmatprep.subr.mxu0 %v790
        %2000 = vmatpush1.msra.mxu0 %v789
        %2001 = vmatprep.subr.mxu0 %v786
        %2002 = vmatpush1.msra.mxu0 %v785
        %2003 = vmatprep.subr.mxu0 %v782
        %2004 = vmatpush1.msra.mxu0 %v781
        %2005 = vmatprep.subr.mxu0 %v778
        %2006 = vmatpush1.msra.mxu0 %v777
        %2007 = vmatprep.subr.mxu0 0.0
        %2008 = vmatpush2.msra.mxu0 0.0
        %2009 = vmatprep.subr.mxu0 0.0
        %2010 = vmatpush2.msra.mxu0 0.0
        %2011 = vmatprep.subr.mxu0 0.0
        %2012 = vmatpush2.msra.mxu0 0.0
        %2013 = vmatprep.subr.mxu0 0.0
        %2014 = vmatpush2.msra.mxu0 0.0
        %2015 = vmatprep.subr.mxu0 0.0
        %2016 = vmatpush2.msra.mxu0 0.0
        %2017 = vmatprep.subr.mxu0 0.0
        %2018 = vmatpush2.msra.mxu0 0.0
        %2019 = vmatprep.subr.mxu0 0.0
        %2020 = vmatpush2.msra.mxu0 0.0
        %2021 = vmatprep.subr.mxu0 0.0
        %2022 = vmatpush2.msra.mxu0 0.0
        %2023 = vmatprep.subr.mxu0 0.0
        %2024 = vmatpush2.msra.mxu0 0.0
        %2025 = vmatprep.subr.mxu0 0.0
        %2026 = vmatpush2.msra.mxu0 0.0
        %2027 = vmatprep.subr.mxu0 0.0
        %2028 = vmatpush2.msra.mxu0 0.0
        %2029 = vmatprep.subr.mxu0 0.0
        %2030 = vmatpush2.msra.mxu0 0.0
        %2031 = vmatprep.subr.mxu0 0.0
        %2032 = vmatpush2.msra.mxu0 0.0
        %2033 = vmatprep.subr.mxu0 0.0
        %2034 = vmatpush2.msra.mxu0 0.0
        %2035 = vmatprep.subr.mxu0 0.0
        %2036 = vmatpush2.msra.mxu0 0.0
        %2037 = vmatprep.subr.mxu0 0.0
        %2038 = vmatpush2.msra.mxu0 0.0
        %2039 = vmatprep.mubr.f32.mxu0 0.0
        %2040 = vmatmul.mubr.f32.gmra.mxu0 %v1896
        %v2041 = vpop.f32.mrf.mxu0
        %v2042 = vadd.f32 0.0, %v2041
        %v2043 = vpop.f32.mrf.mxu0
        %v2044 = vadd.f32 0.0, %v2043
        %2045 = vdwg.mxu0
        %v2046 = vadd.f32 %v1900, %v1971
        %v2047 = vadd.f32 %v1901, %v1973
        %v2048 = vadd.f32 %v1902, %v2042
        %v2049 = vadd.f32 %v1903, %v2044
        %v2050 = vxor.u32 %v2046, 2147483648
        %v2051 = vmul.f32 %v2050, 1.442695
        %v2052 = vpow.pop %v2051
        %v2053 = vadd.f32 %v2052, 1.0
        %v2054 = vrcp.pop %v2053
        %v2055 = vmul.f32 1.0, %v2054
        %v2056 = vxor.u32 %v2047, 2147483648
        %v2057 = vmul.f32 %v2056, 1.442695
        %v2058 = vpow.pop %v2057
        %v2059 = vadd.f32 %v2058, 1.0
        %v2060 = vrcp.pop %v2059
        %v2061 = vmul.f32 1.0, %v2060
        %v2062 = vtanh.pop %v2048
        %v2063 = vxor.u32 %v2049, 2147483648
        %v2064 = vmul.f32 %v2063, 1.442695
        %v2065 = vpow.pop %v2064
        %v2066 = vadd.f32 %v2065, 1.0
        %v2067 = vrcp.pop %v2066
        %v2068 = vmul.f32 1.0, %v2067
        %v2069 = vmul.f32 %v2061, %v1894
        %v2070 = vmul.f32 %v2055, %v2062
        %v2071 = vadd.f32 %v2069, %v2070
        %v2072 = vtanh.pop %v2071
        %v2073 = vmul.f32 %v2068, %v2072
        %s2074 = scalar_lea.vmem [#allocation2], 48
        %2075 = vst [vmem:[%s2074] sm:$0xff] %v2073
        %s2076 = scalar_lea.vmem [#allocation3], 224
        %v2077 = vld [vmem:[%s2076] sm:$0xff]
        %v2078 = vld [vmem:[%s2076 + $0x8] sm:$0xff]
        %v2079 = vld [vmem:[%s2076 + $0x10] sm:$0xff]
        %v2080 = vld [vmem:[%s2076 + $0x18] sm:$0xff]
        %2081 = vmatprep.subr.mxu0 %v836
        %2082 = vmatpush1.msra.mxu0 %v835
        %2083 = vmatprep.subr.mxu0 %v832
        %2084 = vmatpush1.msra.mxu0 %v831
        %2085 = vmatprep.subr.mxu0 %v828
        %2086 = vmatpush1.msra.mxu0 %v827
        %2087 = vmatprep.subr.mxu0 %v824
        %2088 = vmatpush1.msra.mxu0 %v823
        %2089 = vmatprep.subr.mxu0 %v820
        %2090 = vmatpush1.msra.mxu0 %v819
        %2091 = vmatprep.subr.mxu0 %v816
        %2092 = vmatpush1.msra.mxu0 %v815
        %2093 = vmatprep.subr.mxu0 %v812
        %2094 = vmatpush1.msra.mxu0 %v811
        %2095 = vmatprep.subr.mxu0 %v808
        %2096 = vmatpush1.msra.mxu0 %v807
        %2097 = vmatprep.subr.mxu0 %v804
        %2098 = vmatpush1.msra.mxu0 %v803
        %2099 = vmatprep.subr.mxu0 %v800
        %2100 = vmatpush1.msra.mxu0 %v799
        %2101 = vmatprep.subr.mxu0 %v796
        %2102 = vmatpush1.msra.mxu0 %v795
        %2103 = vmatprep.subr.mxu0 %v792
        %2104 = vmatpush1.msra.mxu0 %v791
        %2105 = vmatprep.subr.mxu0 %v788
        %2106 = vmatpush1.msra.mxu0 %v787
        %2107 = vmatprep.subr.mxu0 %v784
        %2108 = vmatpush1.msra.mxu0 %v783
        %2109 = vmatprep.subr.mxu0 %v780
        %2110 = vmatpush1.msra.mxu0 %v779
        %2111 = vmatprep.subr.mxu0 %v776
        %2112 = vmatpush1.msra.mxu0 %v775
        %2113 = vmatprep.subr.mxu0 0.0
        %2114 = vmatpush2.msra.mxu0 0.0
        %2115 = vmatprep.subr.mxu0 0.0
        %2116 = vmatpush2.msra.mxu0 0.0
        %2117 = vmatprep.subr.mxu0 0.0
        %2118 = vmatpush2.msra.mxu0 0.0
        %2119 = vmatprep.subr.mxu0 0.0
        %2120 = vmatpush2.msra.mxu0 0.0
        %2121 = vmatprep.subr.mxu0 0.0
        %2122 = vmatpush2.msra.mxu0 0.0
        %2123 = vmatprep.subr.mxu0 0.0
        %2124 = vmatpush2.msra.mxu0 0.0
        %2125 = vmatprep.subr.mxu0 0.0
        %2126 = vmatpush2.msra.mxu0 0.0
        %2127 = vmatprep.subr.mxu0 0.0
        %2128 = vmatpush2.msra.mxu0 0.0
        %2129 = vmatprep.subr.mxu0 0.0
        %2130 = vmatpush2.msra.mxu0 0.0
        %2131 = vmatprep.subr.mxu0 0.0
        %2132 = vmatpush2.msra.mxu0 0.0
        %2133 = vmatprep.subr.mxu0 0.0
        %2134 = vmatpush2.msra.mxu0 0.0
        %2135 = vmatprep.subr.mxu0 0.0
        %2136 = vmatpush2.msra.mxu0 0.0
        %2137 = vmatprep.subr.mxu0 0.0
        %2138 = vmatpush2.msra.mxu0 0.0
        %2139 = vmatprep.subr.mxu0 0.0
        %2140 = vmatpush2.msra.mxu0 0.0
        %2141 = vmatprep.subr.mxu0 0.0
        %2142 = vmatpush2.msra.mxu0 0.0
        %2143 = vmatprep.subr.mxu0 0.0
        %2144 = vmatpush2.msra.mxu0 0.0
        %2145 = vmatprep.mubr.f32.mxu0 0.0
        %2146 = vmatmul.mubr.f32.gmra.mxu0 %v2073
        %v2147 = vpop.f32.mrf.mxu0
        %v2148 = vadd.f32 0.0, %v2147
        %v2149 = vpop.f32.mrf.mxu0
        %v2150 = vadd.f32 0.0, %v2149
        %2151 = vdwg.mxu0
        %2152 = vmatprep.subr.mxu0 %v838
        %2153 = vmatpush1.msra.mxu0 %v837
        %2154 = vmatprep.subr.mxu0 %v834
        %2155 = vmatpush1.msra.mxu0 %v833
        %2156 = vmatprep.subr.mxu0 %v830
        %2157 = vmatpush1.msra.mxu0 %v829
        %2158 = vmatprep.subr.mxu0 %v826
        %2159 = vmatpush1.msra.mxu0 %v825
        %2160 = vmatprep.subr.mxu0 %v822
        %2161 = vmatpush1.msra.mxu0 %v821
        %2162 = vmatprep.subr.mxu0 %v818
        %2163 = vmatpush1.msra.mxu0 %v817
        %2164 = vmatprep.subr.mxu0 %v814
        %2165 = vmatpush1.msra.mxu0 %v813
        %2166 = vmatprep.subr.mxu0 %v810
        %2167 = vmatpush1.msra.mxu0 %v809
        %2168 = vmatprep.subr.mxu0 %v806
        %2169 = vmatpush1.msra.mxu0 %v805
        %2170 = vmatprep.subr.mxu0 %v802
        %2171 = vmatpush1.msra.mxu0 %v801
        %2172 = vmatprep.subr.mxu0 %v798
        %2173 = vmatpush1.msra.mxu0 %v797
        %2174 = vmatprep.subr.mxu0 %v794
        %2175 = vmatpush1.msra.mxu0 %v793
        %2176 = vmatprep.subr.mxu0 %v790
        %2177 = vmatpush1.msra.mxu0 %v789
        %2178 = vmatprep.subr.mxu0 %v786
        %2179 = vmatpush1.msra.mxu0 %v785
        %2180 = vmatprep.subr.mxu0 %v782
        %2181 = vmatpush1.msra.mxu0 %v781
        %2182 = vmatprep.subr.mxu0 %v778
        %2183 = vmatpush1.msra.mxu0 %v777
        %2184 = vmatprep.subr.mxu0 0.0
        %2185 = vmatpush2.msra.mxu0 0.0
        %2186 = vmatprep.subr.mxu0 0.0
        %2187 = vmatpush2.msra.mxu0 0.0
        %2188 = vmatprep.subr.mxu0 0.0
        %2189 = vmatpush2.msra.mxu0 0.0
        %2190 = vmatprep.subr.mxu0 0.0
        %2191 = vmatpush2.msra.mxu0 0.0
        %2192 = vmatprep.subr.mxu0 0.0
        %2193 = vmatpush2.msra.mxu0 0.0
        %2194 = vmatprep.subr.mxu0 0.0
        %2195 = vmatpush2.msra.mxu0 0.0
        %2196 = vmatprep.subr.mxu0 0.0
        %2197 = vmatpush2.msra.mxu0 0.0
        %2198 = vmatprep.subr.mxu0 0.0
        %2199 = vmatpush2.msra.mxu0 0.0
        %2200 = vmatprep.subr.mxu0 0.0
        %2201 = vmatpush2.msra.mxu0 0.0
        %2202 = vmatprep.subr.mxu0 0.0
        %2203 = vmatpush2.msra.mxu0 0.0
        %2204 = vmatprep.subr.mxu0 0.0
        %2205 = vmatpush2.msra.mxu0 0.0
        %2206 = vmatprep.subr.mxu0 0.0
        %2207 = vmatpush2.msra.mxu0 0.0
        %2208 = vmatprep.subr.mxu0 0.0
        %2209 = vmatpush2.msra.mxu0 0.0
        %2210 = vmatprep.subr.mxu0 0.0
        %2211 = vmatpush2.msra.mxu0 0.0
        %2212 = vmatprep.subr.mxu0 0.0
        %2213 = vmatpush2.msra.mxu0 0.0
        %2214 = vmatprep.subr.mxu0 0.0
        %2215 = vmatpush2.msra.mxu0 0.0
        %2216 = vmatprep.mubr.f32.mxu0 0.0
        %2217 = vmatmul.mubr.f32.gmra.mxu0 %v2073
        %v2218 = vpop.f32.mrf.mxu0
        %v2219 = vadd.f32 0.0, %v2218
        %v2220 = vpop.f32.mrf.mxu0
        %v2221 = vadd.f32 0.0, %v2220
        %2222 = vdwg.mxu0
        %v2223 = vadd.f32 %v2077, %v2148
        %v2224 = vadd.f32 %v2078, %v2150
        %v2225 = vadd.f32 %v2079, %v2219
        %v2226 = vadd.f32 %v2080, %v2221
        %v2227 = vxor.u32 %v2223, 2147483648
        %v2228 = vmul.f32 %v2227, 1.442695
        %v2229 = vpow.pop %v2228
        %v2230 = vadd.f32 %v2229, 1.0
        %v2231 = vrcp.pop %v2230
        %v2232 = vmul.f32 1.0, %v2231
        %v2233 = vxor.u32 %v2224, 2147483648
        %v2234 = vmul.f32 %v2233, 1.442695
        %v2235 = vpow.pop %v2234
        %v2236 = vadd.f32 %v2235, 1.0
        %v2237 = vrcp.pop %v2236
        %v2238 = vmul.f32 1.0, %v2237
        %v2239 = vtanh.pop %v2225
        %v2240 = vxor.u32 %v2226, 2147483648
        %v2241 = vmul.f32 %v2240, 1.442695
        %v2242 = vpow.pop %v2241
        %v2243 = vadd.f32 %v2242, 1.0
        %v2244 = vrcp.pop %v2243
        %v2245 = vmul.f32 1.0, %v2244
        %v2246 = vmul.f32 %v2238, %v2071
        %v2247 = vmul.f32 %v2232, %v2239
        %v2248 = vadd.f32 %v2246, %v2247
        %v2249 = vtanh.pop %v2248
        %v2250 = vmul.f32 %v2245, %v2249
        %s2251 = scalar_lea.vmem [#allocation2], 56
        %2252 = vst [vmem:[%s2251] sm:$0xff] %v2250
        %v2253 = vld [vmem:[#allocation2] sm:$0xff]
        %v2254 = vld [vmem:[#allocation2 + $0x8] sm:$0xff]
        %v2255 = vld [vmem:[#allocation2 + $0x10] sm:$0xff]
        %v2256 = vld [vmem:[#allocation2 + $0x18] sm:$0xff]
        %v2257 = vld [vmem:[#allocation2 + $0x20] sm:$0xff]
        %v2258 = vld [vmem:[#allocation2 + $0x28] sm:$0xff]
        %v2259 = vld [vmem:[#allocation2 + $0x30] sm:$0xff]
        %v2260 = vld [vmem:[#allocation2 + $0x38] sm:$0xff]
        %s2261 = scalar_lea.vmem %s2, 512
        %v2262 = vld [vmem:[%s2261] sm:$0xff]
        %v2263 = vld [vmem:[%s2261 + $0x8] sm:$0xff]
        %v2264 = vld [vmem:[%s2261 + $0x10] sm:$0xff]
        %v2265 = vld [vmem:[%s2261 + $0x18] sm:$0xff]
        %v2266 = vld [vmem:[%s2261 + $0x20] sm:$0xff]
        %v2267 = vld [vmem:[%s2261 + $0x28] sm:$0xff]
        %v2268 = vld [vmem:[%s2261 + $0x30] sm:$0xff]
        %v2269 = vld [vmem:[%s2261 + $0x38] sm:$0xff]
        %v2270 = vld [vmem:[%s2261 + $0x40] sm:$0xff]
        %v2271 = vld [vmem:[%s2261 + $0x48] sm:$0xff]
        %v2272 = vld [vmem:[%s2261 + $0x50] sm:$0xff]
        %v2273 = vld [vmem:[%s2261 + $0x58] sm:$0xff]
        %v2274 = vld [vmem:[%s2261 + $0x60] sm:$0xff]
        %v2275 = vld [vmem:[%s2261 + $0x68] sm:$0xff]
        %v2276 = vld [vmem:[%s2261 + $0x70] sm:$0xff]
        %v2277 = vld [vmem:[%s2261 + $0x78] sm:$0xff]
        %v2278 = vld [vmem:[%s2261 + $0x80] sm:$0xff]
        %v2279 = vld [vmem:[%s2261 + $0x88] sm:$0xff]
        %v2280 = vld [vmem:[%s2261 + $0x90] sm:$0xff]
        %v2281 = vld [vmem:[%s2261 + $0x98] sm:$0xff]
        %v2282 = vld [vmem:[%s2261 + $0xa0] sm:$0xff]
        %v2283 = vld [vmem:[%s2261 + $0xa8] sm:$0xff]
        %v2284 = vld [vmem:[%s2261 + $0xb0] sm:$0xff]
        %v2285 = vld [vmem:[%s2261 + $0xb8] sm:$0xff]
        %v2286 = vld [vmem:[%s2261 + $0xc0] sm:$0xff]
        %v2287 = vld [vmem:[%s2261 + $0xc8] sm:$0xff]
        %v2288 = vld [vmem:[%s2261 + $0xd0] sm:$0xff]
        %v2289 = vld [vmem:[%s2261 + $0xd8] sm:$0xff]
        %v2290 = vld [vmem:[%s2261 + $0xe0] sm:$0xff]
        %v2291 = vld [vmem:[%s2261 + $0xe8] sm:$0xff]
        %v2292 = vld [vmem:[%s2261 + $0xf0] sm:$0xff]
        %v2293 = vld [vmem:[%s2261 + $0xf8] sm:$0xff]
        %v2294 = vld [vmem:[%s2261 + $0x100] sm:$0xff]
        %v2295 = vld [vmem:[%s2261 + $0x108] sm:$0xff]
        %v2296 = vld [vmem:[%s2261 + $0x110] sm:$0xff]
        %v2297 = vld [vmem:[%s2261 + $0x118] sm:$0xff]
        %v2298 = vld [vmem:[%s2261 + $0x120] sm:$0xff]
        %v2299 = vld [vmem:[%s2261 + $0x128] sm:$0xff]
        %v2300 = vld [vmem:[%s2261 + $0x130] sm:$0xff]
        %v2301 = vld [vmem:[%s2261 + $0x138] sm:$0xff]
        %v2302 = vld [vmem:[%s2261 + $0x140] sm:$0xff]
        %v2303 = vld [vmem:[%s2261 + $0x148] sm:$0xff]
        %v2304 = vld [vmem:[%s2261 + $0x150] sm:$0xff]
        %v2305 = vld [vmem:[%s2261 + $0x158] sm:$0xff]
        %v2306 = vld [vmem:[%s2261 + $0x160] sm:$0xff]
        %v2307 = vld [vmem:[%s2261 + $0x168] sm:$0xff]
        %v2308 = vld [vmem:[%s2261 + $0x170] sm:$0xff]
        %v2309 = vld [vmem:[%s2261 + $0x178] sm:$0xff]
        %v2310 = vld [vmem:[%s2261 + $0x180] sm:$0xff]
        %v2311 = vld [vmem:[%s2261 + $0x188] sm:$0xff]
        %v2312 = vld [vmem:[%s2261 + $0x190] sm:$0xff]
        %v2313 = vld [vmem:[%s2261 + $0x198] sm:$0xff]
        %v2314 = vld [vmem:[%s2261 + $0x1a0] sm:$0xff]
        %v2315 = vld [vmem:[%s2261 + $0x1a8] sm:$0xff]
        %v2316 = vld [vmem:[%s2261 + $0x1b0] sm:$0xff]
        %v2317 = vld [vmem:[%s2261 + $0x1b8] sm:$0xff]
        %v2318 = vld [vmem:[%s2261 + $0x1c0] sm:$0xff]
        %v2319 = vld [vmem:[%s2261 + $0x1c8] sm:$0xff]
        %v2320 = vld [vmem:[%s2261 + $0x1d0] sm:$0xff]
        %v2321 = vld [vmem:[%s2261 + $0x1d8] sm:$0xff]
        %v2322 = vld [vmem:[%s2261 + $0x1e0] sm:$0xff]
        %v2323 = vld [vmem:[%s2261 + $0x1e8] sm:$0xff]
        %v2324 = vld [vmem:[%s2261 + $0x1f0] sm:$0xff]
        %v2325 = vld [vmem:[%s2261 + $0x1f8] sm:$0xff]
        %s2326 = scalar_lea.vmem %s4, 4
        %v2327 = vld [vmem:[%s2326] sm:$0xf]
        %v2329 = vlaneseq
        %v2330 = vshrl.u32 %v2329, 7
        %v2331 = vsub.s32 0, %v2330
        %v2332 = vrot.slane %v2327, %v2331
        %v2333 = vlaneseq
        %v2334 = vshrl.u32 %v2333, 7
        %v2335 = vsub.s32 1, %v2334
        %v2336 = vrot.slane %v2327, %v2335
        %v2337 = vlaneseq
        %v2338 = vshrl.u32 %v2337, 7
        %v2339 = vsub.s32 2, %v2338
        %v2340 = vrot.slane %v2327, %v2339
        %v2341 = vlaneseq
        %v2342 = vshrl.u32 %v2341, 7
        %v2343 = vsub.s32 3, %v2342
        %v2344 = vrot.slane %v2327, %v2343
        %2349 = vmatprep.subr.mxu0 %v2323
        %2350 = vmatpush1.msra.mxu0 %v2322
        %2351 = vmatprep.subr.mxu0 %v2319
        %2352 = vmatpush1.msra.mxu0 %v2318
        %2353 = vmatprep.subr.mxu0 %v2315
        %2354 = vmatpush1.msra.mxu0 %v2314
        %2355 = vmatprep.subr.mxu0 %v2311
        %2356 = vmatpush1.msra.mxu0 %v2310
        %2357 = vmatprep.subr.mxu0 %v2307
        %2358 = vmatpush1.msra.mxu0 %v2306
        %2359 = vmatprep.subr.mxu0 %v2303
        %2360 = vmatpush1.msra.mxu0 %v2302
        %2361 = vmatprep.subr.mxu0 %v2299
        %2362 = vmatpush1.msra.mxu0 %v2298
        %2363 = vmatprep.subr.mxu0 %v2295
        %2364 = vmatpush1.msra.mxu0 %v2294
        %2365 = vmatprep.subr.mxu0 %v2291
        %2366 = vmatpush1.msra.mxu0 %v2290
        %2367 = vmatprep.subr.mxu0 %v2287
        %2368 = vmatpush1.msra.mxu0 %v2286
        %2369 = vmatprep.subr.mxu0 %v2283
        %2370 = vmatpush1.msra.mxu0 %v2282
        %2371 = vmatprep.subr.mxu0 %v2279
        %2372 = vmatpush1.msra.mxu0 %v2278
        %2373 = vmatprep.subr.mxu0 %v2275
        %2374 = vmatpush1.msra.mxu0 %v2274
        %2375 = vmatprep.subr.mxu0 %v2271
        %2376 = vmatpush1.msra.mxu0 %v2270
        %2377 = vmatprep.subr.mxu0 %v2267
        %2378 = vmatpush1.msra.mxu0 %v2266
        %2379 = vmatprep.subr.mxu0 %v2263
        %2380 = vmatpush1.msra.mxu0 %v2262
        %2381 = vmatprep.subr.mxu0 0.0
        %2382 = vmatpush2.msra.mxu0 0.0
        %2383 = vmatprep.subr.mxu0 0.0
        %2384 = vmatpush2.msra.mxu0 0.0
        %2385 = vmatprep.subr.mxu0 0.0
        %2386 = vmatpush2.msra.mxu0 0.0
        %2387 = vmatprep.subr.mxu0 0.0
        %2388 = vmatpush2.msra.mxu0 0.0
        %2389 = vmatprep.subr.mxu0 0.0
        %2390 = vmatpush2.msra.mxu0 0.0
        %2391 = vmatprep.subr.mxu0 0.0
        %2392 = vmatpush2.msra.mxu0 0.0
        %2393 = vmatprep.subr.mxu0 0.0
        %2394 = vmatpush2.msra.mxu0 0.0
        %2395 = vmatprep.subr.mxu0 0.0
        %2396 = vmatpush2.msra.mxu0 0.0
        %2397 = vmatprep.subr.mxu0 0.0
        %2398 = vmatpush2.msra.mxu0 0.0
        %2399 = vmatprep.subr.mxu0 0.0
        %2400 = vmatpush2.msra.mxu0 0.0
        %2401 = vmatprep.subr.mxu0 0.0
        %2402 = vmatpush2.msra.mxu0 0.0
        %2403 = vmatprep.subr.mxu0 0.0
        %2404 = vmatpush2.msra.mxu0 0.0
        %2405 = vmatprep.subr.mxu0 0.0
        %2406 = vmatpush2.msra.mxu0 0.0
        %2407 = vmatprep.subr.mxu0 0.0
        %2408 = vmatpush2.msra.mxu0 0.0
        %2409 = vmatprep.subr.mxu0 0.0
        %2410 = vmatpush2.msra.mxu0 0.0
        %2411 = vmatprep.subr.mxu0 0.0
        %2412 = vmatpush2.msra.mxu0 0.0
        %2413 = vmatprep.mubr.f32.mxu0 0.0
        %2414 = vmatmul.mubr.f32.gmra.mxu0 %v2253
        %v2415 = vpop.f32.mrf.mxu0
        %v2416 = vadd.f32 %v2332, %v2415
        %v2417 = vpop.f32.mrf.mxu0
        %v2418 = vadd.f32 %v2336, %v2417
        %2419 = vmatprep.mubr.f32.mxu0 0.0
        %2420 = vmatmul.mubr.f32.gmra.mxu0 %v2254
        %v2421 = vpop.f32.mrf.mxu0
        %v2422 = vadd.f32 %v2332, %v2421
        %v2423 = vpop.f32.mrf.mxu0
        %v2424 = vadd.f32 %v2336, %v2423
        %2425 = vmatprep.mubr.f32.mxu0 0.0
        %2426 = vmatmul.mubr.f32.gmra.mxu0 %v2255
        %v2427 = vpop.f32.mrf.mxu0
        %v2428 = vadd.f32 %v2332, %v2427
        %v2429 = vpop.f32.mrf.mxu0
        %v2430 = vadd.f32 %v2336, %v2429
        %2431 = vmatprep.mubr.f32.mxu0 0.0
        %2432 = vmatmul.mubr.f32.gmra.mxu0 %v2256
        %v2433 = vpop.f32.mrf.mxu0
        %v2434 = vadd.f32 %v2332, %v2433
        %v2435 = vpop.f32.mrf.mxu0
        %v2436 = vadd.f32 %v2336, %v2435
        %2437 = vmatprep.mubr.f32.mxu0 0.0
        %2438 = vmatmul.mubr.f32.gmra.mxu0 %v2257
        %v2439 = vpop.f32.mrf.mxu0
        %v2440 = vadd.f32 %v2332, %v2439
        %v2441 = vpop.f32.mrf.mxu0
        %v2442 = vadd.f32 %v2336, %v2441
        %2443 = vmatprep.mubr.f32.mxu0 0.0
        %2444 = vmatmul.mubr.f32.gmra.mxu0 %v2258
        %v2445 = vpop.f32.mrf.mxu0
        %v2446 = vadd.f32 %v2332, %v2445
        %v2447 = vpop.f32.mrf.mxu0
        %v2448 = vadd.f32 %v2336, %v2447
        %2449 = vmatprep.mubr.f32.mxu0 0.0
        %2450 = vmatmul.mubr.f32.gmra.mxu0 %v2259
        %v2451 = vpop.f32.mrf.mxu0
        %v2452 = vadd.f32 %v2332, %v2451
        %v2453 = vpop.f32.mrf.mxu0
        %v2454 = vadd.f32 %v2336, %v2453
        %2455 = vmatprep.mubr.f32.mxu0 0.0
        %2456 = vmatmul.mubr.f32.gmra.mxu0 %v2260
        %v2457 = vpop.f32.mrf.mxu0
        %v2458 = vadd.f32 %v2332, %v2457
        %v2459 = vpop.f32.mrf.mxu0
        %v2460 = vadd.f32 %v2336, %v2459
        %2461 = vdwg.mxu0
        %2462 = vmatprep.subr.mxu0 %v2325
        %2463 = vmatpush1.msra.mxu0 %v2324
        %2464 = vmatprep.subr.mxu0 %v2321
        %2465 = vmatpush1.msra.mxu0 %v2320
        %2466 = vmatprep.subr.mxu0 %v2317
        %2467 = vmatpush1.msra.mxu0 %v2316
        %2468 = vmatprep.subr.mxu0 %v2313
        %2469 = vmatpush1.msra.mxu0 %v2312
        %2470 = vmatprep.subr.mxu0 %v2309
        %2471 = vmatpush1.msra.mxu0 %v2308
        %2472 = vmatprep.subr.mxu0 %v2305
        %2473 = vmatpush1.msra.mxu0 %v2304
        %2474 = vmatprep.subr.mxu0 %v2301
        %2475 = vmatpush1.msra.mxu0 %v2300
        %2476 = vmatprep.subr.mxu0 %v2297
        %2477 = vmatpush1.msra.mxu0 %v2296
        %2478 = vmatprep.subr.mxu0 %v2293
        %2479 = vmatpush1.msra.mxu0 %v2292
        %2480 = vmatprep.subr.mxu0 %v2289
        %2481 = vmatpush1.msra.mxu0 %v2288
        %2482 = vmatprep.subr.mxu0 %v2285
        %2483 = vmatpush1.msra.mxu0 %v2284
        %2484 = vmatprep.subr.mxu0 %v2281
        %2485 = vmatpush1.msra.mxu0 %v2280
        %2486 = vmatprep.subr.mxu0 %v2277
        %2487 = vmatpush1.msra.mxu0 %v2276
        %2488 = vmatprep.subr.mxu0 %v2273
        %2489 = vmatpush1.msra.mxu0 %v2272
        %2490 = vmatprep.subr.mxu0 %v2269
        %2491 = vmatpush1.msra.mxu0 %v2268
        %2492 = vmatprep.subr.mxu0 %v2265
        %2493 = vmatpush1.msra.mxu0 %v2264
        %2494 = vmatprep.subr.mxu0 0.0
        %2495 = vmatpush2.msra.mxu0 0.0
        %2496 = vmatprep.subr.mxu0 0.0
        %2497 = vmatpush2.msra.mxu0 0.0
        %2498 = vmatprep.subr.mxu0 0.0
        %2499 = vmatpush2.msra.mxu0 0.0
        %2500 = vmatprep.subr.mxu0 0.0
        %2501 = vmatpush2.msra.mxu0 0.0
        %2502 = vmatprep.subr.mxu0 0.0
        %2503 = vmatpush2.msra.mxu0 0.0
        %2504 = vmatprep.subr.mxu0 0.0
        %2505 = vmatpush2.msra.mxu0 0.0
        %2506 = vmatprep.subr.mxu0 0.0
        %2507 = vmatpush2.msra.mxu0 0.0
        %2508 = vmatprep.subr.mxu0 0.0
        %2509 = vmatpush2.msra.mxu0 0.0
        %2510 = vmatprep.subr.mxu0 0.0
        %2511 = vmatpush2.msra.mxu0 0.0
        %2512 = vmatprep.subr.mxu0 0.0
        %2513 = vmatpush2.msra.mxu0 0.0
        %2514 = vmatprep.subr.mxu0 0.0
        %2515 = vmatpush2.msra.mxu0 0.0
        %2516 = vmatprep.subr.mxu0 0.0
        %2517 = vmatpush2.msra.mxu0 0.0
        %2518 = vmatprep.subr.mxu0 0.0
        %2519 = vmatpush2.msra.mxu0 0.0
        %2520 = vmatprep.subr.mxu0 0.0
        %2521 = vmatpush2.msra.mxu0 0.0
        %2522 = vmatprep.subr.mxu0 0.0
        %2523 = vmatpush2.msra.mxu0 0.0
        %2524 = vmatprep.subr.mxu0 0.0
        %2525 = vmatpush2.msra.mxu0 0.0
        %2526 = vmatprep.mubr.f32.mxu0 0.0
        %2527 = vmatmul.mubr.f32.gmra.mxu0 %v2253
        %v2528 = vpop.f32.mrf.mxu0
        %v2529 = vadd.f32 %v2340, %v2528
        %v2530 = vpop.f32.mrf.mxu0
        %v2531 = vadd.f32 %v2344, %v2530
        %2532 = vmatprep.mubr.f32.mxu0 0.0
        %2533 = vmatmul.mubr.f32.gmra.mxu0 %v2254
        %v2534 = vpop.f32.mrf.mxu0
        %v2535 = vadd.f32 %v2340, %v2534
        %v2536 = vpop.f32.mrf.mxu0
        %v2537 = vadd.f32 %v2344, %v2536
        %2538 = vmatprep.mubr.f32.mxu0 0.0
        %2539 = vmatmul.mubr.f32.gmra.mxu0 %v2255
        %v2540 = vpop.f32.mrf.mxu0
        %v2541 = vadd.f32 %v2340, %v2540
        %v2542 = vpop.f32.mrf.mxu0
        %v2543 = vadd.f32 %v2344, %v2542
        %2544 = vmatprep.mubr.f32.mxu0 0.0
        %2545 = vmatmul.mubr.f32.gmra.mxu0 %v2256
        %v2546 = vpop.f32.mrf.mxu0
        %v2547 = vadd.f32 %v2340, %v2546
        %v2548 = vpop.f32.mrf.mxu0
        %v2549 = vadd.f32 %v2344, %v2548
        %2550 = vmatprep.mubr.f32.mxu0 0.0
        %2551 = vmatmul.mubr.f32.gmra.mxu0 %v2257
        %v2552 = vpop.f32.mrf.mxu0
        %v2553 = vadd.f32 %v2340, %v2552
        %v2554 = vpop.f32.mrf.mxu0
        %v2555 = vadd.f32 %v2344, %v2554
        %2556 = vmatprep.mubr.f32.mxu0 0.0
        %2557 = vmatmul.mubr.f32.gmra.mxu0 %v2258
        %v2558 = vpop.f32.mrf.mxu0
        %v2559 = vadd.f32 %v2340, %v2558
        %v2560 = vpop.f32.mrf.mxu0
        %v2561 = vadd.f32 %v2344, %v2560
        %2562 = vmatprep.mubr.f32.mxu0 0.0
        %2563 = vmatmul.mubr.f32.gmra.mxu0 %v2259
        %v2564 = vpop.f32.mrf.mxu0
        %v2565 = vadd.f32 %v2340, %v2564
        %v2566 = vpop.f32.mrf.mxu0
        %v2567 = vadd.f32 %v2344, %v2566
        %2568 = vmatprep.mubr.f32.mxu0 0.0
        %2569 = vmatmul.mubr.f32.gmra.mxu0 %v2260
        %v2570 = vpop.f32.mrf.mxu0
        %v2571 = vadd.f32 %v2340, %v2570
        %v2572 = vpop.f32.mrf.mxu0
        %v2573 = vadd.f32 %v2344, %v2572
        %2574 = vdwg.mxu0
        %2575 = vst [vmem:[#allocation3] sm:$0xff] %v2416
        %2576 = vst [vmem:[#allocation3 + $0x8] sm:$0xff] %v2418
        %2577 = vst [vmem:[#allocation3 + $0x10] sm:$0xff] %v2529
        %2578 = vst [vmem:[#allocation3 + $0x18] sm:$0xff] %v2531
        %2579 = vst [vmem:[#allocation3 + $0x20] sm:$0xff] %v2422
        %2580 = vst [vmem:[#allocation3 + $0x28] sm:$0xff] %v2424
        %2581 = vst [vmem:[#allocation3 + $0x30] sm:$0xff] %v2535
        %2582 = vst [vmem:[#allocation3 + $0x38] sm:$0xff] %v2537
        %2583 = vst [vmem:[#allocation3 + $0x40] sm:$0xff] %v2428
        %2584 = vst [vmem:[#allocation3 + $0x48] sm:$0xff] %v2430
        %2585 = vst [vmem:[#allocation3 + $0x50] sm:$0xff] %v2541
        %2586 = vst [vmem:[#allocation3 + $0x58] sm:$0xff] %v2543
        %2587 = vst [vmem:[#allocation3 + $0x60] sm:$0xff] %v2434
        %2588 = vst [vmem:[#allocation3 + $0x68] sm:$0xff] %v2436
        %2589 = vst [vmem:[#allocation3 + $0x70] sm:$0xff] %v2547
        %2590 = vst [vmem:[#allocation3 + $0x78] sm:$0xff] %v2549
        %2591 = vst [vmem:[#allocation3 + $0x80] sm:$0xff] %v2440
        %2592 = vst [vmem:[#allocation3 + $0x88] sm:$0xff] %v2442
        %2593 = vst [vmem:[#allocation3 + $0x90] sm:$0xff] %v2553
        %2594 = vst [vmem:[#allocation3 + $0x98] sm:$0xff] %v2555
        %2595 = vst [vmem:[#allocation3 + $0xa0] sm:$0xff] %v2446
        %2596 = vst [vmem:[#allocation3 + $0xa8] sm:$0xff] %v2448
        %2597 = vst [vmem:[#allocation3 + $0xb0] sm:$0xff] %v2559
        %2598 = vst [vmem:[#allocation3 + $0xb8] sm:$0xff] %v2561
        %2599 = vst [vmem:[#allocation3 + $0xc0] sm:$0xff] %v2452
        %2600 = vst [vmem:[#allocation3 + $0xc8] sm:$0xff] %v2454
        %2601 = vst [vmem:[#allocation3 + $0xd0] sm:$0xff] %v2565
        %2602 = vst [vmem:[#allocation3 + $0xd8] sm:$0xff] %v2567
        %2603 = vst [vmem:[#allocation3 + $0xe0] sm:$0xff] %v2458
        %2604 = vst [vmem:[#allocation3 + $0xe8] sm:$0xff] %v2460
        %2605 = vst [vmem:[#allocation3 + $0xf0] sm:$0xff] %v2571
        %2606 = vst [vmem:[#allocation3 + $0xf8] sm:$0xff] %v2573
        %s2607 = scalar_lea.vmem %s3, 512
        %v2608 = vld [vmem:[%s2607] sm:$0xff]
        %v2609 = vld [vmem:[%s2607 + $0x8] sm:$0xff]
        %v2610 = vld [vmem:[%s2607 + $0x10] sm:$0xff]
        %v2611 = vld [vmem:[%s2607 + $0x18] sm:$0xff]
        %v2612 = vld [vmem:[%s2607 + $0x20] sm:$0xff]
        %v2613 = vld [vmem:[%s2607 + $0x28] sm:$0xff]
        %v2614 = vld [vmem:[%s2607 + $0x30] sm:$0xff]
        %v2615 = vld [vmem:[%s2607 + $0x38] sm:$0xff]
        %v2616 = vld [vmem:[%s2607 + $0x40] sm:$0xff]
        %v2617 = vld [vmem:[%s2607 + $0x48] sm:$0xff]
        %v2618 = vld [vmem:[%s2607 + $0x50] sm:$0xff]
        %v2619 = vld [vmem:[%s2607 + $0x58] sm:$0xff]
        %v2620 = vld [vmem:[%s2607 + $0x60] sm:$0xff]
        %v2621 = vld [vmem:[%s2607 + $0x68] sm:$0xff]
        %v2622 = vld [vmem:[%s2607 + $0x70] sm:$0xff]
        %v2623 = vld [vmem:[%s2607 + $0x78] sm:$0xff]
        %v2624 = vld [vmem:[%s2607 + $0x80] sm:$0xff]
        %v2625 = vld [vmem:[%s2607 + $0x88] sm:$0xff]
        %v2626 = vld [vmem:[%s2607 + $0x90] sm:$0xff]
        %v2627 = vld [vmem:[%s2607 + $0x98] sm:$0xff]
        %v2628 = vld [vmem:[%s2607 + $0xa0] sm:$0xff]
        %v2629 = vld [vmem:[%s2607 + $0xa8] sm:$0xff]
        %v2630 = vld [vmem:[%s2607 + $0xb0] sm:$0xff]
        %v2631 = vld [vmem:[%s2607 + $0xb8] sm:$0xff]
        %v2632 = vld [vmem:[%s2607 + $0xc0] sm:$0xff]
        %v2633 = vld [vmem:[%s2607 + $0xc8] sm:$0xff]
        %v2634 = vld [vmem:[%s2607 + $0xd0] sm:$0xff]
        %v2635 = vld [vmem:[%s2607 + $0xd8] sm:$0xff]
        %v2636 = vld [vmem:[%s2607 + $0xe0] sm:$0xff]
        %v2637 = vld [vmem:[%s2607 + $0xe8] sm:$0xff]
        %v2638 = vld [vmem:[%s2607 + $0xf0] sm:$0xff]
        %v2639 = vld [vmem:[%s2607 + $0xf8] sm:$0xff]
        %v2640 = vld [vmem:[%s2607 + $0x100] sm:$0xff]
        %v2641 = vld [vmem:[%s2607 + $0x108] sm:$0xff]
        %v2642 = vld [vmem:[%s2607 + $0x110] sm:$0xff]
        %v2643 = vld [vmem:[%s2607 + $0x118] sm:$0xff]
        %v2644 = vld [vmem:[%s2607 + $0x120] sm:$0xff]
        %v2645 = vld [vmem:[%s2607 + $0x128] sm:$0xff]
        %v2646 = vld [vmem:[%s2607 + $0x130] sm:$0xff]
        %v2647 = vld [vmem:[%s2607 + $0x138] sm:$0xff]
        %v2648 = vld [vmem:[%s2607 + $0x140] sm:$0xff]
        %v2649 = vld [vmem:[%s2607 + $0x148] sm:$0xff]
        %v2650 = vld [vmem:[%s2607 + $0x150] sm:$0xff]
        %v2651 = vld [vmem:[%s2607 + $0x158] sm:$0xff]
        %v2652 = vld [vmem:[%s2607 + $0x160] sm:$0xff]
        %v2653 = vld [vmem:[%s2607 + $0x168] sm:$0xff]
        %v2654 = vld [vmem:[%s2607 + $0x170] sm:$0xff]
        %v2655 = vld [vmem:[%s2607 + $0x178] sm:$0xff]
        %v2656 = vld [vmem:[%s2607 + $0x180] sm:$0xff]
        %v2657 = vld [vmem:[%s2607 + $0x188] sm:$0xff]
        %v2658 = vld [vmem:[%s2607 + $0x190] sm:$0xff]
        %v2659 = vld [vmem:[%s2607 + $0x198] sm:$0xff]
        %v2660 = vld [vmem:[%s2607 + $0x1a0] sm:$0xff]
        %v2661 = vld [vmem:[%s2607 + $0x1a8] sm:$0xff]
        %v2662 = vld [vmem:[%s2607 + $0x1b0] sm:$0xff]
        %v2663 = vld [vmem:[%s2607 + $0x1b8] sm:$0xff]
        %v2664 = vld [vmem:[%s2607 + $0x1c0] sm:$0xff]
        %v2665 = vld [vmem:[%s2607 + $0x1c8] sm:$0xff]
        %v2666 = vld [vmem:[%s2607 + $0x1d0] sm:$0xff]
        %v2667 = vld [vmem:[%s2607 + $0x1d8] sm:$0xff]
        %v2668 = vld [vmem:[%s2607 + $0x1e0] sm:$0xff]
        %v2669 = vld [vmem:[%s2607 + $0x1e8] sm:$0xff]
        %v2670 = vld [vmem:[%s2607 + $0x1f0] sm:$0xff]
        %v2671 = vld [vmem:[%s2607 + $0x1f8] sm:$0xff]
        %v2672 = vld [vmem:[#allocation3] sm:$0xff]
        %v2673 = vld [vmem:[#allocation3 + $0x8] sm:$0xff]
        %v2674 = vld [vmem:[#allocation3 + $0x10] sm:$0xff]
        %v2675 = vld [vmem:[#allocation3 + $0x18] sm:$0xff]
        %2676 = vmatprep.subr.mxu0 %v2669
        %2677 = vmatpush1.msra.mxu0 %v2668
        %2678 = vmatprep.subr.mxu0 %v2665
        %2679 = vmatpush1.msra.mxu0 %v2664
        %2680 = vmatprep.subr.mxu0 %v2661
        %2681 = vmatpush1.msra.mxu0 %v2660
        %2682 = vmatprep.subr.mxu0 %v2657
        %2683 = vmatpush1.msra.mxu0 %v2656
        %2684 = vmatprep.subr.mxu0 %v2653
        %2685 = vmatpush1.msra.mxu0 %v2652
        %2686 = vmatprep.subr.mxu0 %v2649
        %2687 = vmatpush1.msra.mxu0 %v2648
        %2688 = vmatprep.subr.mxu0 %v2645
        %2689 = vmatpush1.msra.mxu0 %v2644
        %2690 = vmatprep.subr.mxu0 %v2641
        %2691 = vmatpush1.msra.mxu0 %v2640
        %2692 = vmatprep.subr.mxu0 %v2637
        %2693 = vmatpush1.msra.mxu0 %v2636
        %2694 = vmatprep.subr.mxu0 %v2633
        %2695 = vmatpush1.msra.mxu0 %v2632
        %2696 = vmatprep.subr.mxu0 %v2629
        %2697 = vmatpush1.msra.mxu0 %v2628
        %2698 = vmatprep.subr.mxu0 %v2625
        %2699 = vmatpush1.msra.mxu0 %v2624
        %2700 = vmatprep.subr.mxu0 %v2621
        %2701 = vmatpush1.msra.mxu0 %v2620
        %2702 = vmatprep.subr.mxu0 %v2617
        %2703 = vmatpush1.msra.mxu0 %v2616
        %2704 = vmatprep.subr.mxu0 %v2613
        %2705 = vmatpush1.msra.mxu0 %v2612
        %2706 = vmatprep.subr.mxu0 %v2609
        %2707 = vmatpush1.msra.mxu0 %v2608
        %2708 = vmatprep.subr.mxu0 0.0
        %2709 = vmatpush2.msra.mxu0 0.0
        %2710 = vmatprep.subr.mxu0 0.0
        %2711 = vmatpush2.msra.mxu0 0.0
        %2712 = vmatprep.subr.mxu0 0.0
        %2713 = vmatpush2.msra.mxu0 0.0
        %2714 = vmatprep.subr.mxu0 0.0
        %2715 = vmatpush2.msra.mxu0 0.0
        %2716 = vmatprep.subr.mxu0 0.0
        %2717 = vmatpush2.msra.mxu0 0.0
        %2718 = vmatprep.subr.mxu0 0.0
        %2719 = vmatpush2.msra.mxu0 0.0
        %2720 = vmatprep.subr.mxu0 0.0
        %2721 = vmatpush2.msra.mxu0 0.0
        %2722 = vmatprep.subr.mxu0 0.0
        %2723 = vmatpush2.msra.mxu0 0.0
        %2724 = vmatprep.subr.mxu0 0.0
        %2725 = vmatpush2.msra.mxu0 0.0
        %2726 = vmatprep.subr.mxu0 0.0
        %2727 = vmatpush2.msra.mxu0 0.0
        %2728 = vmatprep.subr.mxu0 0.0
        %2729 = vmatpush2.msra.mxu0 0.0
        %2730 = vmatprep.subr.mxu0 0.0
        %2731 = vmatpush2.msra.mxu0 0.0
        %2732 = vmatprep.subr.mxu0 0.0
        %2733 = vmatpush2.msra.mxu0 0.0
        %2734 = vmatprep.subr.mxu0 0.0
        %2735 = vmatpush2.msra.mxu0 0.0
        %2736 = vmatprep.subr.mxu0 0.0
        %2737 = vmatpush2.msra.mxu0 0.0
        %2738 = vmatprep.subr.mxu0 0.0
        %2739 = vmatpush2.msra.mxu0 0.0
        %2740 = vmatprep.mubr.f32.mxu0 0.0
        %2741 = vmatmul.mubr.f32.gmra.mxu0 0.0
        %v2742 = vpop.f32.mrf.mxu0
        %v2743 = vadd.f32 0.0, %v2742
        %v2744 = vpop.f32.mrf.mxu0
        %v2745 = vadd.f32 0.0, %v2744
        %2746 = vdwg.mxu0
        %2747 = vmatprep.subr.mxu0 %v2671
        %2748 = vmatpush1.msra.mxu0 %v2670
        %2749 = vmatprep.subr.mxu0 %v2667
        %2750 = vmatpush1.msra.mxu0 %v2666
        %2751 = vmatprep.subr.mxu0 %v2663
        %2752 = vmatpush1.msra.mxu0 %v2662
        %2753 = vmatprep.subr.mxu0 %v2659
        %2754 = vmatpush1.msra.mxu0 %v2658
        %2755 = vmatprep.subr.mxu0 %v2655
        %2756 = vmatpush1.msra.mxu0 %v2654
        %2757 = vmatprep.subr.mxu0 %v2651
        %2758 = vmatpush1.msra.mxu0 %v2650
        %2759 = vmatprep.subr.mxu0 %v2647
        %2760 = vmatpush1.msra.mxu0 %v2646
        %2761 = vmatprep.subr.mxu0 %v2643
        %2762 = vmatpush1.msra.mxu0 %v2642
        %2763 = vmatprep.subr.mxu0 %v2639
        %2764 = vmatpush1.msra.mxu0 %v2638
        %2765 = vmatprep.subr.mxu0 %v2635
        %2766 = vmatpush1.msra.mxu0 %v2634
        %2767 = vmatprep.subr.mxu0 %v2631
        %2768 = vmatpush1.msra.mxu0 %v2630
        %2769 = vmatprep.subr.mxu0 %v2627
        %2770 = vmatpush1.msra.mxu0 %v2626
        %2771 = vmatprep.subr.mxu0 %v2623
        %2772 = vmatpush1.msra.mxu0 %v2622
        %2773 = vmatprep.subr.mxu0 %v2619
        %2774 = vmatpush1.msra.mxu0 %v2618
        %2775 = vmatprep.subr.mxu0 %v2615
        %2776 = vmatpush1.msra.mxu0 %v2614
        %2777 = vmatprep.subr.mxu0 %v2611
        %2778 = vmatpush1.msra.mxu0 %v2610
        %2779 = vmatprep.subr.mxu0 0.0
        %2780 = vmatpush2.msra.mxu0 0.0
        %2781 = vmatprep.subr.mxu0 0.0
        %2782 = vmatpush2.msra.mxu0 0.0
        %2783 = vmatprep.subr.mxu0 0.0
        %2784 = vmatpush2.msra.mxu0 0.0
        %2785 = vmatprep.subr.mxu0 0.0
        %2786 = vmatpush2.msra.mxu0 0.0
        %2787 = vmatprep.subr.mxu0 0.0
        %2788 = vmatpush2.msra.mxu0 0.0
        %2789 = vmatprep.subr.mxu0 0.0
        %2790 = vmatpush2.msra.mxu0 0.0
        %2791 = vmatprep.subr.mxu0 0.0
        %2792 = vmatpush2.msra.mxu0 0.0
        %2793 = vmatprep.subr.mxu0 0.0
        %2794 = vmatpush2.msra.mxu0 0.0
        %2795 = vmatprep.subr.mxu0 0.0
        %2796 = vmatpush2.msra.mxu0 0.0
        %2797 = vmatprep.subr.mxu0 0.0
        %2798 = vmatpush2.msra.mxu0 0.0
        %2799 = vmatprep.subr.mxu0 0.0
        %2800 = vmatpush2.msra.mxu0 0.0
        %2801 = vmatprep.subr.mxu0 0.0
        %2802 = vmatpush2.msra.mxu0 0.0
        %2803 = vmatprep.subr.mxu0 0.0
        %2804 = vmatpush2.msra.mxu0 0.0
        %2805 = vmatprep.subr.mxu0 0.0
        %2806 = vmatpush2.msra.mxu0 0.0
        %2807 = vmatprep.subr.mxu0 0.0
        %2808 = vmatpush2.msra.mxu0 0.0
        %2809 = vmatprep.subr.mxu0 0.0
        %2810 = vmatpush2.msra.mxu0 0.0
        %2811 = vmatprep.mubr.f32.mxu0 0.0
        %2812 = vmatmul.mubr.f32.gmra.mxu0 0.0
        %v2813 = vpop.f32.mrf.mxu0
        %v2814 = vadd.f32 0.0, %v2813
        %v2815 = vpop.f32.mrf.mxu0
        %v2816 = vadd.f32 0.0, %v2815
        %2817 = vdwg.mxu0
        %v2818 = vadd.f32 %v2672, %v2743
        %v2819 = vadd.f32 %v2673, %v2745
        %v2820 = vadd.f32 %v2674, %v2814
        %v2821 = vadd.f32 %v2675, %v2816
        %v2822 = vxor.u32 %v2818, 2147483648
        %v2823 = vmul.f32 %v2822, 1.442695
        %v2824 = vpow.pop %v2823
        %v2825 = vadd.f32 %v2824, 1.0
        %v2826 = vrcp.pop %v2825
        %v2827 = vmul.f32 1.0, %v2826
        %v2828 = vxor.u32 %v2819, 2147483648
        %v2829 = vmul.f32 %v2828, 1.442695
        %v2830 = vpow.pop %v2829
        %v2831 = vadd.f32 %v2830, 1.0
        %v2832 = vrcp.pop %v2831
        %v2833 = vmul.f32 1.0, %v2832
        %v2834 = vtanh.pop %v2820
        %v2835 = vxor.u32 %v2821, 2147483648
        %v2836 = vmul.f32 %v2835, 1.442695
        %v2837 = vpow.pop %v2836
        %v2838 = vadd.f32 %v2837, 1.0
        %v2839 = vrcp.pop %v2838
        %v2840 = vmul.f32 1.0, %v2839
        %v2841 = vmul.f32 %v2833, 0.0
        %v2842 = vmul.f32 %v2827, %v2834
        %v2843 = vadd.f32 %v2841, %v2842
        %v2844 = vtanh.pop %v2843
        %v2845 = vmul.f32 %v2840, %v2844
        %v2846 = vld [vmem:[%s387] sm:$0xff]
        %2848 = vset.pattern.permute.xlu0 0
        %2849 = vperm.xlu0 %2848, %v2846
        %v2850 = vpop.permute.xlu0 %2849
        %v2852 = vadd.f32 %v2845, %v2850
        %v2853 = vld [vmem:[%s1014] sm:$0xff]
        %v2854 = vld [vmem:[%s1014 + $0x8] sm:$0xff]
        %v2855 = vld [vmem:[%s1014 + $0x10] sm:$0xff]
        %v2856 = vld [vmem:[%s1014 + $0x18] sm:$0xff]
        %2857 = vmatprep.subr.mxu0 %v2669
        %2858 = vmatpush1.msra.mxu0 %v2668
        %2859 = vmatprep.subr.mxu0 %v2665
        %2860 = vmatpush1.msra.mxu0 %v2664
        %2861 = vmatprep.subr.mxu0 %v2661
        %2862 = vmatpush1.msra.mxu0 %v2660
        %2863 = vmatprep.subr.mxu0 %v2657
        %2864 = vmatpush1.msra.mxu0 %v2656
        %2865 = vmatprep.subr.mxu0 %v2653
        %2866 = vmatpush1.msra.mxu0 %v2652
        %2867 = vmatprep.subr.mxu0 %v2649
        %2868 = vmatpush1.msra.mxu0 %v2648
        %2869 = vmatprep.subr.mxu0 %v2645
        %2870 = vmatpush1.msra.mxu0 %v2644
        %2871 = vmatprep.subr.mxu0 %v2641
        %2872 = vmatpush1.msra.mxu0 %v2640
        %2873 = vmatprep.subr.mxu0 %v2637
        %2874 = vmatpush1.msra.mxu0 %v2636
        %2875 = vmatprep.subr.mxu0 %v2633
        %2876 = vmatpush1.msra.mxu0 %v2632
        %2877 = vmatprep.subr.mxu0 %v2629
        %2878 = vmatpush1.msra.mxu0 %v2628
        %2879 = vmatprep.subr.mxu0 %v2625
        %2880 = vmatpush1.msra.mxu0 %v2624
        %2881 = vmatprep.subr.mxu0 %v2621
        %2882 = vmatpush1.msra.mxu0 %v2620
        %2883 = vmatprep.subr.mxu0 %v2617
        %2884 = vmatpush1.msra.mxu0 %v2616
        %2885 = vmatprep.subr.mxu0 %v2613
        %2886 = vmatpush1.msra.mxu0 %v2612
        %2887 = vmatprep.subr.mxu0 %v2609
        %2888 = vmatpush1.msra.mxu0 %v2608
        %2889 = vmatprep.subr.mxu0 0.0
        %2890 = vmatpush2.msra.mxu0 0.0
        %2891 = vmatprep.subr.mxu0 0.0
        %2892 = vmatpush2.msra.mxu0 0.0
        %2893 = vmatprep.subr.mxu0 0.0
        %2894 = vmatpush2.msra.mxu0 0.0
        %2895 = vmatprep.subr.mxu0 0.0
        %2896 = vmatpush2.msra.mxu0 0.0
        %2897 = vmatprep.subr.mxu0 0.0
        %2898 = vmatpush2.msra.mxu0 0.0
        %2899 = vmatprep.subr.mxu0 0.0
        %2900 = vmatpush2.msra.mxu0 0.0
        %2901 = vmatprep.subr.mxu0 0.0
        %2902 = vmatpush2.msra.mxu0 0.0
        %2903 = vmatprep.subr.mxu0 0.0
        %2904 = vmatpush2.msra.mxu0 0.0
        %2905 = vmatprep.subr.mxu0 0.0
        %2906 = vmatpush2.msra.mxu0 0.0
        %2907 = vmatprep.subr.mxu0 0.0
        %2908 = vmatpush2.msra.mxu0 0.0
        %2909 = vmatprep.subr.mxu0 0.0
        %2910 = vmatpush2.msra.mxu0 0.0
        %2911 = vmatprep.subr.mxu0 0.0
        %2912 = vmatpush2.msra.mxu0 0.0
        %2913 = vmatprep.subr.mxu0 0.0
        %2914 = vmatpush2.msra.mxu0 0.0
        %2915 = vmatprep.subr.mxu0 0.0
        %2916 = vmatpush2.msra.mxu0 0.0
        %2917 = vmatprep.subr.mxu0 0.0
        %2918 = vmatpush2.msra.mxu0 0.0
        %2919 = vmatprep.subr.mxu0 0.0
        %2920 = vmatpush2.msra.mxu0 0.0
        %2921 = vmatprep.mubr.f32.mxu0 0.0
        %2922 = vmatmul.mubr.f32.gmra.mxu0 %v2845
        %v2923 = vpop.f32.mrf.mxu0
        %v2924 = vadd.f32 0.0, %v2923
        %v2925 = vpop.f32.mrf.mxu0
        %v2926 = vadd.f32 0.0, %v2925
        %2927 = vdwg.mxu0
        %2928 = vmatprep.subr.mxu0 %v2671
        %2929 = vmatpush1.msra.mxu0 %v2670
        %2930 = vmatprep.subr.mxu0 %v2667
        %2931 = vmatpush1.msra.mxu0 %v2666
        %2932 = vmatprep.subr.mxu0 %v2663
        %2933 = vmatpush1.msra.mxu0 %v2662
        %2934 = vmatprep.subr.mxu0 %v2659
        %2935 = vmatpush1.msra.mxu0 %v2658
        %2936 = vmatprep.subr.mxu0 %v2655
        %2937 = vmatpush1.msra.mxu0 %v2654
        %2938 = vmatprep.subr.mxu0 %v2651
        %2939 = vmatpush1.msra.mxu0 %v2650
        %2940 = vmatprep.subr.mxu0 %v2647
        %2941 = vmatpush1.msra.mxu0 %v2646
        %2942 = vmatprep.subr.mxu0 %v2643
        %2943 = vmatpush1.msra.mxu0 %v2642
        %2944 = vmatprep.subr.mxu0 %v2639
        %2945 = vmatpush1.msra.mxu0 %v2638
        %2946 = vmatprep.subr.mxu0 %v2635
        %2947 = vmatpush1.msra.mxu0 %v2634
        %2948 = vmatprep.subr.mxu0 %v2631
        %2949 = vmatpush1.msra.mxu0 %v2630
        %2950 = vmatprep.subr.mxu0 %v2627
        %2951 = vmatpush1.msra.mxu0 %v2626
        %2952 = vmatprep.subr.mxu0 %v2623
        %2953 = vmatpush1.msra.mxu0 %v2622
        %2954 = vmatprep.subr.mxu0 %v2619
        %2955 = vmatpush1.msra.mxu0 %v2618
        %2956 = vmatprep.subr.mxu0 %v2615
        %2957 = vmatpush1.msra.mxu0 %v2614
        %2958 = vmatprep.subr.mxu0 %v2611
        %2959 = vmatpush1.msra.mxu0 %v2610
        %2960 = vmatprep.subr.mxu0 0.0
        %2961 = vmatpush2.msra.mxu0 0.0
        %2962 = vmatprep.subr.mxu0 0.0
        %2963 = vmatpush2.msra.mxu0 0.0
        %2964 = vmatprep.subr.mxu0 0.0
        %2965 = vmatpush2.msra.mxu0 0.0
        %2966 = vmatprep.subr.mxu0 0.0
        %2967 = vmatpush2.msra.mxu0 0.0
        %2968 = vmatprep.subr.mxu0 0.0
        %2969 = vmatpush2.msra.mxu0 0.0
        %2970 = vmatprep.subr.mxu0 0.0
        %2971 = vmatpush2.msra.mxu0 0.0
        %2972 = vmatprep.subr.mxu0 0.0
        %2973 = vmatpush2.msra.mxu0 0.0
        %2974 = vmatprep.subr.mxu0 0.0
        %2975 = vmatpush2.msra.mxu0 0.0
        %2976 = vmatprep.subr.mxu0 0.0
        %2977 = vmatpush2.msra.mxu0 0.0
        %2978 = vmatprep.subr.mxu0 0.0
        %2979 = vmatpush2.msra.mxu0 0.0
        %2980 = vmatprep.subr.mxu0 0.0
        %2981 = vmatpush2.msra.mxu0 0.0
        %2982 = vmatprep.subr.mxu0 0.0
        %2983 = vmatpush2.msra.mxu0 0.0
        %2984 = vmatprep.subr.mxu0 0.0
        %2985 = vmatpush2.msra.mxu0 0.0
        %2986 = vmatprep.subr.mxu0 0.0
        %2987 = vmatpush2.msra.mxu0 0.0
        %2988 = vmatprep.subr.mxu0 0.0
        %2989 = vmatpush2.msra.mxu0 0.0
        %2990 = vmatprep.subr.mxu0 0.0
        %2991 = vmatpush2.msra.mxu0 0.0
        %2992 = vmatprep.mubr.f32.mxu0 0.0
        %2993 = vmatmul.mubr.f32.gmra.mxu0 %v2845
        %v2994 = vpop.f32.mrf.mxu0
        %v2995 = vadd.f32 0.0, %v2994
        %v2996 = vpop.f32.mrf.mxu0
        %v2997 = vadd.f32 0.0, %v2996
        %2998 = vdwg.mxu0
        %v2999 = vadd.f32 %v2853, %v2924
        %v3000 = vadd.f32 %v2854, %v2926
        %v3001 = vadd.f32 %v2855, %v2995
        %v3002 = vadd.f32 %v2856, %v2997
        %v3003 = vxor.u32 %v2999, 2147483648
        %v3004 = vmul.f32 %v3003, 1.442695
        %v3005 = vpow.pop %v3004
        %v3006 = vadd.f32 %v3005, 1.0
        %v3007 = vrcp.pop %v3006
        %v3008 = vmul.f32 1.0, %v3007
        %v3009 = vxor.u32 %v3000, 2147483648
        %v3010 = vmul.f32 %v3009, 1.442695
        %v3011 = vpow.pop %v3010
        %v3012 = vadd.f32 %v3011, 1.0
        %v3013 = vrcp.pop %v3012
        %v3014 = vmul.f32 1.0, %v3013
        %v3015 = vtanh.pop %v3001
        %v3016 = vxor.u32 %v3002, 2147483648
        %v3017 = vmul.f32 %v3016, 1.442695
        %v3018 = vpow.pop %v3017
        %v3019 = vadd.f32 %v3018, 1.0
        %v3020 = vrcp.pop %v3019
        %v3021 = vmul.f32 1.0, %v3020
        %v3022 = vmul.f32 %v3014, %v2843
        %v3023 = vmul.f32 %v3008, %v3015
        %v3024 = vadd.f32 %v3022, %v3023
        %v3025 = vtanh.pop %v3024
        %v3026 = vmul.f32 %v3021, %v3025
        %s3027 = scalar_lea.vmem %s387, 8 [#allocation5]
        %v3028 = vld [vmem:[%s3027] sm:$0xff]
        %3030 = vset.pattern.permute.xlu0 0
        %3031 = vperm.xlu0 %3030, %v3028
        %v3032 = vpop.permute.xlu0 %3031
        %v3034 = vadd.f32 %v3026, %v3032
        %v3035 = vmax.f32 %v2852, %v3034
        %v3036 = vld [vmem:[%s1191] sm:$0xff]
        %v3037 = vld [vmem:[%s1191 + $0x8] sm:$0xff]
        %v3038 = vld [vmem:[%s1191 + $0x10] sm:$0xff]
        %v3039 = vld [vmem:[%s1191 + $0x18] sm:$0xff]
        %3040 = vmatprep.subr.mxu0 %v2669
        %3041 = vmatpush1.msra.mxu0 %v2668
        %3042 = vmatprep.subr.mxu0 %v2665
        %3043 = vmatpush1.msra.mxu0 %v2664
        %3044 = vmatprep.subr.mxu0 %v2661
        %3045 = vmatpush1.msra.mxu0 %v2660
        %3046 = vmatprep.subr.mxu0 %v2657
        %3047 = vmatpush1.msra.mxu0 %v2656
        %3048 = vmatprep.subr.mxu0 %v2653
        %3049 = vmatpush1.msra.mxu0 %v2652
        %3050 = vmatprep.subr.mxu0 %v2649
        %3051 = vmatpush1.msra.mxu0 %v2648
        %3052 = vmatprep.subr.mxu0 %v2645
        %3053 = vmatpush1.msra.mxu0 %v2644
        %3054 = vmatprep.subr.mxu0 %v2641
        %3055 = vmatpush1.msra.mxu0 %v2640
        %3056 = vmatprep.subr.mxu0 %v2637
        %3057 = vmatpush1.msra.mxu0 %v2636
        %3058 = vmatprep.subr.mxu0 %v2633
        %3059 = vmatpush1.msra.mxu0 %v2632
        %3060 = vmatprep.subr.mxu0 %v2629
        %3061 = vmatpush1.msra.mxu0 %v2628
        %3062 = vmatprep.subr.mxu0 %v2625
        %3063 = vmatpush1.msra.mxu0 %v2624
        %3064 = vmatprep.subr.mxu0 %v2621
        %3065 = vmatpush1.msra.mxu0 %v2620
        %3066 = vmatprep.subr.mxu0 %v2617
        %3067 = vmatpush1.msra.mxu0 %v2616
        %3068 = vmatprep.subr.mxu0 %v2613
        %3069 = vmatpush1.msra.mxu0 %v2612
        %3070 = vmatprep.subr.mxu0 %v2609
        %3071 = vmatpush1.msra.mxu0 %v2608
        %3072 = vmatprep.subr.mxu0 0.0
        %3073 = vmatpush2.msra.mxu0 0.0
        %3074 = vmatprep.subr.mxu0 0.0
        %3075 = vmatpush2.msra.mxu0 0.0
        %3076 = vmatprep.subr.mxu0 0.0
        %3077 = vmatpush2.msra.mxu0 0.0
        %3078 = vmatprep.subr.mxu0 0.0
        %3079 = vmatpush2.msra.mxu0 0.0
        %3080 = vmatprep.subr.mxu0 0.0
        %3081 = vmatpush2.msra.mxu0 0.0
        %3082 = vmatprep.subr.mxu0 0.0
        %3083 = vmatpush2.msra.mxu0 0.0
        %3084 = vmatprep.subr.mxu0 0.0
        %3085 = vmatpush2.msra.mxu0 0.0
        %3086 = vmatprep.subr.mxu0 0.0
        %3087 = vmatpush2.msra.mxu0 0.0
        %3088 = vmatprep.subr.mxu0 0.0
        %3089 = vmatpush2.msra.mxu0 0.0
        %3090 = vmatprep.subr.mxu0 0.0
        %3091 = vmatpush2.msra.mxu0 0.0
        %3092 = vmatprep.subr.mxu0 0.0
        %3093 = vmatpush2.msra.mxu0 0.0
        %3094 = vmatprep.subr.mxu0 0.0
        %3095 = vmatpush2.msra.mxu0 0.0
        %3096 = vmatprep.subr.mxu0 0.0
        %3097 = vmatpush2.msra.mxu0 0.0
        %3098 = vmatprep.subr.mxu0 0.0
        %3099 = vmatpush2.msra.mxu0 0.0
        %3100 = vmatprep.subr.mxu0 0.0
        %3101 = vmatpush2.msra.mxu0 0.0
        %3102 = vmatprep.subr.mxu0 0.0
        %3103 = vmatpush2.msra.mxu0 0.0
        %3104 = vmatprep.mubr.f32.mxu0 0.0
        %3105 = vmatmul.mubr.f32.gmra.mxu0 %v3026
        %v3106 = vpop.f32.mrf.mxu0
        %v3107 = vadd.f32 0.0, %v3106
        %v3108 = vpop.f32.mrf.mxu0
        %v3109 = vadd.f32 0.0, %v3108
        %3110 = vdwg.mxu0
        %3111 = vmatprep.subr.mxu0 %v2671
        %3112 = vmatpush1.msra.mxu0 %v2670
        %3113 = vmatprep.subr.mxu0 %v2667
        %3114 = vmatpush1.msra.mxu0 %v2666
        %3115 = vmatprep.subr.mxu0 %v2663
        %3116 = vmatpush1.msra.mxu0 %v2662
        %3117 = vmatprep.subr.mxu0 %v2659
        %3118 = vmatpush1.msra.mxu0 %v2658
        %3119 = vmatprep.subr.mxu0 %v2655
        %3120 = vmatpush1.msra.mxu0 %v2654
        %3121 = vmatprep.subr.mxu0 %v2651
        %3122 = vmatpush1.msra.mxu0 %v2650
        %3123 = vmatprep.subr.mxu0 %v2647
        %3124 = vmatpush1.msra.mxu0 %v2646
        %3125 = vmatprep.subr.mxu0 %v2643
        %3126 = vmatpush1.msra.mxu0 %v2642
        %3127 = vmatprep.subr.mxu0 %v2639
        %3128 = vmatpush1.msra.mxu0 %v2638
        %3129 = vmatprep.subr.mxu0 %v2635
        %3130 = vmatpush1.msra.mxu0 %v2634
        %3131 = vmatprep.subr.mxu0 %v2631
        %3132 = vmatpush1.msra.mxu0 %v2630
        %3133 = vmatprep.subr.mxu0 %v2627
        %3134 = vmatpush1.msra.mxu0 %v2626
        %3135 = vmatprep.subr.mxu0 %v2623
        %3136 = vmatpush1.msra.mxu0 %v2622
        %3137 = vmatprep.subr.mxu0 %v2619
        %3138 = vmatpush1.msra.mxu0 %v2618
        %3139 = vmatprep.subr.mxu0 %v2615
        %3140 = vmatpush1.msra.mxu0 %v2614
        %3141 = vmatprep.subr.mxu0 %v2611
        %3142 = vmatpush1.msra.mxu0 %v2610
        %3143 = vmatprep.subr.mxu0 0.0
        %3144 = vmatpush2.msra.mxu0 0.0
        %3145 = vmatprep.subr.mxu0 0.0
        %3146 = vmatpush2.msra.mxu0 0.0
        %3147 = vmatprep.subr.mxu0 0.0
        %3148 = vmatpush2.msra.mxu0 0.0
        %3149 = vmatprep.subr.mxu0 0.0
        %3150 = vmatpush2.msra.mxu0 0.0
        %3151 = vmatprep.subr.mxu0 0.0
        %3152 = vmatpush2.msra.mxu0 0.0
        %3153 = vmatprep.subr.mxu0 0.0
        %3154 = vmatpush2.msra.mxu0 0.0
        %3155 = vmatprep.subr.mxu0 0.0
        %3156 = vmatpush2.msra.mxu0 0.0
        %3157 = vmatprep.subr.mxu0 0.0
        %3158 = vmatpush2.msra.mxu0 0.0
        %3159 = vmatprep.subr.mxu0 0.0
        %3160 = vmatpush2.msra.mxu0 0.0
        %3161 = vmatprep.subr.mxu0 0.0
        %3162 = vmatpush2.msra.mxu0 0.0
        %3163 = vmatprep.subr.mxu0 0.0
        %3164 = vmatpush2.msra.mxu0 0.0
        %3165 = vmatprep.subr.mxu0 0.0
        %3166 = vmatpush2.msra.mxu0 0.0
        %3167 = vmatprep.subr.mxu0 0.0
        %3168 = vmatpush2.msra.mxu0 0.0
        %3169 = vmatprep.subr.mxu0 0.0
        %3170 = vmatpush2.msra.mxu0 0.0
        %3171 = vmatprep.subr.mxu0 0.0
        %3172 = vmatpush2.msra.mxu0 0.0
        %3173 = vmatprep.subr.mxu0 0.0
        %3174 = vmatpush2.msra.mxu0 0.0
        %3175 = vmatprep.mubr.f32.mxu0 0.0
        %3176 = vmatmul.mubr.f32.gmra.mxu0 %v3026
        %v3177 = vpop.f32.mrf.mxu0
        %v3178 = vadd.f32 0.0, %v3177
        %v3179 = vpop.f32.mrf.mxu0
        %v3180 = vadd.f32 0.0, %v3179
        %3181 = vdwg.mxu0
        %v3182 = vadd.f32 %v3036, %v3107
        %v3183 = vadd.f32 %v3037, %v3109
        %v3184 = vadd.f32 %v3038, %v3178
        %v3185 = vadd.f32 %v3039, %v3180
        %v3186 = vxor.u32 %v3182, 2147483648
        %v3187 = vmul.f32 %v3186, 1.442695
        %v3188 = vpow.pop %v3187
        %v3189 = vadd.f32 %v3188, 1.0
        %v3190 = vrcp.pop %v3189
        %v3191 = vmul.f32 1.0, %v3190
        %v3192 = vxor.u32 %v3183, 2147483648
        %v3193 = vmul.f32 %v3192, 1.442695
        %v3194 = vpow.pop %v3193
        %v3195 = vadd.f32 %v3194, 1.0
        %v3196 = vrcp.pop %v3195
        %v3197 = vmul.f32 1.0, %v3196
        %v3198 = vtanh.pop %v3184
        %v3199 = vxor.u32 %v3185, 2147483648
        %v3200 = vmul.f32 %v3199, 1.442695
        %v3201 = vpow.pop %v3200
        %v3202 = vadd.f32 %v3201, 1.0
        %v3203 = vrcp.pop %v3202
        %v3204 = vmul.f32 1.0, %v3203
        %v3205 = vmul.f32 %v3197, %v3024
        %v3206 = vmul.f32 %v3191, %v3198
        %v3207 = vadd.f32 %v3205, %v3206
        %v3208 = vtanh.pop %v3207
        %v3209 = vmul.f32 %v3204, %v3208
        %s3210 = scalar_lea.vmem %s387, 16 [#allocation5]
        %v3211 = vld [vmem:[%s3210] sm:$0xff]
        %3213 = vset.pattern.permute.xlu0 0
        %3214 = vperm.xlu0 %3213, %v3211
        %v3215 = vpop.permute.xlu0 %3214
        %v3217 = vadd.f32 %v3209, %v3215
        %v3218 = vmax.f32 %v3035, %v3217
        %v3219 = vld [vmem:[%s1368] sm:$0xff]
        %v3220 = vld [vmem:[%s1368 + $0x8] sm:$0xff]
        %v3221 = vld [vmem:[%s1368 + $0x10] sm:$0xff]
        %v3222 = vld [vmem:[%s1368 + $0x18] sm:$0xff]
        %3223 = vmatprep.subr.mxu0 %v2669
        %3224 = vmatpush1.msra.mxu0 %v2668
        %3225 = vmatprep.subr.mxu0 %v2665
        %3226 = vmatpush1.msra.mxu0 %v2664
        %3227 = vmatprep.subr.mxu0 %v2661
        %3228 = vmatpush1.msra.mxu0 %v2660
        %3229 = vmatprep.subr.mxu0 %v2657
        %3230 = vmatpush1.msra.mxu0 %v2656
        %3231 = vmatprep.subr.mxu0 %v2653
        %3232 = vmatpush1.msra.mxu0 %v2652
        %3233 = vmatprep.subr.mxu0 %v2649
        %3234 = vmatpush1.msra.mxu0 %v2648
        %3235 = vmatprep.subr.mxu0 %v2645
        %3236 = vmatpush1.msra.mxu0 %v2644
        %3237 = vmatprep.subr.mxu0 %v2641
        %3238 = vmatpush1.msra.mxu0 %v2640
        %3239 = vmatprep.subr.mxu0 %v2637
        %3240 = vmatpush1.msra.mxu0 %v2636
        %3241 = vmatprep.subr.mxu0 %v2633
        %3242 = vmatpush1.msra.mxu0 %v2632
        %3243 = vmatprep.subr.mxu0 %v2629
        %3244 = vmatpush1.msra.mxu0 %v2628
        %3245 = vmatprep.subr.mxu0 %v2625
        %3246 = vmatpush1.msra.mxu0 %v2624
        %3247 = vmatprep.subr.mxu0 %v2621
        %3248 = vmatpush1.msra.mxu0 %v2620
        %3249 = vmatprep.subr.mxu0 %v2617
        %3250 = vmatpush1.msra.mxu0 %v2616
        %3251 = vmatprep.subr.mxu0 %v2613
        %3252 = vmatpush1.msra.mxu0 %v2612
        %3253 = vmatprep.subr.mxu0 %v2609
        %3254 = vmatpush1.msra.mxu0 %v2608
        %3255 = vmatprep.subr.mxu0 0.0
        %3256 = vmatpush2.msra.mxu0 0.0
        %3257 = vmatprep.subr.mxu0 0.0
        %3258 = vmatpush2.msra.mxu0 0.0
        %3259 = vmatprep.subr.mxu0 0.0
        %3260 = vmatpush2.msra.mxu0 0.0
        %3261 = vmatprep.subr.mxu0 0.0
        %3262 = vmatpush2.msra.mxu0 0.0
        %3263 = vmatprep.subr.mxu0 0.0
        %3264 = vmatpush2.msra.mxu0 0.0
        %3265 = vmatprep.subr.mxu0 0.0
        %3266 = vmatpush2.msra.mxu0 0.0
        %3267 = vmatprep.subr.mxu0 0.0
        %3268 = vmatpush2.msra.mxu0 0.0
        %3269 = vmatprep.subr.mxu0 0.0
        %3270 = vmatpush2.msra.mxu0 0.0
        %3271 = vmatprep.subr.mxu0 0.0
        %3272 = vmatpush2.msra.mxu0 0.0
        %3273 = vmatprep.subr.mxu0 0.0
        %3274 = vmatpush2.msra.mxu0 0.0
        %3275 = vmatprep.subr.mxu0 0.0
        %3276 = vmatpush2.msra.mxu0 0.0
        %3277 = vmatprep.subr.mxu0 0.0
        %3278 = vmatpush2.msra.mxu0 0.0
        %3279 = vmatprep.subr.mxu0 0.0
        %3280 = vmatpush2.msra.mxu0 0.0
        %3281 = vmatprep.subr.mxu0 0.0
        %3282 = vmatpush2.msra.mxu0 0.0
        %3283 = vmatprep.subr.mxu0 0.0
        %3284 = vmatpush2.msra.mxu0 0.0
        %3285 = vmatprep.subr.mxu0 0.0
        %3286 = vmatpush2.msra.mxu0 0.0
        %3287 = vmatprep.mubr.f32.mxu0 0.0
        %3288 = vmatmul.mubr.f32.gmra.mxu0 %v3209
        %v3289 = vpop.f32.mrf.mxu0
        %v3290 = vadd.f32 0.0, %v3289
        %v3291 = vpop.f32.mrf.mxu0
        %v3292 = vadd.f32 0.0, %v3291
        %3293 = vdwg.mxu0
        %3294 = vmatprep.subr.mxu0 %v2671
        %3295 = vmatpush1.msra.mxu0 %v2670
        %3296 = vmatprep.subr.mxu0 %v2667
        %3297 = vmatpush1.msra.mxu0 %v2666
        %3298 = vmatprep.subr.mxu0 %v2663
        %3299 = vmatpush1.msra.mxu0 %v2662
        %3300 = vmatprep.subr.mxu0 %v2659
        %3301 = vmatpush1.msra.mxu0 %v2658
        %3302 = vmatprep.subr.mxu0 %v2655
        %3303 = vmatpush1.msra.mxu0 %v2654
        %3304 = vmatprep.subr.mxu0 %v2651
        %3305 = vmatpush1.msra.mxu0 %v2650
        %3306 = vmatprep.subr.mxu0 %v2647
        %3307 = vmatpush1.msra.mxu0 %v2646
        %3308 = vmatprep.subr.mxu0 %v2643
        %3309 = vmatpush1.msra.mxu0 %v2642
        %3310 = vmatprep.subr.mxu0 %v2639
        %3311 = vmatpush1.msra.mxu0 %v2638
        %3312 = vmatprep.subr.mxu0 %v2635
        %3313 = vmatpush1.msra.mxu0 %v2634
        %3314 = vmatprep.subr.mxu0 %v2631
        %3315 = vmatpush1.msra.mxu0 %v2630
        %3316 = vmatprep.subr.mxu0 %v2627
        %3317 = vmatpush1.msra.mxu0 %v2626
        %3318 = vmatprep.subr.mxu0 %v2623
        %3319 = vmatpush1.msra.mxu0 %v2622
        %3320 = vmatprep.subr.mxu0 %v2619
        %3321 = vmatpush1.msra.mxu0 %v2618
        %3322 = vmatprep.subr.mxu0 %v2615
        %3323 = vmatpush1.msra.mxu0 %v2614
        %3324 = vmatprep.subr.mxu0 %v2611
        %3325 = vmatpush1.msra.mxu0 %v2610
        %3326 = vmatprep.subr.mxu0 0.0
        %3327 = vmatpush2.msra.mxu0 0.0
        %3328 = vmatprep.subr.mxu0 0.0
        %3329 = vmatpush2.msra.mxu0 0.0
        %3330 = vmatprep.subr.mxu0 0.0
        %3331 = vmatpush2.msra.mxu0 0.0
        %3332 = vmatprep.subr.mxu0 0.0
        %3333 = vmatpush2.msra.mxu0 0.0
        %3334 = vmatprep.subr.mxu0 0.0
        %3335 = vmatpush2.msra.mxu0 0.0
        %3336 = vmatprep.subr.mxu0 0.0
        %3337 = vmatpush2.msra.mxu0 0.0
        %3338 = vmatprep.subr.mxu0 0.0
        %3339 = vmatpush2.msra.mxu0 0.0
        %3340 = vmatprep.subr.mxu0 0.0
        %3341 = vmatpush2.msra.mxu0 0.0
        %3342 = vmatprep.subr.mxu0 0.0
        %3343 = vmatpush2.msra.mxu0 0.0
        %3344 = vmatprep.subr.mxu0 0.0
        %3345 = vmatpush2.msra.mxu0 0.0
        %3346 = vmatprep.subr.mxu0 0.0
        %3347 = vmatpush2.msra.mxu0 0.0
        %3348 = vmatprep.subr.mxu0 0.0
        %3349 = vmatpush2.msra.mxu0 0.0
        %3350 = vmatprep.subr.mxu0 0.0
        %3351 = vmatpush2.msra.mxu0 0.0
        %3352 = vmatprep.subr.mxu0 0.0
        %3353 = vmatpush2.msra.mxu0 0.0
        %3354 = vmatprep.subr.mxu0 0.0
        %3355 = vmatpush2.msra.mxu0 0.0
        %3356 = vmatprep.subr.mxu0 0.0
        %3357 = vmatpush2.msra.mxu0 0.0
        %3358 = vmatprep.mubr.f32.mxu0 0.0
        %3359 = vmatmul.mubr.f32.gmra.mxu0 %v3209
        %v3360 = vpop.f32.mrf.mxu0
        %v3361 = vadd.f32 0.0, %v3360
        %v3362 = vpop.f32.mrf.mxu0
        %v3363 = vadd.f32 0.0, %v3362
        %3364 = vdwg.mxu0
        %v3365 = vadd.f32 %v3219, %v3290
        %v3366 = vadd.f32 %v3220, %v3292
        %v3367 = vadd.f32 %v3221, %v3361
        %v3368 = vadd.f32 %v3222, %v3363
        %v3369 = vxor.u32 %v3365, 2147483648
        %v3370 = vmul.f32 %v3369, 1.442695
        %v3371 = vpow.pop %v3370
        %v3372 = vadd.f32 %v3371, 1.0
        %v3373 = vrcp.pop %v3372
        %v3374 = vmul.f32 1.0, %v3373
        %v3375 = vxor.u32 %v3366, 2147483648
        %v3376 = vmul.f32 %v3375, 1.442695
        %v3377 = vpow.pop %v3376
        %v3378 = vadd.f32 %v3377, 1.0
        %v3379 = vrcp.pop %v3378
        %v3380 = vmul.f32 1.0, %v3379
        %v3381 = vtanh.pop %v3367
        %v3382 = vxor.u32 %v3368, 2147483648
        %v3383 = vmul.f32 %v3382, 1.442695
        %v3384 = vpow.pop %v3383
        %v3385 = vadd.f32 %v3384, 1.0
        %v3386 = vrcp.pop %v3385
        %v3387 = vmul.f32 1.0, %v3386
        %v3388 = vmul.f32 %v3380, %v3207
        %v3389 = vmul.f32 %v3374, %v3381
        %v3390 = vadd.f32 %v3388, %v3389
        %v3391 = vtanh.pop %v3390
        %v3392 = vmul.f32 %v3387, %v3391
        %s3393 = scalar_lea.vmem %s387, 24 [#allocation5]
        %v3394 = vld [vmem:[%s3393] sm:$0xff]
        %3396 = vset.pattern.permute.xlu0 0
        %3397 = vperm.xlu0 %3396, %v3394
        %v3398 = vpop.permute.xlu0 %3397
        %v3400 = vadd.f32 %v3392, %v3398
        %v3401 = vmax.f32 %v3218, %v3400
        %v3402 = vld [vmem:[%s1545] sm:$0xff]
        %v3403 = vld [vmem:[%s1545 + $0x8] sm:$0xff]
        %v3404 = vld [vmem:[%s1545 + $0x10] sm:$0xff]
        %v3405 = vld [vmem:[%s1545 + $0x18] sm:$0xff]
        %3406 = vmatprep.subr.mxu0 %v2669
        %3407 = vmatpush1.msra.mxu0 %v2668
        %3408 = vmatprep.subr.mxu0 %v2665
        %3409 = vmatpush1.msra.mxu0 %v2664
        %3410 = vmatprep.subr.mxu0 %v2661
        %3411 = vmatpush1.msra.mxu0 %v2660
        %3412 = vmatprep.subr.mxu0 %v2657
        %3413 = vmatpush1.msra.mxu0 %v2656
        %3414 = vmatprep.subr.mxu0 %v2653
        %3415 = vmatpush1.msra.mxu0 %v2652
        %3416 = vmatprep.subr.mxu0 %v2649
        %3417 = vmatpush1.msra.mxu0 %v2648
        %3418 = vmatprep.subr.mxu0 %v2645
        %3419 = vmatpush1.msra.mxu0 %v2644
        %3420 = vmatprep.subr.mxu0 %v2641
        %3421 = vmatpush1.msra.mxu0 %v2640
        %3422 = vmatprep.subr.mxu0 %v2637
        %3423 = vmatpush1.msra.mxu0 %v2636
        %3424 = vmatprep.subr.mxu0 %v2633
        %3425 = vmatpush1.msra.mxu0 %v2632
        %3426 = vmatprep.subr.mxu0 %v2629
        %3427 = vmatpush1.msra.mxu0 %v2628
        %3428 = vmatprep.subr.mxu0 %v2625
        %3429 = vmatpush1.msra.mxu0 %v2624
        %3430 = vmatprep.subr.mxu0 %v2621
        %3431 = vmatpush1.msra.mxu0 %v2620
        %3432 = vmatprep.subr.mxu0 %v2617
        %3433 = vmatpush1.msra.mxu0 %v2616
        %3434 = vmatprep.subr.mxu0 %v2613
        %3435 = vmatpush1.msra.mxu0 %v2612
        %3436 = vmatprep.subr.mxu0 %v2609
        %3437 = vmatpush1.msra.mxu0 %v2608
        %3438 = vmatprep.subr.mxu0 0.0
        %3439 = vmatpush2.msra.mxu0 0.0
        %3440 = vmatprep.subr.mxu0 0.0
        %3441 = vmatpush2.msra.mxu0 0.0
        %3442 = vmatprep.subr.mxu0 0.0
        %3443 = vmatpush2.msra.mxu0 0.0
        %3444 = vmatprep.subr.mxu0 0.0
        %3445 = vmatpush2.msra.mxu0 0.0
        %3446 = vmatprep.subr.mxu0 0.0
        %3447 = vmatpush2.msra.mxu0 0.0
        %3448 = vmatprep.subr.mxu0 0.0
        %3449 = vmatpush2.msra.mxu0 0.0
        %3450 = vmatprep.subr.mxu0 0.0
        %3451 = vmatpush2.msra.mxu0 0.0
        %3452 = vmatprep.subr.mxu0 0.0
        %3453 = vmatpush2.msra.mxu0 0.0
        %3454 = vmatprep.subr.mxu0 0.0
        %3455 = vmatpush2.msra.mxu0 0.0
        %3456 = vmatprep.subr.mxu0 0.0
        %3457 = vmatpush2.msra.mxu0 0.0
        %3458 = vmatprep.subr.mxu0 0.0
        %3459 = vmatpush2.msra.mxu0 0.0
        %3460 = vmatprep.subr.mxu0 0.0
        %3461 = vmatpush2.msra.mxu0 0.0
        %3462 = vmatprep.subr.mxu0 0.0
        %3463 = vmatpush2.msra.mxu0 0.0
        %3464 = vmatprep.subr.mxu0 0.0
        %3465 = vmatpush2.msra.mxu0 0.0
        %3466 = vmatprep.subr.mxu0 0.0
        %3467 = vmatpush2.msra.mxu0 0.0
        %3468 = vmatprep.subr.mxu0 0.0
        %3469 = vmatpush2.msra.mxu0 0.0
        %3470 = vmatprep.mubr.f32.mxu0 0.0
        %3471 = vmatmul.mubr.f32.gmra.mxu0 %v3392
        %v3472 = vpop.f32.mrf.mxu0
        %v3473 = vadd.f32 0.0, %v3472
        %v3474 = vpop.f32.mrf.mxu0
        %v3475 = vadd.f32 0.0, %v3474
        %3476 = vdwg.mxu0
        %3477 = vmatprep.subr.mxu0 %v2671
        %3478 = vmatpush1.msra.mxu0 %v2670
        %3479 = vmatprep.subr.mxu0 %v2667
        %3480 = vmatpush1.msra.mxu0 %v2666
        %3481 = vmatprep.subr.mxu0 %v2663
        %3482 = vmatpush1.msra.mxu0 %v2662
        %3483 = vmatprep.subr.mxu0 %v2659
        %3484 = vmatpush1.msra.mxu0 %v2658
        %3485 = vmatprep.subr.mxu0 %v2655
        %3486 = vmatpush1.msra.mxu0 %v2654
        %3487 = vmatprep.subr.mxu0 %v2651
        %3488 = vmatpush1.msra.mxu0 %v2650
        %3489 = vmatprep.subr.mxu0 %v2647
        %3490 = vmatpush1.msra.mxu0 %v2646
        %3491 = vmatprep.subr.mxu0 %v2643
        %3492 = vmatpush1.msra.mxu0 %v2642
        %3493 = vmatprep.subr.mxu0 %v2639
        %3494 = vmatpush1.msra.mxu0 %v2638
        %3495 = vmatprep.subr.mxu0 %v2635
        %3496 = vmatpush1.msra.mxu0 %v2634
        %3497 = vmatprep.subr.mxu0 %v2631
        %3498 = vmatpush1.msra.mxu0 %v2630
        %3499 = vmatprep.subr.mxu0 %v2627
        %3500 = vmatpush1.msra.mxu0 %v2626
        %3501 = vmatprep.subr.mxu0 %v2623
        %3502 = vmatpush1.msra.mxu0 %v2622
        %3503 = vmatprep.subr.mxu0 %v2619
        %3504 = vmatpush1.msra.mxu0 %v2618
        %3505 = vmatprep.subr.mxu0 %v2615
        %3506 = vmatpush1.msra.mxu0 %v2614
        %3507 = vmatprep.subr.mxu0 %v2611
        %3508 = vmatpush1.msra.mxu0 %v2610
        %3509 = vmatprep.subr.mxu0 0.0
        %3510 = vmatpush2.msra.mxu0 0.0
        %3511 = vmatprep.subr.mxu0 0.0
        %3512 = vmatpush2.msra.mxu0 0.0
        %3513 = vmatprep.subr.mxu0 0.0
        %3514 = vmatpush2.msra.mxu0 0.0
        %3515 = vmatprep.subr.mxu0 0.0
        %3516 = vmatpush2.msra.mxu0 0.0
        %3517 = vmatprep.subr.mxu0 0.0
        %3518 = vmatpush2.msra.mxu0 0.0
        %3519 = vmatprep.subr.mxu0 0.0
        %3520 = vmatpush2.msra.mxu0 0.0
        %3521 = vmatprep.subr.mxu0 0.0
        %3522 = vmatpush2.msra.mxu0 0.0
        %3523 = vmatprep.subr.mxu0 0.0
        %3524 = vmatpush2.msra.mxu0 0.0
        %3525 = vmatprep.subr.mxu0 0.0
        %3526 = vmatpush2.msra.mxu0 0.0
        %3527 = vmatprep.subr.mxu0 0.0
        %3528 = vmatpush2.msra.mxu0 0.0
        %3529 = vmatprep.subr.mxu0 0.0
        %3530 = vmatpush2.msra.mxu0 0.0
        %3531 = vmatprep.subr.mxu0 0.0
        %3532 = vmatpush2.msra.mxu0 0.0
        %3533 = vmatprep.subr.mxu0 0.0
        %3534 = vmatpush2.msra.mxu0 0.0
        %3535 = vmatprep.subr.mxu0 0.0
        %3536 = vmatpush2.msra.mxu0 0.0
        %3537 = vmatprep.subr.mxu0 0.0
        %3538 = vmatpush2.msra.mxu0 0.0
        %3539 = vmatprep.subr.mxu0 0.0
        %3540 = vmatpush2.msra.mxu0 0.0
        %3541 = vmatprep.mubr.f32.mxu0 0.0
        %3542 = vmatmul.mubr.f32.gmra.mxu0 %v3392
        %v3543 = vpop.f32.mrf.mxu0
        %v3544 = vadd.f32 0.0, %v3543
        %v3545 = vpop.f32.mrf.mxu0
        %v3546 = vadd.f32 0.0, %v3545
        %3547 = vdwg.mxu0
        %v3548 = vadd.f32 %v3402, %v3473
        %v3549 = vadd.f32 %v3403, %v3475
        %v3550 = vadd.f32 %v3404, %v3544
        %v3551 = vadd.f32 %v3405, %v3546
        %v3552 = vxor.u32 %v3548, 2147483648
        %v3553 = vmul.f32 %v3552, 1.442695
        %v3554 = vpow.pop %v3553
        %v3555 = vadd.f32 %v3554, 1.0
        %v3556 = vrcp.pop %v3555
        %v3557 = vmul.f32 1.0, %v3556
        %v3558 = vxor.u32 %v3549, 2147483648
        %v3559 = vmul.f32 %v3558, 1.442695
        %v3560 = vpow.pop %v3559
        %v3561 = vadd.f32 %v3560, 1.0
        %v3562 = vrcp.pop %v3561
        %v3563 = vmul.f32 1.0, %v3562
        %v3564 = vtanh.pop %v3550
        %v3565 = vxor.u32 %v3551, 2147483648
        %v3566 = vmul.f32 %v3565, 1.442695
        %v3567 = vpow.pop %v3566
        %v3568 = vadd.f32 %v3567, 1.0
        %v3569 = vrcp.pop %v3568
        %v3570 = vmul.f32 1.0, %v3569
        %v3571 = vmul.f32 %v3563, %v3390
        %v3572 = vmul.f32 %v3557, %v3564
        %v3573 = vadd.f32 %v3571, %v3572
        %v3574 = vtanh.pop %v3573
        %v3575 = vmul.f32 %v3570, %v3574
        %s3576 = scalar_lea.vmem %s387, 32 [#allocation5]
        %v3577 = vld [vmem:[%s3576] sm:$0xff]
        %3579 = vset.pattern.permute.xlu0 0
        %3580 = vperm.xlu0 %3579, %v3577
        %v3581 = vpop.permute.xlu0 %3580
        %v3583 = vadd.f32 %v3575, %v3581
        %v3584 = vmax.f32 %v3401, %v3583
        %v3585 = vld [vmem:[%s1722] sm:$0xff]
        %v3586 = vld [vmem:[%s1722 + $0x8] sm:$0xff]
        %v3587 = vld [vmem:[%s1722 + $0x10] sm:$0xff]
        %v3588 = vld [vmem:[%s1722 + $0x18] sm:$0xff]
        %3589 = vmatprep.subr.mxu0 %v2669
        %3590 = vmatpush1.msra.mxu0 %v2668
        %3591 = vmatprep.subr.mxu0 %v2665
        %3592 = vmatpush1.msra.mxu0 %v2664
        %3593 = vmatprep.subr.mxu0 %v2661
        %3594 = vmatpush1.msra.mxu0 %v2660
        %3595 = vmatprep.subr.mxu0 %v2657
        %3596 = vmatpush1.msra.mxu0 %v2656
        %3597 = vmatprep.subr.mxu0 %v2653
        %3598 = vmatpush1.msra.mxu0 %v2652
        %3599 = vmatprep.subr.mxu0 %v2649
        %3600 = vmatpush1.msra.mxu0 %v2648
        %3601 = vmatprep.subr.mxu0 %v2645
        %3602 = vmatpush1.msra.mxu0 %v2644
        %3603 = vmatprep.subr.mxu0 %v2641
        %3604 = vmatpush1.msra.mxu0 %v2640
        %3605 = vmatprep.subr.mxu0 %v2637
        %3606 = vmatpush1.msra.mxu0 %v2636
        %3607 = vmatprep.subr.mxu0 %v2633
        %3608 = vmatpush1.msra.mxu0 %v2632
        %3609 = vmatprep.subr.mxu0 %v2629
        %3610 = vmatpush1.msra.mxu0 %v2628
        %3611 = vmatprep.subr.mxu0 %v2625
        %3612 = vmatpush1.msra.mxu0 %v2624
        %3613 = vmatprep.subr.mxu0 %v2621
        %3614 = vmatpush1.msra.mxu0 %v2620
        %3615 = vmatprep.subr.mxu0 %v2617
        %3616 = vmatpush1.msra.mxu0 %v2616
        %3617 = vmatprep.subr.mxu0 %v2613
        %3618 = vmatpush1.msra.mxu0 %v2612
        %3619 = vmatprep.subr.mxu0 %v2609
        %3620 = vmatpush1.msra.mxu0 %v2608
        %3621 = vmatprep.subr.mxu0 0.0
        %3622 = vmatpush2.msra.mxu0 0.0
        %3623 = vmatprep.subr.mxu0 0.0
        %3624 = vmatpush2.msra.mxu0 0.0
        %3625 = vmatprep.subr.mxu0 0.0
        %3626 = vmatpush2.msra.mxu0 0.0
        %3627 = vmatprep.subr.mxu0 0.0
        %3628 = vmatpush2.msra.mxu0 0.0
        %3629 = vmatprep.subr.mxu0 0.0
        %3630 = vmatpush2.msra.mxu0 0.0
        %3631 = vmatprep.subr.mxu0 0.0
        %3632 = vmatpush2.msra.mxu0 0.0
        %3633 = vmatprep.subr.mxu0 0.0
        %3634 = vmatpush2.msra.mxu0 0.0
        %3635 = vmatprep.subr.mxu0 0.0
        %3636 = vmatpush2.msra.mxu0 0.0
        %3637 = vmatprep.subr.mxu0 0.0
        %3638 = vmatpush2.msra.mxu0 0.0
        %3639 = vmatprep.subr.mxu0 0.0
        %3640 = vmatpush2.msra.mxu0 0.0
        %3641 = vmatprep.subr.mxu0 0.0
        %3642 = vmatpush2.msra.mxu0 0.0
        %3643 = vmatprep.subr.mxu0 0.0
        %3644 = vmatpush2.msra.mxu0 0.0
        %3645 = vmatprep.subr.mxu0 0.0
        %3646 = vmatpush2.msra.mxu0 0.0
        %3647 = vmatprep.subr.mxu0 0.0
        %3648 = vmatpush2.msra.mxu0 0.0
        %3649 = vmatprep.subr.mxu0 0.0
        %3650 = vmatpush2.msra.mxu0 0.0
        %3651 = vmatprep.subr.mxu0 0.0
        %3652 = vmatpush2.msra.mxu0 0.0
        %3653 = vmatprep.mubr.f32.mxu0 0.0
        %3654 = vmatmul.mubr.f32.gmra.mxu0 %v3575
        %v3655 = vpop.f32.mrf.mxu0
        %v3656 = vadd.f32 0.0, %v3655
        %v3657 = vpop.f32.mrf.mxu0
        %v3658 = vadd.f32 0.0, %v3657
        %3659 = vdwg.mxu0
        %3660 = vmatprep.subr.mxu0 %v2671
        %3661 = vmatpush1.msra.mxu0 %v2670
        %3662 = vmatprep.subr.mxu0 %v2667
        %3663 = vmatpush1.msra.mxu0 %v2666
        %3664 = vmatprep.subr.mxu0 %v2663
        %3665 = vmatpush1.msra.mxu0 %v2662
        %3666 = vmatprep.subr.mxu0 %v2659
        %3667 = vmatpush1.msra.mxu0 %v2658
        %3668 = vmatprep.subr.mxu0 %v2655
        %3669 = vmatpush1.msra.mxu0 %v2654
        %3670 = vmatprep.subr.mxu0 %v2651
        %3671 = vmatpush1.msra.mxu0 %v2650
        %3672 = vmatprep.subr.mxu0 %v2647
        %3673 = vmatpush1.msra.mxu0 %v2646
        %3674 = vmatprep.subr.mxu0 %v2643
        %3675 = vmatpush1.msra.mxu0 %v2642
        %3676 = vmatprep.subr.mxu0 %v2639
        %3677 = vmatpush1.msra.mxu0 %v2638
        %3678 = vmatprep.subr.mxu0 %v2635
        %3679 = vmatpush1.msra.mxu0 %v2634
        %3680 = vmatprep.subr.mxu0 %v2631
        %3681 = vmatpush1.msra.mxu0 %v2630
        %3682 = vmatprep.subr.mxu0 %v2627
        %3683 = vmatpush1.msra.mxu0 %v2626
        %3684 = vmatprep.subr.mxu0 %v2623
        %3685 = vmatpush1.msra.mxu0 %v2622
        %3686 = vmatprep.subr.mxu0 %v2619
        %3687 = vmatpush1.msra.mxu0 %v2618
        %3688 = vmatprep.subr.mxu0 %v2615
        %3689 = vmatpush1.msra.mxu0 %v2614
        %3690 = vmatprep.subr.mxu0 %v2611
        %3691 = vmatpush1.msra.mxu0 %v2610
        %3692 = vmatprep.subr.mxu0 0.0
        %3693 = vmatpush2.msra.mxu0 0.0
        %3694 = vmatprep.subr.mxu0 0.0
        %3695 = vmatpush2.msra.mxu0 0.0
        %3696 = vmatprep.subr.mxu0 0.0
        %3697 = vmatpush2.msra.mxu0 0.0
        %3698 = vmatprep.subr.mxu0 0.0
        %3699 = vmatpush2.msra.mxu0 0.0
        %3700 = vmatprep.subr.mxu0 0.0
        %3701 = vmatpush2.msra.mxu0 0.0
        %3702 = vmatprep.subr.mxu0 0.0
        %3703 = vmatpush2.msra.mxu0 0.0
        %3704 = vmatprep.subr.mxu0 0.0
        %3705 = vmatpush2.msra.mxu0 0.0
        %3706 = vmatprep.subr.mxu0 0.0
        %3707 = vmatpush2.msra.mxu0 0.0
        %3708 = vmatprep.subr.mxu0 0.0
        %3709 = vmatpush2.msra.mxu0 0.0
        %3710 = vmatprep.subr.mxu0 0.0
        %3711 = vmatpush2.msra.mxu0 0.0
        %3712 = vmatprep.subr.mxu0 0.0
        %3713 = vmatpush2.msra.mxu0 0.0
        %3714 = vmatprep.subr.mxu0 0.0
        %3715 = vmatpush2.msra.mxu0 0.0
        %3716 = vmatprep.subr.mxu0 0.0
        %3717 = vmatpush2.msra.mxu0 0.0
        %3718 = vmatprep.subr.mxu0 0.0
        %3719 = vmatpush2.msra.mxu0 0.0
        %3720 = vmatprep.subr.mxu0 0.0
        %3721 = vmatpush2.msra.mxu0 0.0
        %3722 = vmatprep.subr.mxu0 0.0
        %3723 = vmatpush2.msra.mxu0 0.0
        %3724 = vmatprep.mubr.f32.mxu0 0.0
        %3725 = vmatmul.mubr.f32.gmra.mxu0 %v3575
        %v3726 = vpop.f32.mrf.mxu0
        %v3727 = vadd.f32 0.0, %v3726
        %v3728 = vpop.f32.mrf.mxu0
        %v3729 = vadd.f32 0.0, %v3728
        %3730 = vdwg.mxu0
        %v3731 = vadd.f32 %v3585, %v3656
        %v3732 = vadd.f32 %v3586, %v3658
        %v3733 = vadd.f32 %v3587, %v3727
        %v3734 = vadd.f32 %v3588, %v3729
        %v3735 = vxor.u32 %v3731, 2147483648
        %v3736 = vmul.f32 %v3735, 1.442695
        %v3737 = vpow.pop %v3736
        %v3738 = vadd.f32 %v3737, 1.0
        %v3739 = vrcp.pop %v3738
        %v3740 = vmul.f32 1.0, %v3739
        %v3741 = vxor.u32 %v3732, 2147483648
        %v3742 = vmul.f32 %v3741, 1.442695
        %v3743 = vpow.pop %v3742
        %v3744 = vadd.f32 %v3743, 1.0
        %v3745 = vrcp.pop %v3744
        %v3746 = vmul.f32 1.0, %v3745
        %v3747 = vtanh.pop %v3733
        %v3748 = vxor.u32 %v3734, 2147483648
        %v3749 = vmul.f32 %v3748, 1.442695
        %v3750 = vpow.pop %v3749
        %v3751 = vadd.f32 %v3750, 1.0
        %v3752 = vrcp.pop %v3751
        %v3753 = vmul.f32 1.0, %v3752
        %v3754 = vmul.f32 %v3746, %v3573
        %v3755 = vmul.f32 %v3740, %v3747
        %v3756 = vadd.f32 %v3754, %v3755
        %v3757 = vtanh.pop %v3756
        %v3758 = vmul.f32 %v3753, %v3757
        %s3759 = scalar_lea.vmem %s387, 40 [#allocation5]
        %v3760 = vld [vmem:[%s3759] sm:$0xff]
        %3762 = vset.pattern.permute.xlu0 0
        %3763 = vperm.xlu0 %3762, %v3760
        %v3764 = vpop.permute.xlu0 %3763
        %v3766 = vadd.f32 %v3758, %v3764
        %v3767 = vmax.f32 %v3584, %v3766
        %v3768 = vld [vmem:[%s1899] sm:$0xff]
        %v3769 = vld [vmem:[%s1899 + $0x8] sm:$0xff]
        %v3770 = vld [vmem:[%s1899 + $0x10] sm:$0xff]
        %v3771 = vld [vmem:[%s1899 + $0x18] sm:$0xff]
        %3772 = vmatprep.subr.mxu0 %v2669
        %3773 = vmatpush1.msra.mxu0 %v2668
        %3774 = vmatprep.subr.mxu0 %v2665
        %3775 = vmatpush1.msra.mxu0 %v2664
        %3776 = vmatprep.subr.mxu0 %v2661
        %3777 = vmatpush1.msra.mxu0 %v2660
        %3778 = vmatprep.subr.mxu0 %v2657
        %3779 = vmatpush1.msra.mxu0 %v2656
        %3780 = vmatprep.subr.mxu0 %v2653
        %3781 = vmatpush1.msra.mxu0 %v2652
        %3782 = vmatprep.subr.mxu0 %v2649
        %3783 = vmatpush1.msra.mxu0 %v2648
        %3784 = vmatprep.subr.mxu0 %v2645
        %3785 = vmatpush1.msra.mxu0 %v2644
        %3786 = vmatprep.subr.mxu0 %v2641
        %3787 = vmatpush1.msra.mxu0 %v2640
        %3788 = vmatprep.subr.mxu0 %v2637
        %3789 = vmatpush1.msra.mxu0 %v2636
        %3790 = vmatprep.subr.mxu0 %v2633
        %3791 = vmatpush1.msra.mxu0 %v2632
        %3792 = vmatprep.subr.mxu0 %v2629
        %3793 = vmatpush1.msra.mxu0 %v2628
        %3794 = vmatprep.subr.mxu0 %v2625
        %3795 = vmatpush1.msra.mxu0 %v2624
        %3796 = vmatprep.subr.mxu0 %v2621
        %3797 = vmatpush1.msra.mxu0 %v2620
        %3798 = vmatprep.subr.mxu0 %v2617
        %3799 = vmatpush1.msra.mxu0 %v2616
        %3800 = vmatprep.subr.mxu0 %v2613
        %3801 = vmatpush1.msra.mxu0 %v2612
        %3802 = vmatprep.subr.mxu0 %v2609
        %3803 = vmatpush1.msra.mxu0 %v2608
        %3804 = vmatprep.subr.mxu0 0.0
        %3805 = vmatpush2.msra.mxu0 0.0
        %3806 = vmatprep.subr.mxu0 0.0
        %3807 = vmatpush2.msra.mxu0 0.0
        %3808 = vmatprep.subr.mxu0 0.0
        %3809 = vmatpush2.msra.mxu0 0.0
        %3810 = vmatprep.subr.mxu0 0.0
        %3811 = vmatpush2.msra.mxu0 0.0
        %3812 = vmatprep.subr.mxu0 0.0
        %3813 = vmatpush2.msra.mxu0 0.0
        %3814 = vmatprep.subr.mxu0 0.0
        %3815 = vmatpush2.msra.mxu0 0.0
        %3816 = vmatprep.subr.mxu0 0.0
        %3817 = vmatpush2.msra.mxu0 0.0
        %3818 = vmatprep.subr.mxu0 0.0
        %3819 = vmatpush2.msra.mxu0 0.0
        %3820 = vmatprep.subr.mxu0 0.0
        %3821 = vmatpush2.msra.mxu0 0.0
        %3822 = vmatprep.subr.mxu0 0.0
        %3823 = vmatpush2.msra.mxu0 0.0
        %3824 = vmatprep.subr.mxu0 0.0
        %3825 = vmatpush2.msra.mxu0 0.0
        %3826 = vmatprep.subr.mxu0 0.0
        %3827 = vmatpush2.msra.mxu0 0.0
        %3828 = vmatprep.subr.mxu0 0.0
        %3829 = vmatpush2.msra.mxu0 0.0
        %3830 = vmatprep.subr.mxu0 0.0
        %3831 = vmatpush2.msra.mxu0 0.0
        %3832 = vmatprep.subr.mxu0 0.0
        %3833 = vmatpush2.msra.mxu0 0.0
        %3834 = vmatprep.subr.mxu0 0.0
        %3835 = vmatpush2.msra.mxu0 0.0
        %3836 = vmatprep.mubr.f32.mxu0 0.0
        %3837 = vmatmul.mubr.f32.gmra.mxu0 %v3758
        %v3838 = vpop.f32.mrf.mxu0
        %v3839 = vadd.f32 0.0, %v3838
        %v3840 = vpop.f32.mrf.mxu0
        %v3841 = vadd.f32 0.0, %v3840
        %3842 = vdwg.mxu0
        %3843 = vmatprep.subr.mxu0 %v2671
        %3844 = vmatpush1.msra.mxu0 %v2670
        %3845 = vmatprep.subr.mxu0 %v2667
        %3846 = vmatpush1.msra.mxu0 %v2666
        %3847 = vmatprep.subr.mxu0 %v2663
        %3848 = vmatpush1.msra.mxu0 %v2662
        %3849 = vmatprep.subr.mxu0 %v2659
        %3850 = vmatpush1.msra.mxu0 %v2658
        %3851 = vmatprep.subr.mxu0 %v2655
        %3852 = vmatpush1.msra.mxu0 %v2654
        %3853 = vmatprep.subr.mxu0 %v2651
        %3854 = vmatpush1.msra.mxu0 %v2650
        %3855 = vmatprep.subr.mxu0 %v2647
        %3856 = vmatpush1.msra.mxu0 %v2646
        %3857 = vmatprep.subr.mxu0 %v2643
        %3858 = vmatpush1.msra.mxu0 %v2642
        %3859 = vmatprep.subr.mxu0 %v2639
        %3860 = vmatpush1.msra.mxu0 %v2638
        %3861 = vmatprep.subr.mxu0 %v2635
        %3862 = vmatpush1.msra.mxu0 %v2634
        %3863 = vmatprep.subr.mxu0 %v2631
        %3864 = vmatpush1.msra.mxu0 %v2630
        %3865 = vmatprep.subr.mxu0 %v2627
        %3866 = vmatpush1.msra.mxu0 %v2626
        %3867 = vmatprep.subr.mxu0 %v2623
        %3868 = vmatpush1.msra.mxu0 %v2622
        %3869 = vmatprep.subr.mxu0 %v2619
        %3870 = vmatpush1.msra.mxu0 %v2618
        %3871 = vmatprep.subr.mxu0 %v2615
        %3872 = vmatpush1.msra.mxu0 %v2614
        %3873 = vmatprep.subr.mxu0 %v2611
        %3874 = vmatpush1.msra.mxu0 %v2610
        %3875 = vmatprep.subr.mxu0 0.0
        %3876 = vmatpush2.msra.mxu0 0.0
        %3877 = vmatprep.subr.mxu0 0.0
        %3878 = vmatpush2.msra.mxu0 0.0
        %3879 = vmatprep.subr.mxu0 0.0
        %3880 = vmatpush2.msra.mxu0 0.0
        %3881 = vmatprep.subr.mxu0 0.0
        %3882 = vmatpush2.msra.mxu0 0.0
        %3883 = vmatprep.subr.mxu0 0.0
        %3884 = vmatpush2.msra.mxu0 0.0
        %3885 = vmatprep.subr.mxu0 0.0
        %3886 = vmatpush2.msra.mxu0 0.0
        %3887 = vmatprep.subr.mxu0 0.0
        %3888 = vmatpush2.msra.mxu0 0.0
        %3889 = vmatprep.subr.mxu0 0.0
        %3890 = vmatpush2.msra.mxu0 0.0
        %3891 = vmatprep.subr.mxu0 0.0
        %3892 = vmatpush2.msra.mxu0 0.0
        %3893 = vmatprep.subr.mxu0 0.0
        %3894 = vmatpush2.msra.mxu0 0.0
        %3895 = vmatprep.subr.mxu0 0.0
        %3896 = vmatpush2.msra.mxu0 0.0
        %3897 = vmatprep.subr.mxu0 0.0
        %3898 = vmatpush2.msra.mxu0 0.0
        %3899 = vmatprep.subr.mxu0 0.0
        %3900 = vmatpush2.msra.mxu0 0.0
        %3901 = vmatprep.subr.mxu0 0.0
        %3902 = vmatpush2.msra.mxu0 0.0
        %3903 = vmatprep.subr.mxu0 0.0
        %3904 = vmatpush2.msra.mxu0 0.0
        %3905 = vmatprep.subr.mxu0 0.0
        %3906 = vmatpush2.msra.mxu0 0.0
        %3907 = vmatprep.mubr.f32.mxu0 0.0
        %3908 = vmatmul.mubr.f32.gmra.mxu0 %v3758
        %v3909 = vpop.f32.mrf.mxu0
        %v3910 = vadd.f32 0.0, %v3909
        %v3911 = vpop.f32.mrf.mxu0
        %v3912 = vadd.f32 0.0, %v3911
        %3913 = vdwg.mxu0
        %v3914 = vadd.f32 %v3768, %v3839
        %v3915 = vadd.f32 %v3769, %v3841
        %v3916 = vadd.f32 %v3770, %v3910
        %v3917 = vadd.f32 %v3771, %v3912
        %v3918 = vxor.u32 %v3914, 2147483648
        %v3919 = vmul.f32 %v3918, 1.442695
        %v3920 = vpow.pop %v3919
        %v3921 = vadd.f32 %v3920, 1.0
        %v3922 = vrcp.pop %v3921
        %v3923 = vmul.f32 1.0, %v3922
        %v3924 = vxor.u32 %v3915, 2147483648
        %v3925 = vmul.f32 %v3924, 1.442695
        %v3926 = vpow.pop %v3925
        %v3927 = vadd.f32 %v3926, 1.0
        %v3928 = vrcp.pop %v3927
        %v3929 = vmul.f32 1.0, %v3928
        %v3930 = vtanh.pop %v3916
        %v3931 = vxor.u32 %v3917, 2147483648
        %v3932 = vmul.f32 %v3931, 1.442695
        %v3933 = vpow.pop %v3932
        %v3934 = vadd.f32 %v3933, 1.0
        %v3935 = vrcp.pop %v3934
        %v3936 = vmul.f32 1.0, %v3935
        %v3937 = vmul.f32 %v3929, %v3756
        %v3938 = vmul.f32 %v3923, %v3930
        %v3939 = vadd.f32 %v3937, %v3938
        %v3940 = vtanh.pop %v3939
        %v3941 = vmul.f32 %v3936, %v3940
        %s3942 = scalar_lea.vmem %s387, 48 [#allocation5]
        %v3943 = vld [vmem:[%s3942] sm:$0xff]
        %3945 = vset.pattern.permute.xlu0 0
        %3946 = vperm.xlu0 %3945, %v3943
        %v3947 = vpop.permute.xlu0 %3946
        %v3949 = vadd.f32 %v3941, %v3947
        %v3950 = vmax.f32 %v3767, %v3949
        %v3951 = vld [vmem:[%s2076] sm:$0xff]
        %v3952 = vld [vmem:[%s2076 + $0x8] sm:$0xff]
        %v3953 = vld [vmem:[%s2076 + $0x10] sm:$0xff]
        %v3954 = vld [vmem:[%s2076 + $0x18] sm:$0xff]
        %3955 = vmatprep.subr.mxu0 %v2669
        %3956 = vmatpush1.msra.mxu0 %v2668
        %3957 = vmatprep.subr.mxu0 %v2665
        %3958 = vmatpush1.msra.mxu0 %v2664
        %3959 = vmatprep.subr.mxu0 %v2661
        %3960 = vmatpush1.msra.mxu0 %v2660
        %3961 = vmatprep.subr.mxu0 %v2657
        %3962 = vmatpush1.msra.mxu0 %v2656
        %3963 = vmatprep.subr.mxu0 %v2653
        %3964 = vmatpush1.msra.mxu0 %v2652
        %3965 = vmatprep.subr.mxu0 %v2649
        %3966 = vmatpush1.msra.mxu0 %v2648
        %3967 = vmatprep.subr.mxu0 %v2645
        %3968 = vmatpush1.msra.mxu0 %v2644
        %3969 = vmatprep.subr.mxu0 %v2641
        %3970 = vmatpush1.msra.mxu0 %v2640
        %3971 = vmatprep.subr.mxu0 %v2637
        %3972 = vmatpush1.msra.mxu0 %v2636
        %3973 = vmatprep.subr.mxu0 %v2633
        %3974 = vmatpush1.msra.mxu0 %v2632
        %3975 = vmatprep.subr.mxu0 %v2629
        %3976 = vmatpush1.msra.mxu0 %v2628
        %3977 = vmatprep.subr.mxu0 %v2625
        %3978 = vmatpush1.msra.mxu0 %v2624
        %3979 = vmatprep.subr.mxu0 %v2621
        %3980 = vmatpush1.msra.mxu0 %v2620
        %3981 = vmatprep.subr.mxu0 %v2617
        %3982 = vmatpush1.msra.mxu0 %v2616
        %3983 = vmatprep.subr.mxu0 %v2613
        %3984 = vmatpush1.msra.mxu0 %v2612
        %3985 = vmatprep.subr.mxu0 %v2609
        %3986 = vmatpush1.msra.mxu0 %v2608
        %3987 = vmatprep.subr.mxu0 0.0
        %3988 = vmatpush2.msra.mxu0 0.0
        %3989 = vmatprep.subr.mxu0 0.0
        %3990 = vmatpush2.msra.mxu0 0.0
        %3991 = vmatprep.subr.mxu0 0.0
        %3992 = vmatpush2.msra.mxu0 0.0
        %3993 = vmatprep.subr.mxu0 0.0
        %3994 = vmatpush2.msra.mxu0 0.0
        %3995 = vmatprep.subr.mxu0 0.0
        %3996 = vmatpush2.msra.mxu0 0.0
        %3997 = vmatprep.subr.mxu0 0.0
        %3998 = vmatpush2.msra.mxu0 0.0
        %3999 = vmatprep.subr.mxu0 0.0
        %4000 = vmatpush2.msra.mxu0 0.0
        %4001 = vmatprep.subr.mxu0 0.0
        %4002 = vmatpush2.msra.mxu0 0.0
        %4003 = vmatprep.subr.mxu0 0.0
        %4004 = vmatpush2.msra.mxu0 0.0
        %4005 = vmatprep.subr.mxu0 0.0
        %4006 = vmatpush2.msra.mxu0 0.0
        %4007 = vmatprep.subr.mxu0 0.0
        %4008 = vmatpush2.msra.mxu0 0.0
        %4009 = vmatprep.subr.mxu0 0.0
        %4010 = vmatpush2.msra.mxu0 0.0
        %4011 = vmatprep.subr.mxu0 0.0
        %4012 = vmatpush2.msra.mxu0 0.0
        %4013 = vmatprep.subr.mxu0 0.0
        %4014 = vmatpush2.msra.mxu0 0.0
        %4015 = vmatprep.subr.mxu0 0.0
        %4016 = vmatpush2.msra.mxu0 0.0
        %4017 = vmatprep.subr.mxu0 0.0
        %4018 = vmatpush2.msra.mxu0 0.0
        %4019 = vmatprep.mubr.f32.mxu0 0.0
        %4020 = vmatmul.mubr.f32.gmra.mxu0 %v3941
        %v4021 = vpop.f32.mrf.mxu0
        %v4022 = vadd.f32 0.0, %v4021
        %v4023 = vpop.f32.mrf.mxu0
        %v4024 = vadd.f32 0.0, %v4023
        %4025 = vdwg.mxu0
        %4026 = vmatprep.subr.mxu0 %v2671
        %4027 = vmatpush1.msra.mxu0 %v2670
        %4028 = vmatprep.subr.mxu0 %v2667
        %4029 = vmatpush1.msra.mxu0 %v2666
        %4030 = vmatprep.subr.mxu0 %v2663
        %4031 = vmatpush1.msra.mxu0 %v2662
        %4032 = vmatprep.subr.mxu0 %v2659
        %4033 = vmatpush1.msra.mxu0 %v2658
        %4034 = vmatprep.subr.mxu0 %v2655
        %4035 = vmatpush1.msra.mxu0 %v2654
        %4036 = vmatprep.subr.mxu0 %v2651
        %4037 = vmatpush1.msra.mxu0 %v2650
        %4038 = vmatprep.subr.mxu0 %v2647
        %4039 = vmatpush1.msra.mxu0 %v2646
        %4040 = vmatprep.subr.mxu0 %v2643
        %4041 = vmatpush1.msra.mxu0 %v2642
        %4042 = vmatprep.subr.mxu0 %v2639
        %4043 = vmatpush1.msra.mxu0 %v2638
        %4044 = vmatprep.subr.mxu0 %v2635
        %4045 = vmatpush1.msra.mxu0 %v2634
        %4046 = vmatprep.subr.mxu0 %v2631
        %4047 = vmatpush1.msra.mxu0 %v2630
        %4048 = vmatprep.subr.mxu0 %v2627
        %4049 = vmatpush1.msra.mxu0 %v2626
        %4050 = vmatprep.subr.mxu0 %v2623
        %4051 = vmatpush1.msra.mxu0 %v2622
        %4052 = vmatprep.subr.mxu0 %v2619
        %4053 = vmatpush1.msra.mxu0 %v2618
        %4054 = vmatprep.subr.mxu0 %v2615
        %4055 = vmatpush1.msra.mxu0 %v2614
        %4056 = vmatprep.subr.mxu0 %v2611
        %4057 = vmatpush1.msra.mxu0 %v2610
        %4058 = vmatprep.subr.mxu0 0.0
        %4059 = vmatpush2.msra.mxu0 0.0
        %4060 = vmatprep.subr.mxu0 0.0
        %4061 = vmatpush2.msra.mxu0 0.0
        %4062 = vmatprep.subr.mxu0 0.0
        %4063 = vmatpush2.msra.mxu0 0.0
        %4064 = vmatprep.subr.mxu0 0.0
        %4065 = vmatpush2.msra.mxu0 0.0
        %4066 = vmatprep.subr.mxu0 0.0
        %4067 = vmatpush2.msra.mxu0 0.0
        %4068 = vmatprep.subr.mxu0 0.0
        %4069 = vmatpush2.msra.mxu0 0.0
        %4070 = vmatprep.subr.mxu0 0.0
        %4071 = vmatpush2.msra.mxu0 0.0
        %4072 = vmatprep.subr.mxu0 0.0
        %4073 = vmatpush2.msra.mxu0 0.0
        %4074 = vmatprep.subr.mxu0 0.0
        %4075 = vmatpush2.msra.mxu0 0.0
        %4076 = vmatprep.subr.mxu0 0.0
        %4077 = vmatpush2.msra.mxu0 0.0
        %4078 = vmatprep.subr.mxu0 0.0
        %4079 = vmatpush2.msra.mxu0 0.0
        %4080 = vmatprep.subr.mxu0 0.0
        %4081 = vmatpush2.msra.mxu0 0.0
        %4082 = vmatprep.subr.mxu0 0.0
        %4083 = vmatpush2.msra.mxu0 0.0
        %4084 = vmatprep.subr.mxu0 0.0
        %4085 = vmatpush2.msra.mxu0 0.0
        %4086 = vmatprep.subr.mxu0 0.0
        %4087 = vmatpush2.msra.mxu0 0.0
        %4088 = vmatprep.subr.mxu0 0.0
        %4089 = vmatpush2.msra.mxu0 0.0
        %4090 = vmatprep.mubr.f32.mxu0 0.0
        %4091 = vmatmul.mubr.f32.gmra.mxu0 %v3941
        %v4092 = vpop.f32.mrf.mxu0
        %v4093 = vadd.f32 0.0, %v4092
        %v4094 = vpop.f32.mrf.mxu0
        %v4095 = vadd.f32 0.0, %v4094
        %4096 = vdwg.mxu0
        %v4097 = vadd.f32 %v3951, %v4022
        %v4098 = vadd.f32 %v3952, %v4024
        %v4099 = vadd.f32 %v3953, %v4093
        %v4100 = vadd.f32 %v3954, %v4095
        %v4101 = vxor.u32 %v4097, 2147483648
        %v4102 = vmul.f32 %v4101, 1.442695
        %v4103 = vpow.pop %v4102
        %v4104 = vadd.f32 %v4103, 1.0
        %v4105 = vrcp.pop %v4104
        %v4106 = vmul.f32 1.0, %v4105
        %v4107 = vxor.u32 %v4098, 2147483648
        %v4108 = vmul.f32 %v4107, 1.442695
        %v4109 = vpow.pop %v4108
        %v4110 = vadd.f32 %v4109, 1.0
        %v4111 = vrcp.pop %v4110
        %v4112 = vmul.f32 1.0, %v4111
        %v4113 = vtanh.pop %v4099
        %v4114 = vxor.u32 %v4100, 2147483648
        %v4115 = vmul.f32 %v4114, 1.442695
        %v4116 = vpow.pop %v4115
        %v4117 = vadd.f32 %v4116, 1.0
        %v4118 = vrcp.pop %v4117
        %v4119 = vmul.f32 1.0, %v4118
        %v4120 = vmul.f32 %v4112, %v3939
        %v4121 = vmul.f32 %v4106, %v4113
        %v4122 = vadd.f32 %v4120, %v4121
        %v4123 = vtanh.pop %v4122
        %v4124 = vmul.f32 %v4119, %v4123
        %s4125 = scalar_lea.vmem %s387, 56 [#allocation5]
        %v4126 = vld [vmem:[%s4125] sm:$0xff]
        %4128 = vset.pattern.permute.xlu0 0
        %4129 = vperm.xlu0 %4128, %v4126
        %v4130 = vpop.permute.xlu0 %4129
        %v4132 = vadd.f32 %v4124, %v4130
        %v4133 = vmax.f32 %v3950, %v4132
        %v4134 = vld [vmem:[%s5] sm:$0xff]
        %v4135 = vld [vmem:[%s5 + $0x8] sm:$0xff]
        %v4136 = vld [vmem:[%s5 + $0x10] sm:$0xff]
        %v4137 = vld [vmem:[%s5 + $0x18] sm:$0xff]
        %v4138 = vld [vmem:[%s5 + $0x20] sm:$0xff]
        %v4139 = vld [vmem:[%s5 + $0x28] sm:$0xff]
        %v4140 = vld [vmem:[%s5 + $0x30] sm:$0xff]
        %v4141 = vld [vmem:[%s5 + $0x38] sm:$0xff]
        %v4142 = vld [vmem:[%s5 + $0x40] sm:$0xff]
        %v4143 = vld [vmem:[%s5 + $0x48] sm:$0xff]
        %v4144 = vld [vmem:[%s5 + $0x50] sm:$0xff]
        %v4145 = vld [vmem:[%s5 + $0x58] sm:$0xff]
        %v4146 = vld [vmem:[%s5 + $0x60] sm:$0xff]
        %v4147 = vld [vmem:[%s5 + $0x68] sm:$0xff]
        %v4148 = vld [vmem:[%s5 + $0x70] sm:$0xff]
        %v4149 = vld [vmem:[%s5 + $0x78] sm:$0xff]
        %v4150 = vld [vmem:[%s6] sm:$0x1]
        %v4152 = vlaneseq
        %v4153 = vshrl.u32 %v4152, 7
        %v4154 = vsub.s32 0, %v4153
        %v4155 = vrot.slane %v4150, %v4154
        %4157 = vmatprep.subr.mxu0 0.0
        %4158 = vmatpush1.msra.mxu0 %v4149
        %4159 = vmatprep.subr.mxu0 0.0
        %4160 = vmatpush1.msra.mxu0 %v4148
        %4161 = vmatprep.subr.mxu0 0.0
        %4162 = vmatpush1.msra.mxu0 %v4147
        %4163 = vmatprep.subr.mxu0 0.0
        %4164 = vmatpush1.msra.mxu0 %v4146
        %4165 = vmatprep.subr.mxu0 0.0
        %4166 = vmatpush1.msra.mxu0 %v4145
        %4167 = vmatprep.subr.mxu0 0.0
        %4168 = vmatpush1.msra.mxu0 %v4144
        %4169 = vmatprep.subr.mxu0 0.0
        %4170 = vmatpush1.msra.mxu0 %v4143
        %4171 = vmatprep.subr.mxu0 0.0
        %4172 = vmatpush1.msra.mxu0 %v4142
        %4173 = vmatprep.subr.mxu0 0.0
        %4174 = vmatpush1.msra.mxu0 %v4141
        %4175 = vmatprep.subr.mxu0 0.0
        %4176 = vmatpush1.msra.mxu0 %v4140
        %4177 = vmatprep.subr.mxu0 0.0
        %4178 = vmatpush1.msra.mxu0 %v4139
        %4179 = vmatprep.subr.mxu0 0.0
        %4180 = vmatpush1.msra.mxu0 %v4138
        %4181 = vmatprep.subr.mxu0 0.0
        %4182 = vmatpush1.msra.mxu0 %v4137
        %4183 = vmatprep.subr.mxu0 0.0
        %4184 = vmatpush1.msra.mxu0 %v4136
        %4185 = vmatprep.subr.mxu0 0.0
        %4186 = vmatpush1.msra.mxu0 %v4135
        %4187 = vmatprep.subr.mxu0 0.0
        %4188 = vmatpush1.msra.mxu0 %v4134
        %4189 = vmatprep.subr.mxu0 0.0
        %4190 = vmatpush2.msra.mxu0 0.0
        %4191 = vmatprep.subr.mxu0 0.0
        %4192 = vmatpush2.msra.mxu0 0.0
        %4193 = vmatprep.subr.mxu0 0.0
        %4194 = vmatpush2.msra.mxu0 0.0
        %4195 = vmatprep.subr.mxu0 0.0
        %4196 = vmatpush2.msra.mxu0 0.0
        %4197 = vmatprep.subr.mxu0 0.0
        %4198 = vmatpush2.msra.mxu0 0.0
        %4199 = vmatprep.subr.mxu0 0.0
        %4200 = vmatpush2.msra.mxu0 0.0
        %4201 = vmatprep.subr.mxu0 0.0
        %4202 = vmatpush2.msra.mxu0 0.0
        %4203 = vmatprep.subr.mxu0 0.0
        %4204 = vmatpush2.msra.mxu0 0.0
        %4205 = vmatprep.subr.mxu0 0.0
        %4206 = vmatpush2.msra.mxu0 0.0
        %4207 = vmatprep.subr.mxu0 0.0
        %4208 = vmatpush2.msra.mxu0 0.0
        %4209 = vmatprep.subr.mxu0 0.0
        %4210 = vmatpush2.msra.mxu0 0.0
        %4211 = vmatprep.subr.mxu0 0.0
        %4212 = vmatpush2.msra.mxu0 0.0
        %4213 = vmatprep.subr.mxu0 0.0
        %4214 = vmatpush2.msra.mxu0 0.0
        %4215 = vmatprep.subr.mxu0 0.0
        %4216 = vmatpush2.msra.mxu0 0.0
        %4217 = vmatprep.subr.mxu0 0.0
        %4218 = vmatpush2.msra.mxu0 0.0
        %4219 = vmatprep.subr.mxu0 0.0
        %4220 = vmatpush2.msra.mxu0 0.0
        %4221 = vmatprep.mubr.f32.mxu0 0.0
        %4222 = vmatmul.mubr.f32.gmra.mxu0 %v4133
        %v4223 = vpop.f32.mrf.mxu0
        %v4224 = vadd.f32 %v4155, %v4223
        %v4225 = vpop.f32.mrf.mxu0
        %4226 = vdwg.mxu0
        %4227 = vst [vmem:[%s422] sm:$0xff] %v4224
        %p4228 = scmp.lt.s32.totalorder %s18, 1
        %s4229 = scalar_select %p4228, %s18, 1
        %s4230 = smul.addr %s4229, 8
        %s4231 = scalar_lea.vmem %s7, %s4230
        // Predicated region
        $region125: #{lstm_predictor_forward.1} parent=115 // pred_check
          %p4232 = pneg %p193
        $region126: #{lstm_predictor_forward.1} parent=115 // pred_check_branch
          %4234 = sbr.rel (%p4232) target = $region128
        $region127: #{lstm_predictor_forward.1} parent=115 // pred_region
          _
        $region128: #{lstm_predictor_forward.1} parent=115 // pred_fallthru
          _
      $region116: #{lstm_predictor_forward.1} parent=5 // pred_fallthru
        _
      %p4235 = scmp.le.s32.totalorder 2, %s13
      // Predicated region
      $region129: #{lstm_predictor_forward.1} parent=5 // pred_check
        %p4236 = pneg %p4235
      $region130: #{lstm_predictor_forward.1} parent=5 // pred_check_branch
        %4238 = sbr.rel (%p4236) target = $region132
      $region131: #{lstm_predictor_forward.1} parent=5 // pred_region
        %s4239 = ssub.s32 %s13, 2
        // Predicated region
        $region133: #{lstm_predictor_forward.1} parent=131 // pred_check
          %p4240 = pneg %p199
        $region134: #{lstm_predictor_forward.1} parent=131 // pred_check_branch
          %4242 = sbr.rel (%p4240) target = $region136
        $region135: #{lstm_predictor_forward.1} parent=131 // pred_region
          %p4243 = scmp.lt.s32.totalorder %s19, 1
          %s4244 = scalar_select %p4243, %s19, 1
          %s4245 = smul.addr %s4244, 8
          %s4246 = scalar_lea.vmem %s7, %s4245
        $region136: #{lstm_predictor_forward.1} parent=131 // pred_fallthru
          _
      $region132: #{lstm_predictor_forward.1} parent=5 // pred_fallthru
        _
    $region6: #{lstm_predictor_forward.1} parent=1 // loop_footer
      %s17 = sadd.s32 1, %s13
    $region7: #{lstm_predictor_forward.1} parent=1 // loop_footer_branch
      %12 = sbr.rel target = $region3
    $region8: #{lstm_predictor_forward.1} parent=1 // loop_exit
      _

</llo_original>
